<compile_context>
chip_gen: v5e
topology: v5e:2x2
jax: 0.10.0
libtpu: 0.0.40
codegen_flags: <defaults>
</compile_context>

<pallas_src>
import functools
import math

import jax
import jax.numpy as jnp
from jax import lax
from jax.experimental import pallas as pl
from jax.experimental.pallas import tpu as pltpu


# ----------------------------------------------------------------------------
# Positional encoding table (same math as the PyTorch PositionalEncoding).
# The PyTorch module indexes pe by x.size(0) == batch dim, so the encoding row
# added to every sequence position of batch b is pe[b] (faithfully reproduced).
# ----------------------------------------------------------------------------
def make_positional_encoding(d_model, max_len=10000):
    position = jnp.arange(max_len, dtype=jnp.float32)[:, None]          # (L, 1)
    div_term = jnp.exp(
        jnp.arange(0, d_model, 2, dtype=jnp.float32)
        * (-math.log(10000.0) / d_model)
    )                                                                    # (d/2,)
    pe = jnp.zeros((max_len, d_model), dtype=jnp.float32)
    pe = pe.at[:, 0::2].set(jnp.sin(position * div_term))
    pe = pe.at[:, 1::2].set(jnp.cos(position * div_term))
    return pe                                                            # (L, d_model)


# ----------------------------------------------------------------------------
# Pallas kernel: `batch_block` batch elements per grid step, channel-minor layout.
# ----------------------------------------------------------------------------
def cross_attn_kernel(xqk_ref, xv_ref, qkb_ref, wqk_ref, wv_ref, wo_ref, bo_ref,
                      out_ref, o_scr, *, heads, dim_head, batch_block, q_chunk):
    hd = heads * dim_head
    S = xqk_ref.shape[-1]
    # Hoisted constant: ones row used to compute the softmax denominator on the MXU.
    ones_row = jnp.ones((1, S), dtype=jnp.float32)

    # TODO(synk): training-mode attention dropout (p=0.1) not implemented (eval only).
    # TODO(synk): bf16 MXU operands (f32 accumulate) become the dominant win at larger
    #             S; kept f32 here to stay within the exact-reference 2e-3 tolerance.
    # TODO(synk): before scaling S, switch to a KV-tiled online softmax sized for
    #             v7x's 64 MiB VMEM (roughly half the KV-tile budget that fits v6e)
    #             and set pltpu.CompilerParams(vmem_limit_bytes=...) explicitly.

    for b in range(batch_block):
        # Fused block-diagonal Q|K projection (1/sqrt(D) pre-folded into the Q rows)
        # and V projection.  S stays on the lane axis of both results.
        qk_b = jnp.dot(wqk_ref[...], xqk_ref[b],
                       preferred_element_type=jnp.float32)              # (2*HD, S)
        # Positional encoding folded into a per-batch post-projection bias column.
        qk_b = qk_b + qkb_ref[b]                                         # + (2*HD, 1)
        v_b = jnp.dot(wv_ref[...], xv_ref[b],
                      preferred_element_type=jnp.float32)                # (HD, S)

        for h in range(heads):
            lo = h * dim_head
            hi = lo + dim_head
            q_h = qk_b[lo:hi, :]              # (D, S); scale already folded in
            k_h = qk_b[hd + lo:hd + hi, :]    # (D, S)
            v_h = v_b[lo:hi, :]               # (D, S)

            # Query-chunked softmax: each chunk's s/p block is (q_chunk, S) so it
            # stays close to the vreg file between the QK^T pop and the PV push.
            for c in range(S // q_chunk):
                cs = c * q_chunk
                q_c = q_h[:, cs:cs + q_chunk]                            # (D, qc)
                # scores[i, j] = sum_d q_c[d, i] * k_h[d, j]  (no explicit transpose)
                s_c = lax.dot_general(q_c, k_h, (((0,), (0,)), ((), ())),
                                      preferred_element_type=jnp.float32)  # (qc, S)
                m_c = jnp.max(s_c, axis=-1, keepdims=True)               # XLU row max
                p_c = jnp.exp(s_c - m_c)                                 # EUP
                # Unnormalized PV matmul and MXU row-sum denominator (one ones-row
                # dot), then normalize the small (D, qc) output instead of p itself.
                o_c = lax.dot_general(v_h, p_c, (((1,), (1,)), ((), ())),
                                      preferred_element_type=jnp.float32)  # (D, qc)
                den = lax.dot_general(ones_row, p_c, (((1,), (1,)), ((), ())),
                                      preferred_element_type=jnp.float32)  # (1, qc)
                o_scr[lo:hi, b * S + cs:b * S + cs + q_chunk] = (
                    o_c * pl.reciprocal(den, approx=False))

    # Single fused output projection over all heads and all merged batch columns,
    # then per-batch lane-dense (C_f, S) stores.
    out_t = jnp.dot(wo_ref[...], o_scr[...],
                    preferred_element_type=jnp.float32)                  # (C_f, B_blk*S)
    out_t = out_t + bo_ref[...]
    for b in range(batch_block):
        out_ref[b] = out_t[:, b * S:(b + 1) * S].astype(out_ref.dtype)


# ----------------------------------------------------------------------------
# Wrapper: pure-reshape NCHW <-> (B, C, S) glue + pallas_call (jitted).
# ----------------------------------------------------------------------------
def _pick_batch_block(batch):
    # v7x has 2 TensorCores per chip: keep one batch element per "parallel" grid
    # step so both cores get work.  Single-TC v5e/v6e: merge the whole batch into
    # one kernel step (removes per-step pipeline overhead on a ~us kernel and
    # doubles N of the tiny projection / output matmuls).
    try:
        kind = jax.devices()[0].device_kind.lower()
    except Exception:
        kind = ""
    if ("v7" in kind or "7x" in kind) and batch > 1:
        return 1
    return batch


@functools.partial(jax.jit, static_argnames=("heads", "dim_head"))
def cross_attention_forward(ml_c, ml_r, fl_r, params, *, heads, dim_head):
    B, C_m, H, W = ml_c.shape
    _, C_f, _, _ = fl_r.shape
    S = H * W
    HD = heads * dim_head
    scale = dim_head ** (-0.5)

    batch_block = _pick_batch_block(B)
    q_chunk = 128 if S % 128 == 0 else S

    # Channel-minor views: free reshapes from NCHW (no wrapper transposes).
    x_q = ml_c.reshape(B, C_m, S)
    x_k = ml_r.reshape(B, C_m, S)
    x_qk = jnp.concatenate([x_q, x_k], axis=1)                 # (B, 2*C_m, S)
    x_v = fl_r.reshape(B, C_f, S)                              # (B, C_f, S)

    # Fused block-diagonal Q|K weight with 1/sqrt(D) folded into the Q block.
    # PyTorch Linear stores W as (out, in); channel-minor compute uses W @ x.
    wq_s = params["wq"] * scale
    zq = jnp.zeros_like(wq_s)
    w_qk = jnp.block([[wq_s, zq], [zq, params["wk"]]])         # (2*HD, 2*C_m)

    # Positional encoding folded into a per-batch post-projection bias column
    # (the reference indexes pe by the batch index and adds it to every position).
    pe_b = params["pe"][:B]                                    # (B, C_m)
    qk_bias = jnp.concatenate(
        [pe_b @ wq_s.T, pe_b @ params["wk"].T], axis=-1)[:, :, None]   # (B, 2*HD, 1)

    bo_col = params["bo"].reshape(C_f, 1)

    kernel = functools.partial(cross_attn_kernel, heads=heads, dim_head=dim_head,
                               batch_block=batch_block, q_chunk=q_chunk)

    # Scheduling hint for XLA: tiny, latency-bound custom call.
    flops = 2 * B * ((2 * HD) * (2 * C_m) * S + HD * C_f * S
                     + heads * (2 * dim_head * S * S + S * S)
                     + C_f * HD * S)
    transcendentals = B * heads * S * S
    bytes_accessed = 4 * (B * (2 * C_m * S + 2 * C_f * S + 2 * HD)
                          + 2 * HD * 2 * C_m + HD * C_f + C_f * HD + C_f)
    cost = pl.CostEstimate(flops=flops, transcendentals=transcendentals,
                           bytes_accessed=bytes_accessed)

    out_cs = pl.pallas_call(
        kernel,
        out_shape=jax.ShapeDtypeStruct((B, C_f, S), jnp.float32),
        grid=(B // batch_block,),
        in_specs=[
            pl.BlockSpec((batch_block, 2 * C_m, S), lambda i: (i, 0, 0)),   # [ml_c ; ml_r]
            pl.BlockSpec((batch_block, C_f, S), lambda i: (i, 0, 0)),       # fl_r
            pl.BlockSpec((batch_block, 2 * HD, 1), lambda i: (i, 0, 0)),    # pe-bias col
            pl.BlockSpec((2 * HD, 2 * C_m), lambda i: (0, 0)),              # W_q|k blockdiag
            pl.BlockSpec((HD, C_f), lambda i: (0, 0)),                      # W_v
            pl.BlockSpec((C_f, HD), lambda i: (0, 0)),                      # W_o
            pl.BlockSpec((C_f, 1), lambda i: (0, 0)),                       # b_o
        ],
        out_specs=pl.BlockSpec((batch_block, C_f, S), lambda i: (i, 0, 0)),
        scratch_shapes=[pltpu.VMEM((HD, batch_block * S), jnp.float32)],
        compiler_params=pltpu.CompilerParams(dimension_semantics=("parallel",)),
        cost_estimate=cost,
    )(x_qk, x_v, qk_bias, w_qk, params["wv"], params["wo"], bo_col)

    # (B, C_f, S) -> (B, C_f, H, W): pure reshape, no transpose needed.
    return out_cs.reshape(B, C_f, H, W)


# ----------------------------------------------------------------------------
# Pure-JAX reference (same math, natural layout) for the correctness check.
# ----------------------------------------------------------------------------
def reference_forward(ml_c, ml_r, fl_r, params, *, heads, dim_head):
    B, C_m, H, W = ml_c.shape
    _, C_f, _, _ = fl_r.shape
    S = H * W
    hp = lax.Precision.HIGHEST
    mlc = ml_c.reshape(B, C_m, S).transpose(0, 2, 1)
    mlr = ml_r.reshape(B, C_m, S).transpose(0, 2, 1)
    flr = fl_r.reshape(B, C_f, S).transpose(0, 2, 1)
    pe = params["pe"][:B][:, None, :]                          # (B, 1, C_m)
    mlc = mlc + pe
    mlr = mlr + pe
    q = jnp.einsum("bsc,oc->bso", mlc, params["wq"], precision=hp)
    k = jnp.einsum("bsc,oc->bso", mlr, params["wk"], precision=hp)
    v = jnp.einsum("bsc,oc->bso", flr, params["wv"], precision=hp)
    q = q.reshape(B, S, heads, dim_head).transpose(0, 2, 1, 3)
    k = k.reshape(B, S, heads, dim_head).transpose(0, 2, 1, 3)
    v = v.reshape(B, S, heads, dim_head).transpose(0, 2, 1, 3)
    s = jnp.einsum("bhqd,bhkd->bhqk", q, k, precision=hp) * (dim_head ** -0.5)
    p = jax.nn.softmax(s, axis=-1)
    o = jnp.einsum("bhqk,bhkd->bhqd", p, v, precision=hp)
    o = o.transpose(0, 2, 1, 3).reshape(B, S, heads * dim_head)
    out = jnp.einsum("bsh,oh->bso", o, params["wo"], precision=hp) + params["bo"]
    return out.transpose(0, 2, 1).reshape(B, C_f, H, W)


# ----------------------------------------------------------------------------
# Main
# ----------------------------------------------------------------------------
if __name__ == "__main__":
    B, H, W = 2, 16, 16
    motion_dim = 4       # C_m
    feature_dim = 8      # C_f
    heads, dim_head = 2, 16
    HD = heads * dim_head

    key = jax.random.PRNGKey(0)
    k_mlc, k_mlr, k_flr, k_wq, k_wk, k_wv, k_wo, k_bo = jax.random.split(key, 8)

    ml_c = jax.random.normal(k_mlc, (B, motion_dim, H, W), dtype=jnp.float32)
    ml_r = jax.random.normal(k_mlr, (B, motion_dim, H, W), dtype=jnp.float32)
    fl_r = jax.random.normal(k_flr, (B, feature_dim, H, W), dtype=jnp.float32)

    # Parameters in PyTorch Linear layout: W is (out_features, in_features).
    params = {
        "wq": 0.1 * jax.random.normal(k_wq, (HD, motion_dim), dtype=jnp.float32),
        "wk": 0.1 * jax.random.normal(k_wk, (HD, motion_dim), dtype=jnp.float32),
        "wv": 0.1 * jax.random.normal(k_wv, (HD, feature_dim), dtype=jnp.float32),
        "wo": 0.1 * jax.random.normal(k_wo, (feature_dim, HD), dtype=jnp.float32),
        "bo": 0.1 * jax.random.normal(k_bo, (feature_dim,), dtype=jnp.float32),
        "pe": make_positional_encoding(motion_dim, max_len=10000),
    }

    out = cross_attention_forward(ml_c, ml_r, fl_r, params,
                                  heads=heads, dim_head=dim_head)
    out = jax.block_until_ready(out)

    ref = reference_forward(ml_c, ml_r, fl_r, params,
                            heads=heads, dim_head=dim_head)
    assert out.shape == (B, feature_dim, H, W)
    assert jnp.allclose(out, ref, atol=2e-3, rtol=2e-3), "Pallas output mismatch"

    print("KERNEL_OK")
</pallas_src>

<mosaic_0001>
module attributes {stable_mosaic.version = 11 : i64} {
  func.func @cross_attn_kernel(%arg0: i32, %arg1: memref<2x8x256xf32, #tpu.memory_space<vmem>>, %arg2: memref<2x8x256xf32, #tpu.memory_space<vmem>>, %arg3: memref<2x64x1xf32, #tpu.memory_space<vmem>>, %arg4: memref<64x8xf32, #tpu.memory_space<vmem>>, %arg5: memref<32x8xf32, #tpu.memory_space<vmem>>, %arg6: memref<8x32xf32, #tpu.memory_space<vmem>>, %arg7: memref<8x1xf32, #tpu.memory_space<vmem>>, %arg8: memref<2x8x256xf32, #tpu.memory_space<vmem>>, %arg9: memref<32x512xf32, #tpu.memory_space<vmem>>) attributes {dimension_semantics = [#tpu.dimension_semantics<parallel>], iteration_bounds = array<i64: 1>, scalar_prefetch = 0 : i64, scratch_operands = 1 : i64, tpu.core_type = #tpu.core_type<tc>, window_params = [{transform_indices = @transform_0, window_bounds = array<i64: 2, 8, 256>}, {transform_indices = @transform_1, window_bounds = array<i64: 2, 8, 256>}, {transform_indices = @transform_2, window_bounds = array<i64: 2, 64, 1>}, {pipeline_mode = #tpu.pipeline_mode<synchronous>, transform_indices = @transform_3, window_bounds = array<i64: 64, 8>}, {pipeline_mode = #tpu.pipeline_mode<synchronous>, transform_indices = @transform_4, window_bounds = array<i64: 32, 8>}, {pipeline_mode = #tpu.pipeline_mode<synchronous>, transform_indices = @transform_5, window_bounds = array<i64: 8, 32>}, {pipeline_mode = #tpu.pipeline_mode<synchronous>, transform_indices = @transform_6, window_bounds = array<i64: 8, 1>}, {transform_indices = @transform_7, window_bounds = array<i64: 2, 8, 256>}]} {
    %cst = arith.constant 1.000000e+00 : f32
    %0 = vector.broadcast %cst : f32 to vector<1x256xf32>
    %c0 = arith.constant 0 : index
    %c0_0 = arith.constant 0 : index
    %1 = vector.load %arg4[%c0, %c0_0] : memref<64x8xf32, #tpu.memory_space<vmem>>, vector<64x8xf32>
    %c0_1 = arith.constant 0 : index
    %c0_2 = arith.constant 0 : index
    %c0_3 = arith.constant 0 : index
    %2 = vector.load %arg1[%c0_1, %c0_2, %c0_3] : memref<2x8x256xf32, #tpu.memory_space<vmem>>, vector<1x8x256xf32>
    %3 = vector.shape_cast %2 : vector<1x8x256xf32> to vector<8x256xf32>
    %cst_4 = arith.constant dense<0.000000e+00> : vector<64x256xf32>
    %4 = tpu.matmul %1, %3, %cst_4 {dimension_numbers = #tpu.dot_dimension_numbers<[1], [0], [0], [1], [0, 0, 1, 1], [], []>} : vector<64x8xf32>, vector<8x256xf32>, vector<64x256xf32> -> vector<64x256xf32>
    %c0_5 = arith.constant 0 : index
    %c0_6 = arith.constant 0 : index
    %c0_7 = arith.constant 0 : index
    %5 = vector.load %arg3[%c0_5, %c0_6, %c0_7] : memref<2x64x1xf32, #tpu.memory_space<vmem>>, vector<1x64x1xf32>
    %6 = vector.shape_cast %5 : vector<1x64x1xf32> to vector<64x1xf32>
    %7 = vector.broadcast %6 : vector<64x1xf32> to vector<64x256xf32>
    %8 = arith.addf %4, %7 : vector<64x256xf32>
    %c0_8 = arith.constant 0 : index
    %c0_9 = arith.constant 0 : index
    %9 = vector.load %arg5[%c0_8, %c0_9] : memref<32x8xf32, #tpu.memory_space<vmem>>, vector<32x8xf32>
    %c0_10 = arith.constant 0 : index
    %c0_11 = arith.constant 0 : index
    %c0_12 = arith.constant 0 : index
    %10 = vector.load %arg2[%c0_10, %c0_11, %c0_12] : memref<2x8x256xf32, #tpu.memory_space<vmem>>, vector<1x8x256xf32>
    %11 = vector.shape_cast %10 : vector<1x8x256xf32> to vector<8x256xf32>
    %cst_13 = arith.constant dense<0.000000e+00> : vector<32x256xf32>
    %12 = tpu.matmul %9, %11, %cst_13 {dimension_numbers = #tpu.dot_dimension_numbers<[1], [0], [0], [1], [0, 0, 1, 1], [], []>} : vector<32x8xf32>, vector<8x256xf32>, vector<32x256xf32> -> vector<32x256xf32>
    %13 = vector.extract_strided_slice %8 {offsets = [0, 0], sizes = [16, 256], strides = [1, 1]} : vector<64x256xf32> to vector<16x256xf32>
    %14 = vector.extract_strided_slice %8 {offsets = [32, 0], sizes = [16, 256], strides = [1, 1]} : vector<64x256xf32> to vector<16x256xf32>
    %15 = vector.extract_strided_slice %12 {offsets = [0, 0], sizes = [16, 256], strides = [1, 1]} : vector<32x256xf32> to vector<16x256xf32>
    %16 = vector.extract_strided_slice %13 {offsets = [0, 0], sizes = [16, 128], strides = [1, 1]} : vector<16x256xf32> to vector<16x128xf32>
    %cst_14 = arith.constant dense<0.000000e+00> : vector<128x256xf32>
    %17 = tpu.matmul %16, %14, %cst_14 {dimension_numbers = #tpu.dot_dimension_numbers<[0], [0], [1], [1], [0, 1, 1, 1], [], []>} : vector<16x128xf32>, vector<16x256xf32>, vector<128x256xf32> -> vector<128x256xf32>
    %cst_15 = arith.constant dense<0xFF800000> : vector<128xf32>
    %18 = vector.multi_reduction <maximumf>, %17, %cst_15 [1] : vector<128x256xf32> to vector<128xf32>
    %19 = vector.shape_cast %18 : vector<128xf32> to vector<128x1xf32>
    %20 = vector.broadcast %19 : vector<128x1xf32> to vector<128x256xf32>
    %21 = arith.subf %17, %20 : vector<128x256xf32>
    %22 = math.exp %21 : vector<128x256xf32>
    %cst_16 = arith.constant dense<0.000000e+00> : vector<16x128xf32>
    %23 = tpu.matmul %15, %22, %cst_16 {dimension_numbers = #tpu.dot_dimension_numbers<[1], [1], [0], [0], [0, 0, 1, 0], [], []>} : vector<16x256xf32>, vector<128x256xf32>, vector<16x128xf32> -> vector<16x128xf32>
    %cst_17 = arith.constant dense<0.000000e+00> : vector<1x128xf32>
    %24 = tpu.matmul %0, %22, %cst_17 {dimension_numbers = #tpu.dot_dimension_numbers<[1], [1], [0], [0], [0, 0, 1, 0], [], []>} : vector<1x256xf32>, vector<128x256xf32>, vector<1x128xf32> -> vector<1x128xf32>
    %25 = tpu.reciprocal %24 : vector<1x128xf32> -> vector<1x128xf32>
    %26 = vector.broadcast %25 : vector<1x128xf32> to vector<16x128xf32>
    %27 = arith.mulf %23, %26 : vector<16x128xf32>
    %c0_18 = arith.constant 0 : index
    %c0_19 = arith.constant 0 : index
    %28 = vector.load %arg9[%c0_18, %c0_19] : memref<32x512xf32, #tpu.memory_space<vmem>>, vector<16x128xf32>
    tpu.vector_store %arg9[%c0_18, %c0_19], %27 {strides = array<i32>} : memref<32x512xf32, #tpu.memory_space<vmem>>, vector<16x128xf32>,
    %29 = vector.extract_strided_slice %13 {offsets = [0, 128], sizes = [16, 128], strides = [1, 1]} : vector<16x256xf32> to vector<16x128xf32>
    %cst_20 = arith.constant dense<0.000000e+00> : vector<128x256xf32>
    %30 = tpu.matmul %29, %14, %cst_20 {dimension_numbers = #tpu.dot_dimension_numbers<[0], [0], [1], [1], [0, 1, 1, 1], [], []>} : vector<16x128xf32>, vector<16x256xf32>, vector<128x256xf32> -> vector<128x256xf32>
    %cst_21 = arith.constant dense<0xFF800000> : vector<128xf32>
    %31 = vector.multi_reduction <maximumf>, %30, %cst_21 [1] : vector<128x256xf32> to vector<128xf32>
    %32 = vector.shape_cast %31 : vector<128xf32> to vector<128x1xf32>
    %33 = vector.broadcast %32 : vector<128x1xf32> to vector<128x256xf32>
    %34 = arith.subf %30, %33 : vector<128x256xf32>
    %35 = math.exp %34 : vector<128x256xf32>
    %cst_22 = arith.constant dense<0.000000e+00> : vector<16x128xf32>
    %36 = tpu.matmul %15, %35, %cst_22 {dimension_numbers = #tpu.dot_dimension_numbers<[1], [1], [0], [0], [0, 0, 1, 0], [], []>} : vector<16x256xf32>, vector<128x256xf32>, vector<16x128xf32> -> vector<16x128xf32>
    %cst_23 = arith.constant dense<0.000000e+00> : vector<1x128xf32>
    %37 = tpu.matmul %0, %35, %cst_23 {dimension_numbers = #tpu.dot_dimension_numbers<[1], [1], [0], [0], [0, 0, 1, 0], [], []>} : vector<1x256xf32>, vector<128x256xf32>, vector<1x128xf32> -> vector<1x128xf32>
    %38 = tpu.reciprocal %37 : vector<1x128xf32> -> vector<1x128xf32>
    %39 = vector.broadcast %38 : vector<1x128xf32> to vector<16x128xf32>
    %40 = arith.mulf %36, %39 : vector<16x128xf32>
    %c0_24 = arith.constant 0 : index
    %c128 = arith.constant 128 : index
    %41 = vector.load %arg9[%c0_24, %c128] : memref<32x512xf32, #tpu.memory_space<vmem>>, vector<16x128xf32>
    tpu.vector_store %arg9[%c0_24, %c128], %40 {strides = array<i32>} : memref<32x512xf32, #tpu.memory_space<vmem>>, vector<16x128xf32>,
    %42 = vector.extract_strided_slice %8 {offsets = [16, 0], sizes = [16, 256], strides = [1, 1]} : vector<64x256xf32> to vector<16x256xf32>
    %43 = vector.extract_strided_slice %8 {offsets = [48, 0], sizes = [16, 256], strides = [1, 1]} : vector<64x256xf32> to vector<16x256xf32>
    %44 = vector.extract_strided_slice %12 {offsets = [16, 0], sizes = [16, 256], strides = [1, 1]} : vector<32x256xf32> to vector<16x256xf32>
    %45 = vector.extract_strided_slice %42 {offsets = [0, 0], sizes = [16, 128], strides = [1, 1]} : vector<16x256xf32> to vector<16x128xf32>
    %cst_25 = arith.constant dense<0.000000e+00> : vector<128x256xf32>
    %46 = tpu.matmul %45, %43, %cst_25 {dimension_numbers = #tpu.dot_dimension_numbers<[0], [0], [1], [1], [0, 1, 1, 1], [], []>} : vector<16x128xf32>, vector<16x256xf32>, vector<128x256xf32> -> vector<128x256xf32>
    %cst_26 = arith.constant dense<0xFF800000> : vector<128xf32>
    %47 = vector.multi_reduction <maximumf>, %46, %cst_26 [1] : vector<128x256xf32> to vector<128xf32>
    %48 = vector.shape_cast %47 : vector<128xf32> to vector<128x1xf32>
    %49 = vector.broadcast %48 : vector<128x1xf32> to vector<128x256xf32>
    %50 = arith.subf %46, %49 : vector<128x256xf32>
    %51 = math.exp %50 : vector<128x256xf32>
    %cst_27 = arith.constant dense<0.000000e+00> : vector<16x128xf32>
    %52 = tpu.matmul %44, %51, %cst_27 {dimension_numbers = #tpu.dot_dimension_numbers<[1], [1], [0], [0], [0, 0, 1, 0], [], []>} : vector<16x256xf32>, vector<128x256xf32>, vector<16x128xf32> -> vector<16x128xf32>
    %cst_28 = arith.constant dense<0.000000e+00> : vector<1x128xf32>
    %53 = tpu.matmul %0, %51, %cst_28 {dimension_numbers = #tpu.dot_dimension_numbers<[1], [1], [0], [0], [0, 0, 1, 0], [], []>} : vector<1x256xf32>, vector<128x256xf32>, vector<1x128xf32> -> vector<1x128xf32>
    %54 = tpu.reciprocal %53 : vector<1x128xf32> -> vector<1x128xf32>
    %55 = vector.broadcast %54 : vector<1x128xf32> to vector<16x128xf32>
    %56 = arith.mulf %52, %55 : vector<16x128xf32>
    %c16 = arith.constant 16 : index
    %c0_29 = arith.constant 0 : index
    %57 = vector.load %arg9[%c16, %c0_29] : memref<32x512xf32, #tpu.memory_space<vmem>>, vector<16x128xf32>
    tpu.vector_store %arg9[%c16, %c0_29], %56 {strides = array<i32>} : memref<32x512xf32, #tpu.memory_space<vmem>>, vector<16x128xf32>,
    %58 = vector.extract_strided_slice %42 {offsets = [0, 128], sizes = [16, 128], strides = [1, 1]} : vector<16x256xf32> to vector<16x128xf32>
    %cst_30 = arith.constant dense<0.000000e+00> : vector<128x256xf32>
    %59 = tpu.matmul %58, %43, %cst_30 {dimension_numbers = #tpu.dot_dimension_numbers<[0], [0], [1], [1], [0, 1, 1, 1], [], []>} : vector<16x128xf32>, vector<16x256xf32>, vector<128x256xf32> -> vector<128x256xf32>
    %cst_31 = arith.constant dense<0xFF800000> : vector<128xf32>
    %60 = vector.multi_reduction <maximumf>, %59, %cst_31 [1] : vector<128x256xf32> to vector<128xf32>
    %61 = vector.shape_cast %60 : vector<128xf32> to vector<128x1xf32>
    %62 = vector.broadcast %61 : vector<128x1xf32> to vector<128x256xf32>
    %63 = arith.subf %59, %62 : vector<128x256xf32>
    %64 = math.exp %63 : vector<128x256xf32>
    %cst_32 = arith.constant dense<0.000000e+00> : vector<16x128xf32>
    %65 = tpu.matmul %44, %64, %cst_32 {dimension_numbers = #tpu.dot_dimension_numbers<[1], [1], [0], [0], [0, 0, 1, 0], [], []>} : vector<16x256xf32>, vector<128x256xf32>, vector<16x128xf32> -> vector<16x128xf32>
    %cst_33 = arith.constant dense<0.000000e+00> : vector<1x128xf32>
    %66 = tpu.matmul %0, %64, %cst_33 {dimension_numbers = #tpu.dot_dimension_numbers<[1], [1], [0], [0], [0, 0, 1, 0], [], []>} : vector<1x256xf32>, vector<128x256xf32>, vector<1x128xf32> -> vector<1x128xf32>
    %67 = tpu.reciprocal %66 : vector<1x128xf32> -> vector<1x128xf32>
    %68 = vector.broadcast %67 : vector<1x128xf32> to vector<16x128xf32>
    %69 = arith.mulf %65, %68 : vector<16x128xf32>
    %c16_34 = arith.constant 16 : index
    %c128_35 = arith.constant 128 : index
    %70 = vector.load %arg9[%c16_34, %c128_35] : memref<32x512xf32, #tpu.memory_space<vmem>>, vector<16x128xf32>
    tpu.vector_store %arg9[%c16_34, %c128_35], %69 {strides = array<i32>} : memref<32x512xf32, #tpu.memory_space<vmem>>, vector<16x128xf32>,
    %c0_36 = arith.constant 0 : index
    %c0_37 = arith.constant 0 : index
    %71 = vector.load %arg4[%c0_36, %c0_37] : memref<64x8xf32, #tpu.memory_space<vmem>>, vector<64x8xf32>
    %c1 = arith.constant 1 : index
    %c0_38 = arith.constant 0 : index
    %c0_39 = arith.constant 0 : index
    %72 = vector.load %arg1[%c1, %c0_38, %c0_39] : memref<2x8x256xf32, #tpu.memory_space<vmem>>, vector<1x8x256xf32>
    %73 = vector.shape_cast %72 : vector<1x8x256xf32> to vector<8x256xf32>
    %cst_40 = arith.constant dense<0.000000e+00> : vector<64x256xf32>
    %74 = tpu.matmul %71, %73, %cst_40 {dimension_numbers = #tpu.dot_dimension_numbers<[1], [0], [0], [1], [0, 0, 1, 1], [], []>} : vector<64x8xf32>, vector<8x256xf32>, vector<64x256xf32> -> vector<64x256xf32>
    %c1_41 = arith.constant 1 : index
    %c0_42 = arith.constant 0 : index
    %c0_43 = arith.constant 0 : index
    %75 = vector.load %arg3[%c1_41, %c0_42, %c0_43] : memref<2x64x1xf32, #tpu.memory_space<vmem>>, vector<1x64x1xf32>
    %76 = vector.shape_cast %75 : vector<1x64x1xf32> to vector<64x1xf32>
    %77 = vector.broadcast %76 : vector<64x1xf32> to vector<64x256xf32>
    %78 = arith.addf %74, %77 : vector<64x256xf32>
    %c0_44 = arith.constant 0 : index
    %c0_45 = arith.constant 0 : index
    %79 = vector.load %arg5[%c0_44, %c0_45] : memref<32x8xf32, #tpu.memory_space<vmem>>, vector<32x8xf32>
    %c1_46 = arith.constant 1 : index
    %c0_47 = arith.constant 0 : index
    %c0_48 = arith.constant 0 : index
    %80 = vector.load %arg2[%c1_46, %c0_47, %c0_48] : memref<2x8x256xf32, #tpu.memory_space<vmem>>, vector<1x8x256xf32>
    %81 = vector.shape_cast %80 : vector<1x8x256xf32> to vector<8x256xf32>
    %cst_49 = arith.constant dense<0.000000e+00> : vector<32x256xf32>
    %82 = tpu.matmul %79, %81, %cst_49 {dimension_numbers = #tpu.dot_dimension_numbers<[1], [0], [0], [1], [0, 0, 1, 1], [], []>} : vector<32x8xf32>, vector<8x256xf32>, vector<32x256xf32> -> vector<32x256xf32>
    %83 = vector.extract_strided_slice %78 {offsets = [0, 0], sizes = [16, 256], strides = [1, 1]} : vector<64x256xf32> to vector<16x256xf32>
    %84 = vector.extract_strided_slice %78 {offsets = [32, 0], sizes = [16, 256], strides = [1, 1]} : vector<64x256xf32> to vector<16x256xf32>
    %85 = vector.extract_strided_slice %82 {offsets = [0, 0], sizes = [16, 256], strides = [1, 1]} : vector<32x256xf32> to vector<16x256xf32>
    %86 = vector.extract_strided_slice %83 {offsets = [0, 0], sizes = [16, 128], strides = [1, 1]} : vector<16x256xf32> to vector<16x128xf32>
    %cst_50 = arith.constant dense<0.000000e+00> : vector<128x256xf32>
    %87 = tpu.matmul %86, %84, %cst_50 {dimension_numbers = #tpu.dot_dimension_numbers<[0], [0], [1], [1], [0, 1, 1, 1], [], []>} : vector<16x128xf32>, vector<16x256xf32>, vector<128x256xf32> -> vector<128x256xf32>
    %cst_51 = arith.constant dense<0xFF800000> : vector<128xf32>
    %88 = vector.multi_reduction <maximumf>, %87, %cst_51 [1] : vector<128x256xf32> to vector<128xf32>
    %89 = vector.shape_cast %88 : vector<128xf32> to vector<128x1xf32>
    %90 = vector.broadcast %89 : vector<128x1xf32> to vector<128x256xf32>
    %91 = arith.subf %87, %90 : vector<128x256xf32>
    %92 = math.exp %91 : vector<128x256xf32>
    %cst_52 = arith.constant dense<0.000000e+00> : vector<16x128xf32>
    %93 = tpu.matmul %85, %92, %cst_52 {dimension_numbers = #tpu.dot_dimension_numbers<[1], [1], [0], [0], [0, 0, 1, 0], [], []>} : vector<16x256xf32>, vector<128x256xf32>, vector<16x128xf32> -> vector<16x128xf32>
    %cst_53 = arith.constant dense<0.000000e+00> : vector<1x128xf32>
    %94 = tpu.matmul %0, %92, %cst_53 {dimension_numbers = #tpu.dot_dimension_numbers<[1], [1], [0], [0], [0, 0, 1, 0], [], []>} : vector<1x256xf32>, vector<128x256xf32>, vector<1x128xf32> -> vector<1x128xf32>
    %95 = tpu.reciprocal %94 : vector<1x128xf32> -> vector<1x128xf32>
    %96 = vector.broadcast %95 : vector<1x128xf32> to vector<16x128xf32>
    %97 = arith.mulf %93, %96 : vector<16x128xf32>
    %c0_54 = arith.constant 0 : index
    %c256 = arith.constant 256 : index
    %98 = vector.load %arg9[%c0_54, %c256] : memref<32x512xf32, #tpu.memory_space<vmem>>, vector<16x128xf32>
    tpu.vector_store %arg9[%c0_54, %c256], %97 {strides = array<i32>} : memref<32x512xf32, #tpu.memory_space<vmem>>, vector<16x128xf32>,
    %99 = vector.extract_strided_slice %83 {offsets = [0, 128], sizes = [16, 128], strides = [1, 1]} : vector<16x256xf32> to vector<16x128xf32>
    %cst_55 = arith.constant dense<0.000000e+00> : vector<128x256xf32>
    %100 = tpu.matmul %99, %84, %cst_55 {dimension_numbers = #tpu.dot_dimension_numbers<[0], [0], [1], [1], [0, 1, 1, 1], [], []>} : vector<16x128xf32>, vector<16x256xf32>, vector<128x256xf32> -> vector<128x256xf32>
    %cst_56 = arith.constant dense<0xFF800000> : vector<128xf32>
    %101 = vector.multi_reduction <maximumf>, %100, %cst_56 [1] : vector<128x256xf32> to vector<128xf32>
    %102 = vector.shape_cast %101 : vector<128xf32> to vector<128x1xf32>
    %103 = vector.broadcast %102 : vector<128x1xf32> to vector<128x256xf32>
    %104 = arith.subf %100, %103 : vector<128x256xf32>
    %105 = math.exp %104 : vector<128x256xf32>
    %cst_57 = arith.constant dense<0.000000e+00> : vector<16x128xf32>
    %106 = tpu.matmul %85, %105, %cst_57 {dimension_numbers = #tpu.dot_dimension_numbers<[1], [1], [0], [0], [0, 0, 1, 0], [], []>} : vector<16x256xf32>, vector<128x256xf32>, vector<16x128xf32> -> vector<16x128xf32>
    %cst_58 = arith.constant dense<0.000000e+00> : vector<1x128xf32>
    %107 = tpu.matmul %0, %105, %cst_58 {dimension_numbers = #tpu.dot_dimension_numbers<[1], [1], [0], [0], [0, 0, 1, 0], [], []>} : vector<1x256xf32>, vector<128x256xf32>, vector<1x128xf32> -> vector<1x128xf32>
    %108 = tpu.reciprocal %107 : vector<1x128xf32> -> vector<1x128xf32>
    %109 = vector.broadcast %108 : vector<1x128xf32> to vector<16x128xf32>
    %110 = arith.mulf %106, %109 : vector<16x128xf32>
    %c0_59 = arith.constant 0 : index
    %c384 = arith.constant 384 : index
    %111 = vector.load %arg9[%c0_59, %c384] : memref<32x512xf32, #tpu.memory_space<vmem>>, vector<16x128xf32>
    tpu.vector_store %arg9[%c0_59, %c384], %110 {strides = array<i32>} : memref<32x512xf32, #tpu.memory_space<vmem>>, vector<16x128xf32>,
    %112 = vector.extract_strided_slice %78 {offsets = [16, 0], sizes = [16, 256], strides = [1, 1]} : vector<64x256xf32> to vector<16x256xf32>
    %113 = vector.extract_strided_slice %78 {offsets = [48, 0], sizes = [16, 256], strides = [1, 1]} : vector<64x256xf32> to vector<16x256xf32>
    %114 = vector.extract_strided_slice %82 {offsets = [16, 0], sizes = [16, 256], strides = [1, 1]} : vector<32x256xf32> to vector<16x256xf32>
    %115 = vector.extract_strided_slice %112 {offsets = [0, 0], sizes = [16, 128], strides = [1, 1]} : vector<16x256xf32> to vector<16x128xf32>
    %cst_60 = arith.constant dense<0.000000e+00> : vector<128x256xf32>
    %116 = tpu.matmul %115, %113, %cst_60 {dimension_numbers = #tpu.dot_dimension_numbers<[0], [0], [1], [1], [0, 1, 1, 1], [], []>} : vector<16x128xf32>, vector<16x256xf32>, vector<128x256xf32> -> vector<128x256xf32>
    %cst_61 = arith.constant dense<0xFF800000> : vector<128xf32>
    %117 = vector.multi_reduction <maximumf>, %116, %cst_61 [1] : vector<128x256xf32> to vector<128xf32>
    %118 = vector.shape_cast %117 : vector<128xf32> to vector<128x1xf32>
    %119 = vector.broadcast %118 : vector<128x1xf32> to vector<128x256xf32>
    %120 = arith.subf %116, %119 : vector<128x256xf32>
    %121 = math.exp %120 : vector<128x256xf32>
    %cst_62 = arith.constant dense<0.000000e+00> : vector<16x128xf32>
    %122 = tpu.matmul %114, %121, %cst_62 {dimension_numbers = #tpu.dot_dimension_numbers<[1], [1], [0], [0], [0, 0, 1, 0], [], []>} : vector<16x256xf32>, vector<128x256xf32>, vector<16x128xf32> -> vector<16x128xf32>
    %cst_63 = arith.constant dense<0.000000e+00> : vector<1x128xf32>
    %123 = tpu.matmul %0, %121, %cst_63 {dimension_numbers = #tpu.dot_dimension_numbers<[1], [1], [0], [0], [0, 0, 1, 0], [], []>} : vector<1x256xf32>, vector<128x256xf32>, vector<1x128xf32> -> vector<1x128xf32>
    %124 = tpu.reciprocal %123 : vector<1x128xf32> -> vector<1x128xf32>
    %125 = vector.broadcast %124 : vector<1x128xf32> to vector<16x128xf32>
    %126 = arith.mulf %122, %125 : vector<16x128xf32>
    %c16_64 = arith.constant 16 : index
    %c256_65 = arith.constant 256 : index
    %127 = vector.load %arg9[%c16_64, %c256_65] : memref<32x512xf32, #tpu.memory_space<vmem>>, vector<16x128xf32>
    tpu.vector_store %arg9[%c16_64, %c256_65], %126 {strides = array<i32>} : memref<32x512xf32, #tpu.memory_space<vmem>>, vector<16x128xf32>,
    %128 = vector.extract_strided_slice %112 {offsets = [0, 128], sizes = [16, 128], strides = [1, 1]} : vector<16x256xf32> to vector<16x128xf32>
    %cst_66 = arith.constant dense<0.000000e+00> : vector<128x256xf32>
    %129 = tpu.matmul %128, %113, %cst_66 {dimension_numbers = #tpu.dot_dimension_numbers<[0], [0], [1], [1], [0, 1, 1, 1], [], []>} : vector<16x128xf32>, vector<16x256xf32>, vector<128x256xf32> -> vector<128x256xf32>
    %cst_67 = arith.constant dense<0xFF800000> : vector<128xf32>
    %130 = vector.multi_reduction <maximumf>, %129, %cst_67 [1] : vector<128x256xf32> to vector<128xf32>
    %131 = vector.shape_cast %130 : vector<128xf32> to vector<128x1xf32>
    %132 = vector.broadcast %131 : vector<128x1xf32> to vector<128x256xf32>
    %133 = arith.subf %129, %132 : vector<128x256xf32>
    %134 = math.exp %133 : vector<128x256xf32>
    %cst_68 = arith.constant dense<0.000000e+00> : vector<16x128xf32>
    %135 = tpu.matmul %114, %134, %cst_68 {dimension_numbers = #tpu.dot_dimension_numbers<[1], [1], [0], [0], [0, 0, 1, 0], [], []>} : vector<16x256xf32>, vector<128x256xf32>, vector<16x128xf32> -> vector<16x128xf32>
    %cst_69 = arith.constant dense<0.000000e+00> : vector<1x128xf32>
    %136 = tpu.matmul %0, %134, %cst_69 {dimension_numbers = #tpu.dot_dimension_numbers<[1], [1], [0], [0], [0, 0, 1, 0], [], []>} : vector<1x256xf32>, vector<128x256xf32>, vector<1x128xf32> -> vector<1x128xf32>
    %137 = tpu.reciprocal %136 : vector<1x128xf32> -> vector<1x128xf32>
    %138 = vector.broadcast %137 : vector<1x128xf32> to vector<16x128xf32>
    %139 = arith.mulf %135, %138 : vector<16x128xf32>
    %c16_70 = arith.constant 16 : index
    %c384_71 = arith.constant 384 : index
    %140 = vector.load %arg9[%c16_70, %c384_71] : memref<32x512xf32, #tpu.memory_space<vmem>>, vector<16x128xf32>
    tpu.vector_store %arg9[%c16_70, %c384_71], %139 {strides = array<i32>} : memref<32x512xf32, #tpu.memory_space<vmem>>, vector<16x128xf32>,
    %c0_72 = arith.constant 0 : index
    %c0_73 = arith.constant 0 : index
    %141 = vector.load %arg6[%c0_72, %c0_73] : memref<8x32xf32, #tpu.memory_space<vmem>>, vector<8x32xf32>
    %c0_74 = arith.constant 0 : index
    %c0_75 = arith.constant 0 : index
    %142 = vector.load %arg9[%c0_74, %c0_75] : memref<32x512xf32, #tpu.memory_space<vmem>>, vector<32x512xf32>
    %cst_76 = arith.constant dense<0.000000e+00> : vector<8x512xf32>
    %143 = tpu.matmul %141, %142, %cst_76 {dimension_numbers = #tpu.dot_dimension_numbers<[1], [0], [0], [1], [0, 0, 1, 1], [], []>} : vector<8x32xf32>, vector<32x512xf32>, vector<8x512xf32> -> vector<8x512xf32>
    %c0_77 = arith.constant 0 : index
    %c0_78 = arith.constant 0 : index
    %144 = vector.load %arg7[%c0_77, %c0_78] : memref<8x1xf32, #tpu.memory_space<vmem>>, vector<8x1xf32>
    %145 = vector.broadcast %144 : vector<8x1xf32> to vector<8x512xf32>
    %146 = arith.addf %143, %145 : vector<8x512xf32>
    %147 = vector.extract_strided_slice %146 {offsets = [0, 0], sizes = [8, 256], strides = [1, 1]} : vector<8x512xf32> to vector<8x256xf32>
    %c0_79 = arith.constant 0 : index
    %c0_80 = arith.constant 0 : index
    %c0_81 = arith.constant 0 : index
    %148 = vector.load %arg8[%c0_79, %c0_80, %c0_81] : memref<2x8x256xf32, #tpu.memory_space<vmem>>, vector<1x8x256xf32>
    %149 = vector.shape_cast %148 : vector<1x8x256xf32> to vector<8x256xf32>
    %150 = vector.shape_cast %147 : vector<8x256xf32> to vector<1x8x256xf32>
    tpu.vector_store %arg8[%c0_79, %c0_80, %c0_81], %150 {strides = array<i32>} : memref<2x8x256xf32, #tpu.memory_space<vmem>>, vector<1x8x256xf32>,
    %151 = vector.extract_strided_slice %146 {offsets = [0, 256], sizes = [8, 256], strides = [1, 1]} : vector<8x512xf32> to vector<8x256xf32>
    %c1_82 = arith.constant 1 : index
    %c0_83 = arith.constant 0 : index
    %c0_84 = arith.constant 0 : index
    %152 = vector.load %arg8[%c1_82, %c0_83, %c0_84] : memref<2x8x256xf32, #tpu.memory_space<vmem>>, vector<1x8x256xf32>
    %153 = vector.shape_cast %152 : vector<1x8x256xf32> to vector<8x256xf32>
    %154 = vector.shape_cast %151 : vector<8x256xf32> to vector<1x8x256xf32>
    tpu.vector_store %arg8[%c1_82, %c0_83, %c0_84], %154 {strides = array<i32>} : memref<2x8x256xf32, #tpu.memory_space<vmem>>, vector<1x8x256xf32>,
    return
  }
  func.func @transform_0(%arg0: i32) -> (i32, i32, i32) {
    %c0_i32 = arith.constant 0 : i32
    %c0_i32_0 = arith.constant 0 : i32
    %c0_i32_1 = arith.constant 0 : i32
    return %arg0, %c0_i32, %c0_i32_0 : i32, i32, i32
  }
  func.func @transform_1(%arg0: i32) -> (i32, i32, i32) {
    %c0_i32 = arith.constant 0 : i32
    %c0_i32_0 = arith.constant 0 : i32
    %c0_i32_1 = arith.constant 0 : i32
    return %arg0, %c0_i32, %c0_i32_0 : i32, i32, i32
  }
  func.func @transform_2(%arg0: i32) -> (i32, i32, i32) {
    %c0_i32 = arith.constant 0 : i32
    %c0_i32_0 = arith.constant 0 : i32
    %c0_i32_1 = arith.constant 0 : i32
    return %arg0, %c0_i32, %c0_i32_0 : i32, i32, i32
  }
  func.func @transform_3(%arg0: i32) -> (i32, i32) {
    %c0_i32 = arith.constant 0 : i32
    %c0_i32_0 = arith.constant 0 : i32
    %c0_i32_1 = arith.constant 0 : i32
    return %c0_i32, %c0_i32_0 : i32, i32
  }
  func.func @transform_4(%arg0: i32) -> (i32, i32) {
    %c0_i32 = arith.constant 0 : i32
    %c0_i32_0 = arith.constant 0 : i32
    %c0_i32_1 = arith.constant 0 : i32
    return %c0_i32, %c0_i32_0 : i32, i32
  }
  func.func @transform_5(%arg0: i32) -> (i32, i32) {
    %c0_i32 = arith.constant 0 : i32
    %c0_i32_0 = arith.constant 0 : i32
    %c0_i32_1 = arith.constant 0 : i32
    return %c0_i32, %c0_i32_0 : i32, i32
  }
  func.func @transform_6(%arg0: i32) -> (i32, i32) {
    %c0_i32 = arith.constant 0 : i32
    %c0_i32_0 = arith.constant 0 : i32
    %c0_i32_1 = arith.constant 0 : i32
    return %c0_i32, %c0_i32_0 : i32, i32
  }
  func.func @transform_7(%arg0: i32) -> (i32, i32, i32) {
    %c0_i32 = arith.constant 0 : i32
    %c0_i32_0 = arith.constant 0 : i32
    %c0_i32_1 = arith.constant 0 : i32
    return %arg0, %c0_i32, %c0_i32_0 : i32, i32, i32
  }
}

</mosaic_0001>

<llo_original>
// kernel: cross_attention_forward.1
$region0: #{cross_attention_forward.1}
  #allocation0 [shape = 'u32[]', space=smem, size = 0x4, offset = 0x4, fixed_abs, tag = 'smem constant byte address 0x4 - core index']
  #allocation1 [shape = 'u32[72,128]{1,0:T(1,128)}', space=vmem, size = 0x9000, scoped, tag = 'internal scratch']
  #allocation2 [shape = 'f32[32,512]{1,0:T(8,128)}', space=vmem, size = 0x10000, scoped, tag = 'scratch operand']
  %s0 = inlined_call_operand.vmem [shape: f32[2,8,256], index: 0, kind: input, shape index: {}]
  %s1 = inlined_call_operand.vmem [shape: f32[2,8,256], index: 1, kind: input, shape index: {}]
  %s2 = inlined_call_operand.vmem [shape: f32[2,64,1], index: 2, kind: input, shape index: {}]
  %s3 = inlined_call_operand.vmem [shape: f32[64,8], index: 3, kind: input, shape index: {}]
  %s4 = inlined_call_operand.vmem [shape: f32[32,8], index: 4, kind: input, shape index: {}]
  %s5 = inlined_call_operand.vmem [shape: f32[8,32], index: 5, kind: input, shape index: {}]
  %s6 = inlined_call_operand.vmem [shape: f32[8,1], index: 6, kind: input, shape index: {}]
  %s7 = inlined_call_operand.vmem [shape: f32[2,8,256], index: 7, kind: output, shape index: {}]
  %s8 = sld [smem:[#allocation0]]
  $region38: #{cross_attention_forward.1} parent=0
    _
  %s10 = ssub.s32 1, %s8
  %s11 = scalar_select 0, %s10, %s8
  // Predicated region
  $region2: #{cross_attention_forward.1} parent=0 // pred_check
    _
  $region3: #{cross_attention_forward.1} parent=0 // pred_check_branch
    %13 = sbr.rel (0) target = $region5
  $region4: #{cross_attention_forward.1} parent=0 // pred_region
    _
  $region5: #{cross_attention_forward.1} parent=0 // pred_fallthru
    _
  // Predicated region
  $region6: #{cross_attention_forward.1} parent=0 // pred_check
    _
  $region7: #{cross_attention_forward.1} parent=0 // pred_check_branch
    %15 = sbr.rel (0) target = $region9
  $region8: #{cross_attention_forward.1} parent=0 // pred_region
    _
  $region9: #{cross_attention_forward.1} parent=0 // pred_fallthru
    _
  // Predicated region
  $region10: #{cross_attention_forward.1} parent=0 // pred_check
    _
  $region11: #{cross_attention_forward.1} parent=0 // pred_check_branch
    %17 = sbr.rel (0) target = $region13
  $region12: #{cross_attention_forward.1} parent=0 // pred_region
    _
  $region13: #{cross_attention_forward.1} parent=0 // pred_fallthru
    _
  // Predicated region
  $region14: #{cross_attention_forward.1} parent=0 // pred_check
    _
  $region15: #{cross_attention_forward.1} parent=0 // pred_check_branch
    %19 = sbr.rel (0) target = $region17
  $region16: #{cross_attention_forward.1} parent=0 // pred_region
    _
  $region17: #{cross_attention_forward.1} parent=0 // pred_fallthru
    _
  // Predicated region
  $region18: #{cross_attention_forward.1} parent=0 // pred_check
    _
  $region19: #{cross_attention_forward.1} parent=0 // pred_check_branch
    %21 = sbr.rel (0) target = $region21
  $region20: #{cross_attention_forward.1} parent=0 // pred_region
    _
  $region21: #{cross_attention_forward.1} parent=0 // pred_fallthru
    _
  // Predicated region
  $region22: #{cross_attention_forward.1} parent=0 // pred_check
    _
  $region23: #{cross_attention_forward.1} parent=0 // pred_check_branch
    %23 = sbr.rel (0) target = $region25
  $region24: #{cross_attention_forward.1} parent=0 // pred_region
    _
  $region25: #{cross_attention_forward.1} parent=0 // pred_fallthru
    _
  // Predicated region
  $region26: #{cross_attention_forward.1} parent=0 // pred_check
    _
  $region27: #{cross_attention_forward.1} parent=0 // pred_check_branch
    %25 = sbr.rel (0) target = $region29
  $region28: #{cross_attention_forward.1} parent=0 // pred_region
    _
  $region29: #{cross_attention_forward.1} parent=0 // pred_fallthru
    _
  %v26 = vld [vmem:[%s3] sm:$0xff]
  %v27 = vld [vmem:[%s3 + $0x8] sm:$0xff]
  %v28 = vld [vmem:[%s3 + $0x10] sm:$0xff]
  %v29 = vld [vmem:[%s3 + $0x18] sm:$0xff]
  %v30 = vld [vmem:[%s3 + $0x20] sm:$0xff]
  %v31 = vld [vmem:[%s3 + $0x28] sm:$0xff]
  %v32 = vld [vmem:[%s3 + $0x30] sm:$0xff]
  %v33 = vld [vmem:[%s3 + $0x38] sm:$0xff]
  %v34 = vld [vmem:[%s0] sm:$0xff]
  %v35 = vld [vmem:[%s0 + $0x8] sm:$0xff]
  %v36 = vld [vmem:[%s2] sm:$0xff]
  %v37 = vld [vmem:[%s2 + $0x8] sm:$0xff]
  %v38 = vld [vmem:[%s2 + $0x10] sm:$0xff]
  %v39 = vld [vmem:[%s2 + $0x18] sm:$0xff]
  %v40 = vld [vmem:[%s2 + $0x20] sm:$0xff]
  %v41 = vld [vmem:[%s2 + $0x28] sm:$0xff]
  %v42 = vld [vmem:[%s2 + $0x30] sm:$0xff]
  %v43 = vld [vmem:[%s2 + $0x38] sm:$0xff]
  %45 = vset.pattern.permute.xlu0 0
  %46 = vperm.xlu0 %45, %v36
  %v47 = vpop.permute.xlu0 %46
  %50 = vset.pattern.permute.xlu0 0
  %51 = vperm.xlu0 %50, %v37
  %v52 = vpop.permute.xlu0 %51
  %55 = vset.pattern.permute.xlu0 0
  %56 = vperm.xlu0 %55, %v38
  %v57 = vpop.permute.xlu0 %56
  %60 = vset.pattern.permute.xlu0 0
  %61 = vperm.xlu0 %60, %v39
  %v62 = vpop.permute.xlu0 %61
  %65 = vset.pattern.permute.xlu0 0
  %66 = vperm.xlu0 %65, %v40
  %v67 = vpop.permute.xlu0 %66
  %70 = vset.pattern.permute.xlu0 0
  %71 = vperm.xlu0 %70, %v41
  %v72 = vpop.permute.xlu0 %71
  %75 = vset.pattern.permute.xlu0 0
  %76 = vperm.xlu0 %75, %v42
  %v77 = vpop.permute.xlu0 %76
  %80 = vset.pattern.permute.xlu0 0
  %81 = vperm.xlu0 %80, %v43
  %v82 = vpop.permute.xlu0 %81
  %vm84 = vcmask 64512
  %v86 = vsel %vm84, %v26, 0
  %v89 = vsel %vm84, %v27, 0
  %v92 = vsel %vm84, %v28, 0
  %v95 = vsel %vm84, %v29, 0
  %v98 = vsel %vm84, %v30, 0
  %v101 = vsel %vm84, %v31, 0
  %v104 = vsel %vm84, %v32, 0
  %v107 = vsel %vm84, %v33, 0
  %109 = vmatpush.msra.mxu0 0.0
  %110 = vmatpush.msra.mxu0 0.0
  %111 = vmatpush.msra.mxu0 0.0
  %112 = vmatpush.msra.mxu0 0.0
  %113 = vmatpush.msra.mxu0 0.0
  %114 = vmatpush.msra.mxu0 0.0
  %115 = vmatpush.msra.mxu0 0.0
  %116 = vmatpush.msra.mxu0 0.0
  %117 = vmatpush.msra.mxu0 0.0
  %118 = vmatpush.msra.mxu0 0.0
  %119 = vmatpush.msra.mxu0 0.0
  %120 = vmatpush.msra.mxu0 0.0
  %121 = vmatpush.msra.mxu0 0.0
  %122 = vmatpush.msra.mxu0 0.0
  %123 = vmatpush.msra.mxu0 0.0
  %124 = vmatpush.msra.mxu0 %v34
  %125 = vmatmul.f32.gmra.mxu0 %v86
  %v126 = vpop.f32.mrf.mxu0
  %v127 = vadd.f32 %v47, %v126
  %128 = vmatmul.f32.gmra.mxu0 %v89
  %v129 = vpop.f32.mrf.mxu0
  %v130 = vadd.f32 %v52, %v129
  %131 = vmatmul.f32.gmra.mxu0 %v92
  %v132 = vpop.f32.mrf.mxu0
  %v133 = vadd.f32 %v57, %v132
  %134 = vmatmul.f32.gmra.mxu0 %v95
  %v135 = vpop.f32.mrf.mxu0
  %v136 = vadd.f32 %v62, %v135
  %137 = vmatmul.f32.gmra.mxu0 %v98
  %v138 = vpop.f32.mrf.mxu0
  %v139 = vadd.f32 %v67, %v138
  %140 = vmatmul.f32.gmra.mxu0 %v101
  %v141 = vpop.f32.mrf.mxu0
  %v142 = vadd.f32 %v72, %v141
  %143 = vmatmul.f32.gmra.mxu0 %v104
  %v144 = vpop.f32.mrf.mxu0
  %v145 = vadd.f32 %v77, %v144
  %146 = vmatmul.f32.gmra.mxu0 %v107
  %v147 = vpop.f32.mrf.mxu0
  %v148 = vadd.f32 %v82, %v147
  %149 = vdwg.mxu0
  %150 = vmatpush.msra.mxu0 0.0
  %151 = vmatpush.msra.mxu0 0.0
  %152 = vmatpush.msra.mxu0 0.0
  %153 = vmatpush.msra.mxu0 0.0
  %154 = vmatpush.msra.mxu0 0.0
  %155 = vmatpush.msra.mxu0 0.0
  %156 = vmatpush.msra.mxu0 0.0
  %157 = vmatpush.msra.mxu0 0.0
  %158 = vmatpush.msra.mxu0 0.0
  %159 = vmatpush.msra.mxu0 0.0
  %160 = vmatpush.msra.mxu0 0.0
  %161 = vmatpush.msra.mxu0 0.0
  %162 = vmatpush.msra.mxu0 0.0
  %163 = vmatpush.msra.mxu0 0.0
  %164 = vmatpush.msra.mxu0 0.0
  %165 = vmatpush.msra.mxu0 %v35
  %166 = vmatmul.f32.gmra.mxu0 %v86
  %v167 = vpop.f32.mrf.mxu0
  %v168 = vadd.f32 %v47, %v167
  %169 = vmatmul.f32.gmra.mxu0 %v89
  %v170 = vpop.f32.mrf.mxu0
  %v171 = vadd.f32 %v52, %v170
  %172 = vmatmul.f32.gmra.mxu0 %v92
  %v173 = vpop.f32.mrf.mxu0
  %v174 = vadd.f32 %v57, %v173
  %175 = vmatmul.f32.gmra.mxu0 %v95
  %v176 = vpop.f32.mrf.mxu0
  %v177 = vadd.f32 %v62, %v176
  %178 = vmatmul.f32.gmra.mxu0 %v98
  %v179 = vpop.f32.mrf.mxu0
  %v180 = vadd.f32 %v67, %v179
  %181 = vmatmul.f32.gmra.mxu0 %v101
  %v182 = vpop.f32.mrf.mxu0
  %v183 = vadd.f32 %v72, %v182
  %184 = vmatmul.f32.gmra.mxu0 %v104
  %v185 = vpop.f32.mrf.mxu0
  %v186 = vadd.f32 %v77, %v185
  %187 = vmatmul.f32.gmra.mxu0 %v107
  %v188 = vpop.f32.mrf.mxu0
  %v189 = vadd.f32 %v82, %v188
  %190 = vdwg.mxu0
  %v191 = vld [vmem:[%s4] sm:$0xff]
  %v192 = vld [vmem:[%s4 + $0x8] sm:$0xff]
  %v193 = vld [vmem:[%s4 + $0x10] sm:$0xff]
  %v194 = vld [vmem:[%s4 + $0x18] sm:$0xff]
  %v195 = vld [vmem:[%s1] sm:$0xff]
  %v196 = vld [vmem:[%s1 + $0x8] sm:$0xff]
  %v198 = vsel %vm84, %v191, 0
  %v201 = vsel %vm84, %v192, 0
  %v204 = vsel %vm84, %v193, 0
  %v207 = vsel %vm84, %v194, 0
  %209 = vmatpush.msra.mxu0 0.0
  %210 = vmatpush.msra.mxu0 0.0
  %211 = vmatpush.msra.mxu0 0.0
  %212 = vmatpush.msra.mxu0 0.0
  %213 = vmatpush.msra.mxu0 0.0
  %214 = vmatpush.msra.mxu0 0.0
  %215 = vmatpush.msra.mxu0 0.0
  %216 = vmatpush.msra.mxu0 0.0
  %217 = vmatpush.msra.mxu0 0.0
  %218 = vmatpush.msra.mxu0 0.0
  %219 = vmatpush.msra.mxu0 0.0
  %220 = vmatpush.msra.mxu0 0.0
  %221 = vmatpush.msra.mxu0 0.0
  %222 = vmatpush.msra.mxu0 0.0
  %223 = vmatpush.msra.mxu0 0.0
  %224 = vmatpush.msra.mxu0 %v195
  %225 = vmatmul.f32.gmra.mxu0 %v198
  %v226 = vpop.f32.mrf.mxu0
  %v227 = vadd.f32 0.0, %v226
  %228 = vmatmul.f32.gmra.mxu0 %v201
  %v229 = vpop.f32.mrf.mxu0
  %v230 = vadd.f32 0.0, %v229
  %231 = vmatmul.f32.gmra.mxu0 %v204
  %v232 = vpop.f32.mrf.mxu0
  %v233 = vadd.f32 0.0, %v232
  %234 = vmatmul.f32.gmra.mxu0 %v207
  %v235 = vpop.f32.mrf.mxu0
  %v236 = vadd.f32 0.0, %v235
  %237 = vdwg.mxu0
  %238 = vmatpush.msra.mxu0 0.0
  %239 = vmatpush.msra.mxu0 0.0
  %240 = vmatpush.msra.mxu0 0.0
  %241 = vmatpush.msra.mxu0 0.0
  %242 = vmatpush.msra.mxu0 0.0
  %243 = vmatpush.msra.mxu0 0.0
  %244 = vmatpush.msra.mxu0 0.0
  %245 = vmatpush.msra.mxu0 0.0
  %246 = vmatpush.msra.mxu0 0.0
  %247 = vmatpush.msra.mxu0 0.0
  %248 = vmatpush.msra.mxu0 0.0
  %249 = vmatpush.msra.mxu0 0.0
  %250 = vmatpush.msra.mxu0 0.0
  %251 = vmatpush.msra.mxu0 0.0
  %252 = vmatpush.msra.mxu0 0.0
  %253 = vmatpush.msra.mxu0 %v196
  %254 = vmatmul.f32.gmra.mxu0 %v198
  %v255 = vpop.f32.mrf.mxu0
  %v256 = vadd.f32 0.0, %v255
  %257 = vmatmul.f32.gmra.mxu0 %v201
  %v258 = vpop.f32.mrf.mxu0
  %v259 = vadd.f32 0.0, %v258
  %260 = vmatmul.f32.gmra.mxu0 %v204
  %v261 = vpop.f32.mrf.mxu0
  %v262 = vadd.f32 0.0, %v261
  %263 = vmatmul.f32.gmra.mxu0 %v207
  %v264 = vpop.f32.mrf.mxu0
  %v265 = vadd.f32 0.0, %v264
  %266 = vdwg.mxu0
  %267 = vxpose.xlu0.b32.start [1/16] %v127, 128
  %268 = vxpose.xlu0.b32.cont [2/16] %v130, 128
  %269 = vxpose.xlu0.b32.cont [3/16] 0.0, 128
  %270 = vxpose.xlu0.b32.cont [4/16] 0.0, 128
  %271 = vxpose.xlu0.b32.cont [5/16] 0.0, 128
  %272 = vxpose.xlu0.b32.cont [6/16] 0.0, 128
  %273 = vxpose.xlu0.b32.cont [7/16] 0.0, 128
  %274 = vxpose.xlu0.b32.cont [8/16] 0.0, 128
  %275 = vxpose.xlu0.b32.cont [9/16] 0.0, 128
  %276 = vxpose.xlu0.b32.cont [10/16] 0.0, 128
  %277 = vxpose.xlu0.b32.cont [11/16] 0.0, 128
  %278 = vxpose.xlu0.b32.cont [12/16] 0.0, 128
  %279 = vxpose.xlu0.b32.cont [13/16] 0.0, 128
  %280 = vxpose.xlu0.b32.cont [14/16] 0.0, 128
  %281 = vxpose.xlu0.b32.cont [15/16] 0.0, 128
  %282 = vxpose.xlu0.b32.end [16/16] 0.0, 128
  %v283 = vpop.trf.xlu0
  %v284 = vpop.trf.xlu0
  %v285 = vpop.trf.xlu0
  %v286 = vpop.trf.xlu0
  %v287 = vpop.trf.xlu0
  %v288 = vpop.trf.xlu0
  %v289 = vpop.trf.xlu0
  %v290 = vpop.trf.xlu0
  %v291 = vpop.trf.xlu0
  %v292 = vpop.trf.xlu0
  %v293 = vpop.trf.xlu0
  %v294 = vpop.trf.xlu0
  %v295 = vpop.trf.xlu0
  %v296 = vpop.trf.xlu0
  %v297 = vpop.trf.xlu0
  %v298 = vpop.trf.xlu0
  %vm299 = vcmask 130048
  %v301 = vsel %vm299, %v283, 0
  %v304 = vsel %vm299, %v284, 0
  %v307 = vsel %vm299, %v285, 0
  %v310 = vsel %vm299, %v286, 0
  %v313 = vsel %vm299, %v287, 0
  %v316 = vsel %vm299, %v288, 0
  %v319 = vsel %vm299, %v289, 0
  %v322 = vsel %vm299, %v290, 0
  %v325 = vsel %vm299, %v291, 0
  %v328 = vsel %vm299, %v292, 0
  %v331 = vsel %vm299, %v293, 0
  %v334 = vsel %vm299, %v294, 0
  %v337 = vsel %vm299, %v295, 0
  %v340 = vsel %vm299, %v296, 0
  %v343 = vsel %vm299, %v297, 0
  %v346 = vsel %vm299, %v298, 0
  %348 = vmatpush.msra.mxu0 0.0
  %349 = vmatpush.msra.mxu0 0.0
  %350 = vmatpush.msra.mxu0 0.0
  %351 = vmatpush.msra.mxu0 0.0
  %352 = vmatpush.msra.mxu0 0.0
  %353 = vmatpush.msra.mxu0 0.0
  %354 = vmatpush.msra.mxu0 0.0
  %355 = vmatpush.msra.mxu0 0.0
  %356 = vmatpush.msra.mxu0 0.0
  %357 = vmatpush.msra.mxu0 0.0
  %358 = vmatpush.msra.mxu0 0.0
  %359 = vmatpush.msra.mxu0 0.0
  %360 = vmatpush.msra.mxu0 0.0
  %361 = vmatpush.msra.mxu0 0.0
  %362 = vmatpush.msra.mxu0 %v142
  %363 = vmatpush.msra.mxu0 %v139
  %364 = vmatmul.f32.gmra.mxu0 %v301
  %v365 = vpop.f32.mrf.mxu0
  %v366 = vadd.f32 0.0, %v365
  %367 = vmatmul.f32.gmra.mxu0 %v304
  %v368 = vpop.f32.mrf.mxu0
  %v369 = vadd.f32 0.0, %v368
  %370 = vmatmul.f32.gmra.mxu0 %v307
  %v371 = vpop.f32.mrf.mxu0
  %v372 = vadd.f32 0.0, %v371
  %373 = vmatmul.f32.gmra.mxu0 %v310
  %v374 = vpop.f32.mrf.mxu0
  %v375 = vadd.f32 0.0, %v374
  %376 = vmatmul.f32.gmra.mxu0 %v313
  %v377 = vpop.f32.mrf.mxu0
  %v378 = vadd.f32 0.0, %v377
  %379 = vmatmul.f32.gmra.mxu0 %v316
  %v380 = vpop.f32.mrf.mxu0
  %v381 = vadd.f32 0.0, %v380
  %382 = vmatmul.f32.gmra.mxu0 %v319
  %v383 = vpop.f32.mrf.mxu0
  %v384 = vadd.f32 0.0, %v383
  %385 = vmatmul.f32.gmra.mxu0 %v322
  %v386 = vpop.f32.mrf.mxu0
  %v387 = vadd.f32 0.0, %v386
  %388 = vmatmul.f32.gmra.mxu0 %v325
  %v389 = vpop.f32.mrf.mxu0
  %v390 = vadd.f32 0.0, %v389
  %391 = vmatmul.f32.gmra.mxu0 %v328
  %v392 = vpop.f32.mrf.mxu0
  %v393 = vadd.f32 0.0, %v392
  %394 = vmatmul.f32.gmra.mxu0 %v331
  %v395 = vpop.f32.mrf.mxu0
  %v396 = vadd.f32 0.0, %v395
  %397 = vmatmul.f32.gmra.mxu0 %v334
  %v398 = vpop.f32.mrf.mxu0
  %v399 = vadd.f32 0.0, %v398
  %400 = vmatmul.f32.gmra.mxu0 %v337
  %v401 = vpop.f32.mrf.mxu0
  %v402 = vadd.f32 0.0, %v401
  %403 = vmatmul.f32.gmra.mxu0 %v340
  %v404 = vpop.f32.mrf.mxu0
  %v405 = vadd.f32 0.0, %v404
  %406 = vmatmul.f32.gmra.mxu0 %v343
  %v407 = vpop.f32.mrf.mxu0
  %v408 = vadd.f32 0.0, %v407
  %409 = vmatmul.f32.gmra.mxu0 %v346
  %v410 = vpop.f32.mrf.mxu0
  %v411 = vadd.f32 0.0, %v410
  %412 = vdwg.mxu0
  %413 = vmatpush.msra.mxu0 0.0
  %414 = vmatpush.msra.mxu0 0.0
  %415 = vmatpush.msra.mxu0 0.0
  %416 = vmatpush.msra.mxu0 0.0
  %417 = vmatpush.msra.mxu0 0.0
  %418 = vmatpush.msra.mxu0 0.0
  %419 = vmatpush.msra.mxu0 0.0
  %420 = vmatpush.msra.mxu0 0.0
  %421 = vmatpush.msra.mxu0 0.0
  %422 = vmatpush.msra.mxu0 0.0
  %423 = vmatpush.msra.mxu0 0.0
  %424 = vmatpush.msra.mxu0 0.0
  %425 = vmatpush.msra.mxu0 0.0
  %426 = vmatpush.msra.mxu0 0.0
  %427 = vmatpush.msra.mxu0 %v183
  %428 = vmatpush.msra.mxu0 %v180
  %429 = vmatmul.f32.gmra.mxu0 %v301
  %v430 = vpop.f32.mrf.mxu0
  %v431 = vadd.f32 0.0, %v430
  %432 = vmatmul.f32.gmra.mxu0 %v304
  %v433 = vpop.f32.mrf.mxu0
  %v434 = vadd.f32 0.0, %v433
  %435 = vmatmul.f32.gmra.mxu0 %v307
  %v436 = vpop.f32.mrf.mxu0
  %v437 = vadd.f32 0.0, %v436
  %438 = vmatmul.f32.gmra.mxu0 %v310
  %v439 = vpop.f32.mrf.mxu0
  %v440 = vadd.f32 0.0, %v439
  %441 = vmatmul.f32.gmra.mxu0 %v313
  %v442 = vpop.f32.mrf.mxu0
  %v443 = vadd.f32 0.0, %v442
  %444 = vmatmul.f32.gmra.mxu0 %v316
  %v445 = vpop.f32.mrf.mxu0
  %v446 = vadd.f32 0.0, %v445
  %447 = vmatmul.f32.gmra.mxu0 %v319
  %v448 = vpop.f32.mrf.mxu0
  %v449 = vadd.f32 0.0, %v448
  %450 = vmatmul.f32.gmra.mxu0 %v322
  %v451 = vpop.f32.mrf.mxu0
  %v452 = vadd.f32 0.0, %v451
  %453 = vmatmul.f32.gmra.mxu0 %v325
  %v454 = vpop.f32.mrf.mxu0
  %v455 = vadd.f32 0.0, %v454
  %456 = vmatmul.f32.gmra.mxu0 %v328
  %v457 = vpop.f32.mrf.mxu0
  %v458 = vadd.f32 0.0, %v457
  %459 = vmatmul.f32.gmra.mxu0 %v331
  %v460 = vpop.f32.mrf.mxu0
  %v461 = vadd.f32 0.0, %v460
  %462 = vmatmul.f32.gmra.mxu0 %v334
  %v463 = vpop.f32.mrf.mxu0
  %v464 = vadd.f32 0.0, %v463
  %465 = vmatmul.f32.gmra.mxu0 %v337
  %v466 = vpop.f32.mrf.mxu0
  %v467 = vadd.f32 0.0, %v466
  %468 = vmatmul.f32.gmra.mxu0 %v340
  %v469 = vpop.f32.mrf.mxu0
  %v470 = vadd.f32 0.0, %v469
  %471 = vmatmul.f32.gmra.mxu0 %v343
  %v472 = vpop.f32.mrf.mxu0
  %v473 = vadd.f32 0.0, %v472
  %474 = vmatmul.f32.gmra.mxu0 %v346
  %v475 = vpop.f32.mrf.mxu0
  %v476 = vadd.f32 0.0, %v475
  %477 = vdwg.mxu0
  %v478 = vmax.f32 %v366, %v431
  %479 = vmax.xlane.f32.xlu0 %v478
  %v480 = vpop.xlane.xlu0 %479
  %v481 = vmax.f32 %v369, %v434
  %482 = vmax.xlane.f32.xlu0 %v481
  %v483 = vpop.xlane.xlu0 %482
  %v484 = vmax.f32 %v372, %v437
  %485 = vmax.xlane.f32.xlu0 %v484
  %v486 = vpop.xlane.xlu0 %485
  %v487 = vmax.f32 %v375, %v440
  %488 = vmax.xlane.f32.xlu0 %v487
  %v489 = vpop.xlane.xlu0 %488
  %v490 = vmax.f32 %v378, %v443
  %491 = vmax.xlane.f32.xlu0 %v490
  %v492 = vpop.xlane.xlu0 %491
  %v493 = vmax.f32 %v381, %v446
  %494 = vmax.xlane.f32.xlu0 %v493
  %v495 = vpop.xlane.xlu0 %494
  %v496 = vmax.f32 %v384, %v449
  %497 = vmax.xlane.f32.xlu0 %v496
  %v498 = vpop.xlane.xlu0 %497
  %v499 = vmax.f32 %v387, %v452
  %500 = vmax.xlane.f32.xlu0 %v499
  %v501 = vpop.xlane.xlu0 %500
  %v502 = vmax.f32 %v390, %v455
  %503 = vmax.xlane.f32.xlu0 %v502
  %v504 = vpop.xlane.xlu0 %503
  %v505 = vmax.f32 %v393, %v458
  %506 = vmax.xlane.f32.xlu0 %v505
  %v507 = vpop.xlane.xlu0 %506
  %v508 = vmax.f32 %v396, %v461
  %509 = vmax.xlane.f32.xlu0 %v508
  %v510 = vpop.xlane.xlu0 %509
  %v511 = vmax.f32 %v399, %v464
  %512 = vmax.xlane.f32.xlu0 %v511
  %v513 = vpop.xlane.xlu0 %512
  %v514 = vmax.f32 %v402, %v467
  %515 = vmax.xlane.f32.xlu0 %v514
  %v516 = vpop.xlane.xlu0 %515
  %v517 = vmax.f32 %v405, %v470
  %518 = vmax.xlane.f32.xlu0 %v517
  %v519 = vpop.xlane.xlu0 %518
  %v520 = vmax.f32 %v408, %v473
  %521 = vmax.xlane.f32.xlu0 %v520
  %v522 = vpop.xlane.xlu0 %521
  %v523 = vmax.f32 %v411, %v476
  %524 = vmax.xlane.f32.xlu0 %v523
  %v525 = vpop.xlane.xlu0 %524
  %v526 = vsub.f32 %v366, %v480
  %v527 = vsub.f32 %v431, %v480
  %v528 = vsub.f32 %v369, %v483
  %v529 = vsub.f32 %v434, %v483
  %v530 = vsub.f32 %v372, %v486
  %v531 = vsub.f32 %v437, %v486
  %v532 = vsub.f32 %v375, %v489
  %v533 = vsub.f32 %v440, %v489
  %v534 = vsub.f32 %v378, %v492
  %v535 = vsub.f32 %v443, %v492
  %v536 = vsub.f32 %v381, %v495
  %v537 = vsub.f32 %v446, %v495
  %v538 = vsub.f32 %v384, %v498
  %v539 = vsub.f32 %v449, %v498
  %v540 = vsub.f32 %v387, %v501
  %v541 = vsub.f32 %v452, %v501
  %v542 = vsub.f32 %v390, %v504
  %v543 = vsub.f32 %v455, %v504
  %v544 = vsub.f32 %v393, %v507
  %v545 = vsub.f32 %v458, %v507
  %v546 = vsub.f32 %v396, %v510
  %v547 = vsub.f32 %v461, %v510
  %v548 = vsub.f32 %v399, %v513
  %v549 = vsub.f32 %v464, %v513
  %v550 = vsub.f32 %v402, %v516
  %v551 = vsub.f32 %v467, %v516
  %v552 = vsub.f32 %v405, %v519
  %v553 = vsub.f32 %v470, %v519
  %v554 = vsub.f32 %v408, %v522
  %v555 = vsub.f32 %v473, %v522
  %v556 = vsub.f32 %v411, %v525
  %v557 = vsub.f32 %v476, %v525
  %v558 = vmul.f32 %v526, 1.442695
  %v559 = vpow.pop %v558
  %v560 = vmul.f32 %v527, 1.442695
  %v561 = vpow.pop %v560
  %v562 = vmul.f32 %v528, 1.442695
  %v563 = vpow.pop %v562
  %v564 = vmul.f32 %v529, 1.442695
  %v565 = vpow.pop %v564
  %v566 = vmul.f32 %v530, 1.442695
  %v567 = vpow.pop %v566
  %v568 = vmul.f32 %v531, 1.442695
  %v569 = vpow.pop %v568
  %v570 = vmul.f32 %v532, 1.442695
  %v571 = vpow.pop %v570
  %v572 = vmul.f32 %v533, 1.442695
  %v573 = vpow.pop %v572
  %v574 = vmul.f32 %v534, 1.442695
  %v575 = vpow.pop %v574
  %v576 = vmul.f32 %v535, 1.442695
  %v577 = vpow.pop %v576
  %v578 = vmul.f32 %v536, 1.442695
  %v579 = vpow.pop %v578
  %v580 = vmul.f32 %v537, 1.442695
  %v581 = vpow.pop %v580
  %v582 = vmul.f32 %v538, 1.442695
  %v583 = vpow.pop %v582
  %v584 = vmul.f32 %v539, 1.442695
  %v585 = vpow.pop %v584
  %v586 = vmul.f32 %v540, 1.442695
  %v587 = vpow.pop %v586
  %v588 = vmul.f32 %v541, 1.442695
  %v589 = vpow.pop %v588
  %v590 = vmul.f32 %v542, 1.442695
  %v591 = vpow.pop %v590
  %v592 = vmul.f32 %v543, 1.442695
  %v593 = vpow.pop %v592
  %v594 = vmul.f32 %v544, 1.442695
  %v595 = vpow.pop %v594
  %v596 = vmul.f32 %v545, 1.442695
  %v597 = vpow.pop %v596
  %v598 = vmul.f32 %v546, 1.442695
  %v599 = vpow.pop %v598
  %v600 = vmul.f32 %v547, 1.442695
  %v601 = vpow.pop %v600
  %v602 = vmul.f32 %v548, 1.442695
  %v603 = vpow.pop %v602
  %v604 = vmul.f32 %v549, 1.442695
  %v605 = vpow.pop %v604
  %v606 = vmul.f32 %v550, 1.442695
  %v607 = vpow.pop %v606
  %v608 = vmul.f32 %v551, 1.442695
  %v609 = vpow.pop %v608
  %v610 = vmul.f32 %v552, 1.442695
  %v611 = vpow.pop %v610
  %v612 = vmul.f32 %v553, 1.442695
  %v613 = vpow.pop %v612
  %v614 = vmul.f32 %v554, 1.442695
  %v615 = vpow.pop %v614
  %v616 = vmul.f32 %v555, 1.442695
  %v617 = vpow.pop %v616
  %v618 = vmul.f32 %v556, 1.442695
  %v619 = vpow.pop %v618
  %v620 = vmul.f32 %v557, 1.442695
  %v621 = vpow.pop %v620
  %622 = vmatpush.xpose.msra.mxu0 %v619
  %623 = vmatpush.xpose.msra.mxu0 %v615
  %624 = vmatpush.xpose.msra.mxu0 %v611
  %625 = vmatpush.xpose.msra.mxu0 %v607
  %626 = vmatpush.xpose.msra.mxu0 %v603
  %627 = vmatpush.xpose.msra.mxu0 %v599
  %628 = vmatpush.xpose.msra.mxu0 %v595
  %629 = vmatpush.xpose.msra.mxu0 %v591
  %630 = vmatpush.xpose.msra.mxu0 %v587
  %631 = vmatpush.xpose.msra.mxu0 %v583
  %632 = vmatpush.xpose.msra.mxu0 %v579
  %633 = vmatpush.xpose.msra.mxu0 %v575
  %634 = vmatpush.xpose.msra.mxu0 %v571
  %635 = vmatpush.xpose.msra.mxu0 %v567
  %636 = vmatpush.xpose.msra.mxu0 %v563
  %637 = vmatpush.xpose.msra.mxu0 %v559
  %638 = vmatmul.f32.gmra.mxu0 %v227
  %v639 = vpop.f32.mrf.mxu0
  %v640 = vadd.f32 0.0, %v639
  %641 = vmatmul.f32.gmra.mxu0 %v230
  %v642 = vpop.f32.mrf.mxu0
  %v643 = vadd.f32 0.0, %v642
  %644 = vdwg.mxu0
  %645 = vmatpush.xpose.msra.mxu0 %v621
  %646 = vmatpush.xpose.msra.mxu0 %v617
  %647 = vmatpush.xpose.msra.mxu0 %v613
  %648 = vmatpush.xpose.msra.mxu0 %v609
  %649 = vmatpush.xpose.msra.mxu0 %v605
  %650 = vmatpush.xpose.msra.mxu0 %v601
  %651 = vmatpush.xpose.msra.mxu0 %v597
  %652 = vmatpush.xpose.msra.mxu0 %v593
  %653 = vmatpush.xpose.msra.mxu0 %v589
  %654 = vmatpush.xpose.msra.mxu0 %v585
  %655 = vmatpush.xpose.msra.mxu0 %v581
  %656 = vmatpush.xpose.msra.mxu0 %v577
  %657 = vmatpush.xpose.msra.mxu0 %v573
  %658 = vmatpush.xpose.msra.mxu0 %v569
  %659 = vmatpush.xpose.msra.mxu0 %v565
  %660 = vmatpush.xpose.msra.mxu0 %v561
  %661 = vmatmul.f32.gmra.mxu0 %v256
  %v662 = vpop.f32.mrf.mxu0
  %v663 = vadd.f32 %v640, %v662
  %664 = vmatmul.f32.gmra.mxu0 %v259
  %v665 = vpop.f32.mrf.mxu0
  %v666 = vadd.f32 %v643, %v665
  %667 = vdwg.mxu0
  %668 = vmatpush.xpose.msra.mxu0 %v619
  %669 = vmatpush.xpose.msra.mxu0 %v615
  %670 = vmatpush.xpose.msra.mxu0 %v611
  %671 = vmatpush.xpose.msra.mxu0 %v607
  %672 = vmatpush.xpose.msra.mxu0 %v603
  %673 = vmatpush.xpose.msra.mxu0 %v599
  %674 = vmatpush.xpose.msra.mxu0 %v595
  %675 = vmatpush.xpose.msra.mxu0 %v591
  %676 = vmatpush.xpose.msra.mxu0 %v587
  %677 = vmatpush.xpose.msra.mxu0 %v583
  %678 = vmatpush.xpose.msra.mxu0 %v579
  %679 = vmatpush.xpose.msra.mxu0 %v575
  %680 = vmatpush.xpose.msra.mxu0 %v571
  %681 = vmatpush.xpose.msra.mxu0 %v567
  %682 = vmatpush.xpose.msra.mxu0 %v563
  %683 = vmatpush.xpose.msra.mxu0 %v559
  %684 = vmatmul.f32.gmra.mxu0 1.0
  %v685 = vpop.f32.mrf.mxu0
  %v686 = vadd.f32 0.0, %v685
  %687 = vdwg.mxu0
  %688 = vmatpush.xpose.msra.mxu0 %v621
  %689 = vmatpush.xpose.msra.mxu0 %v617
  %690 = vmatpush.xpose.msra.mxu0 %v613
  %691 = vmatpush.xpose.msra.mxu0 %v609
  %692 = vmatpush.xpose.msra.mxu0 %v605
  %693 = vmatpush.xpose.msra.mxu0 %v601
  %694 = vmatpush.xpose.msra.mxu0 %v597
  %695 = vmatpush.xpose.msra.mxu0 %v593
  %696 = vmatpush.xpose.msra.mxu0 %v589
  %697 = vmatpush.xpose.msra.mxu0 %v585
  %698 = vmatpush.xpose.msra.mxu0 %v581
  %699 = vmatpush.xpose.msra.mxu0 %v577
  %700 = vmatpush.xpose.msra.mxu0 %v573
  %701 = vmatpush.xpose.msra.mxu0 %v569
  %702 = vmatpush.xpose.msra.mxu0 %v565
  %703 = vmatpush.xpose.msra.mxu0 %v561
  %704 = vmatmul.f32.gmra.mxu0 1.0
  %v705 = vpop.f32.mrf.mxu0
  %v706 = vadd.f32 %v686, %v705
  %707 = vdwg.mxu0
  %v708 = vrcp.pop %v706
  %v709 = vmul.f32 %v706, %v708
  %v710 = vsub.f32 1.0, %v709
  %v711 = vmul.f32 %v708, %v710
  %v712 = vadd.f32 %v708, %v711
  %vm713 = vweird.f32 %v706
  %vm714 = vweird.f32 %v708
  %vm715 = vmor %vm713, %vm714
  %v716 = vsel %vm715, %v708, %v712
  %v717 = vand.u32 2147483647, %v706
  %vm718 = vcmp.eq.f32.partialorder %v717, 8.507059e+37
  %v719 = vand.u32 %v706, 2147483648
  %v720 = vor.u32 1.1754944e-38, %v719
  %v721 = vsel %vm718, %v720, %v716
  %v722 = vperm.slane %v721, 0
  %v723 = vmul.f32 %v663, %v722
  %v724 = vmul.f32 %v666, %v722
  %725 = vst [vmem:[#allocation2] sm:$0xff] %v723
  %726 = vst [vmem:[#allocation2 + $0x20] sm:$0xff] %v724
  %727 = vxpose.xlu0.b32.start [1/16] %v168, 128
  %728 = vxpose.xlu0.b32.cont [2/16] %v171, 128
  %729 = vxpose.xlu0.b32.cont [3/16] 0.0, 128
  %730 = vxpose.xlu0.b32.cont [4/16] 0.0, 128
  %731 = vxpose.xlu0.b32.cont [5/16] 0.0, 128
  %732 = vxpose.xlu0.b32.cont [6/16] 0.0, 128
  %733 = vxpose.xlu0.b32.cont [7/16] 0.0, 128
  %734 = vxpose.xlu0.b32.cont [8/16] 0.0, 128
  %735 = vxpose.xlu0.b32.cont [9/16] 0.0, 128
  %736 = vxpose.xlu0.b32.cont [10/16] 0.0, 128
  %737 = vxpose.xlu0.b32.cont [11/16] 0.0, 128
  %738 = vxpose.xlu0.b32.cont [12/16] 0.0, 128
  %739 = vxpose.xlu0.b32.cont [13/16] 0.0, 128
  %740 = vxpose.xlu0.b32.cont [14/16] 0.0, 128
  %741 = vxpose.xlu0.b32.cont [15/16] 0.0, 128
  %742 = vxpose.xlu0.b32.end [16/16] 0.0, 128
  %v743 = vpop.trf.xlu0
  %v744 = vpop.trf.xlu0
  %v745 = vpop.trf.xlu0
  %v746 = vpop.trf.xlu0
  %v747 = vpop.trf.xlu0
  %v748 = vpop.trf.xlu0
  %v749 = vpop.trf.xlu0
  %v750 = vpop.trf.xlu0
  %v751 = vpop.trf.xlu0
  %v752 = vpop.trf.xlu0
  %v753 = vpop.trf.xlu0
  %v754 = vpop.trf.xlu0
  %v755 = vpop.trf.xlu0
  %v756 = vpop.trf.xlu0
  %v757 = vpop.trf.xlu0
  %v758 = vpop.trf.xlu0
  %v760 = vsel %vm299, %v743, 0
  %v763 = vsel %vm299, %v744, 0
  %v766 = vsel %vm299, %v745, 0
  %v769 = vsel %vm299, %v746, 0
  %v772 = vsel %vm299, %v747, 0
  %v775 = vsel %vm299, %v748, 0
  %v778 = vsel %vm299, %v749, 0
  %v781 = vsel %vm299, %v750, 0
  %v784 = vsel %vm299, %v751, 0
  %v787 = vsel %vm299, %v752, 0
  %v790 = vsel %vm299, %v753, 0
  %v793 = vsel %vm299, %v754, 0
  %v796 = vsel %vm299, %v755, 0
  %v799 = vsel %vm299, %v756, 0
  %v802 = vsel %vm299, %v757, 0
  %v805 = vsel %vm299, %v758, 0
  %807 = vmatpush.msra.mxu0 0.0
  %808 = vmatpush.msra.mxu0 0.0
  %809 = vmatpush.msra.mxu0 0.0
  %810 = vmatpush.msra.mxu0 0.0
  %811 = vmatpush.msra.mxu0 0.0
  %812 = vmatpush.msra.mxu0 0.0
  %813 = vmatpush.msra.mxu0 0.0
  %814 = vmatpush.msra.mxu0 0.0
  %815 = vmatpush.msra.mxu0 0.0
  %816 = vmatpush.msra.mxu0 0.0
  %817 = vmatpush.msra.mxu0 0.0
  %818 = vmatpush.msra.mxu0 0.0
  %819 = vmatpush.msra.mxu0 0.0
  %820 = vmatpush.msra.mxu0 0.0
  %821 = vmatpush.msra.mxu0 %v142
  %822 = vmatpush.msra.mxu0 %v139
  %823 = vmatmul.f32.gmra.mxu0 %v760
  %v824 = vpop.f32.mrf.mxu0
  %v825 = vadd.f32 0.0, %v824
  %826 = vmatmul.f32.gmra.mxu0 %v763
  %v827 = vpop.f32.mrf.mxu0
  %v828 = vadd.f32 0.0, %v827
  %829 = vmatmul.f32.gmra.mxu0 %v766
  %v830 = vpop.f32.mrf.mxu0
  %v831 = vadd.f32 0.0, %v830
  %832 = vmatmul.f32.gmra.mxu0 %v769
  %v833 = vpop.f32.mrf.mxu0
  %v834 = vadd.f32 0.0, %v833
  %835 = vmatmul.f32.gmra.mxu0 %v772
  %v836 = vpop.f32.mrf.mxu0
  %v837 = vadd.f32 0.0, %v836
  %838 = vmatmul.f32.gmra.mxu0 %v775
  %v839 = vpop.f32.mrf.mxu0
  %v840 = vadd.f32 0.0, %v839
  %841 = vmatmul.f32.gmra.mxu0 %v778
  %v842 = vpop.f32.mrf.mxu0
  %v843 = vadd.f32 0.0, %v842
  %844 = vmatmul.f32.gmra.mxu0 %v781
  %v845 = vpop.f32.mrf.mxu0
  %v846 = vadd.f32 0.0, %v845
  %847 = vmatmul.f32.gmra.mxu0 %v784
  %v848 = vpop.f32.mrf.mxu0
  %v849 = vadd.f32 0.0, %v848
  %850 = vmatmul.f32.gmra.mxu0 %v787
  %v851 = vpop.f32.mrf.mxu0
  %v852 = vadd.f32 0.0, %v851
  %853 = vmatmul.f32.gmra.mxu0 %v790
  %v854 = vpop.f32.mrf.mxu0
  %v855 = vadd.f32 0.0, %v854
  %856 = vmatmul.f32.gmra.mxu0 %v793
  %v857 = vpop.f32.mrf.mxu0
  %v858 = vadd.f32 0.0, %v857
  %859 = vmatmul.f32.gmra.mxu0 %v796
  %v860 = vpop.f32.mrf.mxu0
  %v861 = vadd.f32 0.0, %v860
  %862 = vmatmul.f32.gmra.mxu0 %v799
  %v863 = vpop.f32.mrf.mxu0
  %v864 = vadd.f32 0.0, %v863
  %865 = vmatmul.f32.gmra.mxu0 %v802
  %v866 = vpop.f32.mrf.mxu0
  %v867 = vadd.f32 0.0, %v866
  %868 = vmatmul.f32.gmra.mxu0 %v805
  %v869 = vpop.f32.mrf.mxu0
  %v870 = vadd.f32 0.0, %v869
  %871 = vdwg.mxu0
  %872 = vmatpush.msra.mxu0 0.0
  %873 = vmatpush.msra.mxu0 0.0
  %874 = vmatpush.msra.mxu0 0.0
  %875 = vmatpush.msra.mxu0 0.0
  %876 = vmatpush.msra.mxu0 0.0
  %877 = vmatpush.msra.mxu0 0.0
  %878 = vmatpush.msra.mxu0 0.0
  %879 = vmatpush.msra.mxu0 0.0
  %880 = vmatpush.msra.mxu0 0.0
  %881 = vmatpush.msra.mxu0 0.0
  %882 = vmatpush.msra.mxu0 0.0
  %883 = vmatpush.msra.mxu0 0.0
  %884 = vmatpush.msra.mxu0 0.0
  %885 = vmatpush.msra.mxu0 0.0
  %886 = vmatpush.msra.mxu0 %v183
  %887 = vmatpush.msra.mxu0 %v180
  %888 = vmatmul.f32.gmra.mxu0 %v760
  %v889 = vpop.f32.mrf.mxu0
  %v890 = vadd.f32 0.0, %v889
  %891 = vmatmul.f32.gmra.mxu0 %v763
  %v892 = vpop.f32.mrf.mxu0
  %v893 = vadd.f32 0.0, %v892
  %894 = vmatmul.f32.gmra.mxu0 %v766
  %v895 = vpop.f32.mrf.mxu0
  %v896 = vadd.f32 0.0, %v895
  %897 = vmatmul.f32.gmra.mxu0 %v769
  %v898 = vpop.f32.mrf.mxu0
  %v899 = vadd.f32 0.0, %v898
  %900 = vmatmul.f32.gmra.mxu0 %v772
  %v901 = vpop.f32.mrf.mxu0
  %v902 = vadd.f32 0.0, %v901
  %903 = vmatmul.f32.gmra.mxu0 %v775
  %v904 = vpop.f32.mrf.mxu0
  %v905 = vadd.f32 0.0, %v904
  %906 = vmatmul.f32.gmra.mxu0 %v778
  %v907 = vpop.f32.mrf.mxu0
  %v908 = vadd.f32 0.0, %v907
  %909 = vmatmul.f32.gmra.mxu0 %v781
  %v910 = vpop.f32.mrf.mxu0
  %v911 = vadd.f32 0.0, %v910
  %912 = vmatmul.f32.gmra.mxu0 %v784
  %v913 = vpop.f32.mrf.mxu0
  %v914 = vadd.f32 0.0, %v913
  %915 = vmatmul.f32.gmra.mxu0 %v787
  %v916 = vpop.f32.mrf.mxu0
  %v917 = vadd.f32 0.0, %v916
  %918 = vmatmul.f32.gmra.mxu0 %v790
  %v919 = vpop.f32.mrf.mxu0
  %v920 = vadd.f32 0.0, %v919
  %921 = vmatmul.f32.gmra.mxu0 %v793
  %v922 = vpop.f32.mrf.mxu0
  %v923 = vadd.f32 0.0, %v922
  %924 = vmatmul.f32.gmra.mxu0 %v796
  %v925 = vpop.f32.mrf.mxu0
  %v926 = vadd.f32 0.0, %v925
  %927 = vmatmul.f32.gmra.mxu0 %v799
  %v928 = vpop.f32.mrf.mxu0
  %v929 = vadd.f32 0.0, %v928
  %930 = vmatmul.f32.gmra.mxu0 %v802
  %v931 = vpop.f32.mrf.mxu0
  %v932 = vadd.f32 0.0, %v931
  %933 = vmatmul.f32.gmra.mxu0 %v805
  %v934 = vpop.f32.mrf.mxu0
  %v935 = vadd.f32 0.0, %v934
  %936 = vdwg.mxu0
  %v937 = vmax.f32 %v825, %v890
  %938 = vmax.xlane.f32.xlu0 %v937
  %v939 = vpop.xlane.xlu0 %938
  %v940 = vmax.f32 %v828, %v893
  %941 = vmax.xlane.f32.xlu0 %v940
  %v942 = vpop.xlane.xlu0 %941
  %v943 = vmax.f32 %v831, %v896
  %944 = vmax.xlane.f32.xlu0 %v943
  %v945 = vpop.xlane.xlu0 %944
  %v946 = vmax.f32 %v834, %v899
  %947 = vmax.xlane.f32.xlu0 %v946
  %v948 = vpop.xlane.xlu0 %947
  %v949 = vmax.f32 %v837, %v902
  %950 = vmax.xlane.f32.xlu0 %v949
  %v951 = vpop.xlane.xlu0 %950
  %v952 = vmax.f32 %v840, %v905
  %953 = vmax.xlane.f32.xlu0 %v952
  %v954 = vpop.xlane.xlu0 %953
  %v955 = vmax.f32 %v843, %v908
  %956 = vmax.xlane.f32.xlu0 %v955
  %v957 = vpop.xlane.xlu0 %956
  %v958 = vmax.f32 %v846, %v911
  %959 = vmax.xlane.f32.xlu0 %v958
  %v960 = vpop.xlane.xlu0 %959
  %v961 = vmax.f32 %v849, %v914
  %962 = vmax.xlane.f32.xlu0 %v961
  %v963 = vpop.xlane.xlu0 %962
  %v964 = vmax.f32 %v852, %v917
  %965 = vmax.xlane.f32.xlu0 %v964
  %v966 = vpop.xlane.xlu0 %965
  %v967 = vmax.f32 %v855, %v920
  %968 = vmax.xlane.f32.xlu0 %v967
  %v969 = vpop.xlane.xlu0 %968
  %v970 = vmax.f32 %v858, %v923
  %971 = vmax.xlane.f32.xlu0 %v970
  %v972 = vpop.xlane.xlu0 %971
  %v973 = vmax.f32 %v861, %v926
  %974 = vmax.xlane.f32.xlu0 %v973
  %v975 = vpop.xlane.xlu0 %974
  %v976 = vmax.f32 %v864, %v929
  %977 = vmax.xlane.f32.xlu0 %v976
  %v978 = vpop.xlane.xlu0 %977
  %v979 = vmax.f32 %v867, %v932
  %980 = vmax.xlane.f32.xlu0 %v979
  %v981 = vpop.xlane.xlu0 %980
  %v982 = vmax.f32 %v870, %v935
  %983 = vmax.xlane.f32.xlu0 %v982
  %v984 = vpop.xlane.xlu0 %983
  %v985 = vsub.f32 %v825, %v939
  %v986 = vsub.f32 %v890, %v939
  %v987 = vsub.f32 %v828, %v942
  %v988 = vsub.f32 %v893, %v942
  %v989 = vsub.f32 %v831, %v945
  %v990 = vsub.f32 %v896, %v945
  %v991 = vsub.f32 %v834, %v948
  %v992 = vsub.f32 %v899, %v948
  %v993 = vsub.f32 %v837, %v951
  %v994 = vsub.f32 %v902, %v951
  %v995 = vsub.f32 %v840, %v954
  %v996 = vsub.f32 %v905, %v954
  %v997 = vsub.f32 %v843, %v957
  %v998 = vsub.f32 %v908, %v957
  %v999 = vsub.f32 %v846, %v960
  %v1000 = vsub.f32 %v911, %v960
  %v1001 = vsub.f32 %v849, %v963
  %v1002 = vsub.f32 %v914, %v963
  %v1003 = vsub.f32 %v852, %v966
  %v1004 = vsub.f32 %v917, %v966
  %v1005 = vsub.f32 %v855, %v969
  %v1006 = vsub.f32 %v920, %v969
  %v1007 = vsub.f32 %v858, %v972
  %v1008 = vsub.f32 %v923, %v972
  %v1009 = vsub.f32 %v861, %v975
  %v1010 = vsub.f32 %v926, %v975
  %v1011 = vsub.f32 %v864, %v978
  %v1012 = vsub.f32 %v929, %v978
  %v1013 = vsub.f32 %v867, %v981
  %v1014 = vsub.f32 %v932, %v981
  %v1015 = vsub.f32 %v870, %v984
  %v1016 = vsub.f32 %v935, %v984
  %v1017 = vmul.f32 %v985, 1.442695
  %v1018 = vpow.pop %v1017
  %v1019 = vmul.f32 %v986, 1.442695
  %v1020 = vpow.pop %v1019
  %v1021 = vmul.f32 %v987, 1.442695
  %v1022 = vpow.pop %v1021
  %v1023 = vmul.f32 %v988, 1.442695
  %v1024 = vpow.pop %v1023
  %v1025 = vmul.f32 %v989, 1.442695
  %v1026 = vpow.pop %v1025
  %v1027 = vmul.f32 %v990, 1.442695
  %v1028 = vpow.pop %v1027
  %v1029 = vmul.f32 %v991, 1.442695
  %v1030 = vpow.pop %v1029
  %v1031 = vmul.f32 %v992, 1.442695
  %v1032 = vpow.pop %v1031
  %v1033 = vmul.f32 %v993, 1.442695
  %v1034 = vpow.pop %v1033
  %v1035 = vmul.f32 %v994, 1.442695
  %v1036 = vpow.pop %v1035
  %v1037 = vmul.f32 %v995, 1.442695
  %v1038 = vpow.pop %v1037
  %v1039 = vmul.f32 %v996, 1.442695
  %v1040 = vpow.pop %v1039
  %v1041 = vmul.f32 %v997, 1.442695
  %v1042 = vpow.pop %v1041
  %v1043 = vmul.f32 %v998, 1.442695
  %v1044 = vpow.pop %v1043
  %v1045 = vmul.f32 %v999, 1.442695
  %v1046 = vpow.pop %v1045
  %v1047 = vmul.f32 %v1000, 1.442695
  %v1048 = vpow.pop %v1047
  %v1049 = vmul.f32 %v1001, 1.442695
  %v1050 = vpow.pop %v1049
  %v1051 = vmul.f32 %v1002, 1.442695
  %v1052 = vpow.pop %v1051
  %v1053 = vmul.f32 %v1003, 1.442695
  %v1054 = vpow.pop %v1053
  %v1055 = vmul.f32 %v1004, 1.442695
  %v1056 = vpow.pop %v1055
  %v1057 = vmul.f32 %v1005, 1.442695
  %v1058 = vpow.pop %v1057
  %v1059 = vmul.f32 %v1006, 1.442695
  %v1060 = vpow.pop %v1059
  %v1061 = vmul.f32 %v1007, 1.442695
  %v1062 = vpow.pop %v1061
  %v1063 = vmul.f32 %v1008, 1.442695
  %v1064 = vpow.pop %v1063
  %v1065 = vmul.f32 %v1009, 1.442695
  %v1066 = vpow.pop %v1065
  %v1067 = vmul.f32 %v1010, 1.442695
  %v1068 = vpow.pop %v1067
  %v1069 = vmul.f32 %v1011, 1.442695
  %v1070 = vpow.pop %v1069
  %v1071 = vmul.f32 %v1012, 1.442695
  %v1072 = vpow.pop %v1071
  %v1073 = vmul.f32 %v1013, 1.442695
  %v1074 = vpow.pop %v1073
  %v1075 = vmul.f32 %v1014, 1.442695
  %v1076 = vpow.pop %v1075
  %v1077 = vmul.f32 %v1015, 1.442695
  %v1078 = vpow.pop %v1077
  %v1079 = vmul.f32 %v1016, 1.442695
  %v1080 = vpow.pop %v1079
  %1081 = vmatpush.xpose.msra.mxu0 %v1078
  %1082 = vmatpush.xpose.msra.mxu0 %v1074
  %1083 = vmatpush.xpose.msra.mxu0 %v1070
  %1084 = vmatpush.xpose.msra.mxu0 %v1066
  %1085 = vmatpush.xpose.msra.mxu0 %v1062
  %1086 = vmatpush.xpose.msra.mxu0 %v1058
  %1087 = vmatpush.xpose.msra.mxu0 %v1054
  %1088 = vmatpush.xpose.msra.mxu0 %v1050
  %1089 = vmatpush.xpose.msra.mxu0 %v1046
  %1090 = vmatpush.xpose.msra.mxu0 %v1042
  %1091 = vmatpush.xpose.msra.mxu0 %v1038
  %1092 = vmatpush.xpose.msra.mxu0 %v1034
  %1093 = vmatpush.xpose.msra.mxu0 %v1030
  %1094 = vmatpush.xpose.msra.mxu0 %v1026
  %1095 = vmatpush.xpose.msra.mxu0 %v1022
  %1096 = vmatpush.xpose.msra.mxu0 %v1018
  %1097 = vmatmul.f32.gmra.mxu0 %v227
  %v1098 = vpop.f32.mrf.mxu0
  %v1099 = vadd.f32 0.0, %v1098
  %1100 = vmatmul.f32.gmra.mxu0 %v230
  %v1101 = vpop.f32.mrf.mxu0
  %v1102 = vadd.f32 0.0, %v1101
  %1103 = vdwg.mxu0
  %1104 = vmatpush.xpose.msra.mxu0 %v1080
  %1105 = vmatpush.xpose.msra.mxu0 %v1076
  %1106 = vmatpush.xpose.msra.mxu0 %v1072
  %1107 = vmatpush.xpose.msra.mxu0 %v1068
  %1108 = vmatpush.xpose.msra.mxu0 %v1064
  %1109 = vmatpush.xpose.msra.mxu0 %v1060
  %1110 = vmatpush.xpose.msra.mxu0 %v1056
  %1111 = vmatpush.xpose.msra.mxu0 %v1052
  %1112 = vmatpush.xpose.msra.mxu0 %v1048
  %1113 = vmatpush.xpose.msra.mxu0 %v1044
  %1114 = vmatpush.xpose.msra.mxu0 %v1040
  %1115 = vmatpush.xpose.msra.mxu0 %v1036
  %1116 = vmatpush.xpose.msra.mxu0 %v1032
  %1117 = vmatpush.xpose.msra.mxu0 %v1028
  %1118 = vmatpush.xpose.msra.mxu0 %v1024
  %1119 = vmatpush.xpose.msra.mxu0 %v1020
  %1120 = vmatmul.f32.gmra.mxu0 %v256
  %v1121 = vpop.f32.mrf.mxu0
  %v1122 = vadd.f32 %v1099, %v1121
  %1123 = vmatmul.f32.gmra.mxu0 %v259
  %v1124 = vpop.f32.mrf.mxu0
  %v1125 = vadd.f32 %v1102, %v1124
  %1126 = vdwg.mxu0
  %1127 = vmatpush.xpose.msra.mxu0 %v1078
  %1128 = vmatpush.xpose.msra.mxu0 %v1074
  %1129 = vmatpush.xpose.msra.mxu0 %v1070
  %1130 = vmatpush.xpose.msra.mxu0 %v1066
  %1131 = vmatpush.xpose.msra.mxu0 %v1062
  %1132 = vmatpush.xpose.msra.mxu0 %v1058
  %1133 = vmatpush.xpose.msra.mxu0 %v1054
  %1134 = vmatpush.xpose.msra.mxu0 %v1050
  %1135 = vmatpush.xpose.msra.mxu0 %v1046
  %1136 = vmatpush.xpose.msra.mxu0 %v1042
  %1137 = vmatpush.xpose.msra.mxu0 %v1038
  %1138 = vmatpush.xpose.msra.mxu0 %v1034
  %1139 = vmatpush.xpose.msra.mxu0 %v1030
  %1140 = vmatpush.xpose.msra.mxu0 %v1026
  %1141 = vmatpush.xpose.msra.mxu0 %v1022
  %1142 = vmatpush.xpose.msra.mxu0 %v1018
  %1143 = vmatmul.f32.gmra.mxu0 1.0
  %v1144 = vpop.f32.mrf.mxu0
  %v1145 = vadd.f32 0.0, %v1144
  %1146 = vdwg.mxu0
  %1147 = vmatpush.xpose.msra.mxu0 %v1080
  %1148 = vmatpush.xpose.msra.mxu0 %v1076
  %1149 = vmatpush.xpose.msra.mxu0 %v1072
  %1150 = vmatpush.xpose.msra.mxu0 %v1068
  %1151 = vmatpush.xpose.msra.mxu0 %v1064
  %1152 = vmatpush.xpose.msra.mxu0 %v1060
  %1153 = vmatpush.xpose.msra.mxu0 %v1056
  %1154 = vmatpush.xpose.msra.mxu0 %v1052
  %1155 = vmatpush.xpose.msra.mxu0 %v1048
  %1156 = vmatpush.xpose.msra.mxu0 %v1044
  %1157 = vmatpush.xpose.msra.mxu0 %v1040
  %1158 = vmatpush.xpose.msra.mxu0 %v1036
  %1159 = vmatpush.xpose.msra.mxu0 %v1032
  %1160 = vmatpush.xpose.msra.mxu0 %v1028
  %1161 = vmatpush.xpose.msra.mxu0 %v1024
  %1162 = vmatpush.xpose.msra.mxu0 %v1020
  %1163 = vmatmul.f32.gmra.mxu0 1.0
  %v1164 = vpop.f32.mrf.mxu0
  %v1165 = vadd.f32 %v1145, %v1164
  %1166 = vdwg.mxu0
  %v1167 = vrcp.pop %v1165
  %v1168 = vmul.f32 %v1165, %v1167
  %v1169 = vsub.f32 1.0, %v1168
  %v1170 = vmul.f32 %v1167, %v1169
  %v1171 = vadd.f32 %v1167, %v1170
  %vm1172 = vweird.f32 %v1165
  %vm1173 = vweird.f32 %v1167
  %vm1174 = vmor %vm1172, %vm1173
  %v1175 = vsel %vm1174, %v1167, %v1171
  %v1176 = vand.u32 2147483647, %v1165
  %vm1177 = vcmp.eq.f32.partialorder %v1176, 8.507059e+37
  %v1178 = vand.u32 %v1165, 2147483648
  %v1179 = vor.u32 1.1754944e-38, %v1178
  %v1180 = vsel %vm1177, %v1179, %v1175
  %v1181 = vperm.slane %v1180, 0
  %v1182 = vmul.f32 %v1122, %v1181
  %v1183 = vmul.f32 %v1125, %v1181
  %1184 = vst [vmem:[#allocation2 + $0x8] sm:$0xff] %v1182
  %1185 = vst [vmem:[#allocation2 + $0x28] sm:$0xff] %v1183
  %1186 = vxpose.xlu0.b32.start [1/16] %v133, 128
  %1187 = vxpose.xlu0.b32.cont [2/16] %v136, 128
  %1188 = vxpose.xlu0.b32.cont [3/16] 0.0, 128
  %1189 = vxpose.xlu0.b32.cont [4/16] 0.0, 128
  %1190 = vxpose.xlu0.b32.cont [5/16] 0.0, 128
  %1191 = vxpose.xlu0.b32.cont [6/16] 0.0, 128
  %1192 = vxpose.xlu0.b32.cont [7/16] 0.0, 128
  %1193 = vxpose.xlu0.b32.cont [8/16] 0.0, 128
  %1194 = vxpose.xlu0.b32.cont [9/16] 0.0, 128
  %1195 = vxpose.xlu0.b32.cont [10/16] 0.0, 128
  %1196 = vxpose.xlu0.b32.cont [11/16] 0.0, 128
  %1197 = vxpose.xlu0.b32.cont [12/16] 0.0, 128
  %1198 = vxpose.xlu0.b32.cont [13/16] 0.0, 128
  %1199 = vxpose.xlu0.b32.cont [14/16] 0.0, 128
  %1200 = vxpose.xlu0.b32.cont [15/16] 0.0, 128
  %1201 = vxpose.xlu0.b32.end [16/16] 0.0, 128
  %v1202 = vpop.trf.xlu0
  %v1203 = vpop.trf.xlu0
  %v1204 = vpop.trf.xlu0
  %v1205 = vpop.trf.xlu0
  %v1206 = vpop.trf.xlu0
  %v1207 = vpop.trf.xlu0
  %v1208 = vpop.trf.xlu0
  %v1209 = vpop.trf.xlu0
  %v1210 = vpop.trf.xlu0
  %v1211 = vpop.trf.xlu0
  %v1212 = vpop.trf.xlu0
  %v1213 = vpop.trf.xlu0
  %v1214 = vpop.trf.xlu0
  %v1215 = vpop.trf.xlu0
  %v1216 = vpop.trf.xlu0
  %v1217 = vpop.trf.xlu0
  %v1219 = vsel %vm299, %v1202, 0
  %v1222 = vsel %vm299, %v1203, 0
  %v1225 = vsel %vm299, %v1204, 0
  %v1228 = vsel %vm299, %v1205, 0
  %v1231 = vsel %vm299, %v1206, 0
  %v1234 = vsel %vm299, %v1207, 0
  %v1237 = vsel %vm299, %v1208, 0
  %v1240 = vsel %vm299, %v1209, 0
  %v1243 = vsel %vm299, %v1210, 0
  %v1246 = vsel %vm299, %v1211, 0
  %v1249 = vsel %vm299, %v1212, 0
  %v1252 = vsel %vm299, %v1213, 0
  %v1255 = vsel %vm299, %v1214, 0
  %v1258 = vsel %vm299, %v1215, 0
  %v1261 = vsel %vm299, %v1216, 0
  %v1264 = vsel %vm299, %v1217, 0
  %1266 = vmatpush.msra.mxu0 0.0
  %1267 = vmatpush.msra.mxu0 0.0
  %1268 = vmatpush.msra.mxu0 0.0
  %1269 = vmatpush.msra.mxu0 0.0
  %1270 = vmatpush.msra.mxu0 0.0
  %1271 = vmatpush.msra.mxu0 0.0
  %1272 = vmatpush.msra.mxu0 0.0
  %1273 = vmatpush.msra.mxu0 0.0
  %1274 = vmatpush.msra.mxu0 0.0
  %1275 = vmatpush.msra.mxu0 0.0
  %1276 = vmatpush.msra.mxu0 0.0
  %1277 = vmatpush.msra.mxu0 0.0
  %1278 = vmatpush.msra.mxu0 0.0
  %1279 = vmatpush.msra.mxu0 0.0
  %1280 = vmatpush.msra.mxu0 %v148
  %1281 = vmatpush.msra.mxu0 %v145
  %1282 = vmatmul.f32.gmra.mxu0 %v1219
  %v1283 = vpop.f32.mrf.mxu0
  %v1284 = vadd.f32 0.0, %v1283
  %1285 = vmatmul.f32.gmra.mxu0 %v1222
  %v1286 = vpop.f32.mrf.mxu0
  %v1287 = vadd.f32 0.0, %v1286
  %1288 = vmatmul.f32.gmra.mxu0 %v1225
  %v1289 = vpop.f32.mrf.mxu0
  %v1290 = vadd.f32 0.0, %v1289
  %1291 = vmatmul.f32.gmra.mxu0 %v1228
  %v1292 = vpop.f32.mrf.mxu0
  %v1293 = vadd.f32 0.0, %v1292
  %1294 = vmatmul.f32.gmra.mxu0 %v1231
  %v1295 = vpop.f32.mrf.mxu0
  %v1296 = vadd.f32 0.0, %v1295
  %1297 = vmatmul.f32.gmra.mxu0 %v1234
  %v1298 = vpop.f32.mrf.mxu0
  %v1299 = vadd.f32 0.0, %v1298
  %1300 = vmatmul.f32.gmra.mxu0 %v1237
  %v1301 = vpop.f32.mrf.mxu0
  %v1302 = vadd.f32 0.0, %v1301
  %1303 = vmatmul.f32.gmra.mxu0 %v1240
  %v1304 = vpop.f32.mrf.mxu0
  %v1305 = vadd.f32 0.0, %v1304
  %1306 = vmatmul.f32.gmra.mxu0 %v1243
  %v1307 = vpop.f32.mrf.mxu0
  %v1308 = vadd.f32 0.0, %v1307
  %1309 = vmatmul.f32.gmra.mxu0 %v1246
  %v1310 = vpop.f32.mrf.mxu0
  %v1311 = vadd.f32 0.0, %v1310
  %1312 = vmatmul.f32.gmra.mxu0 %v1249
  %v1313 = vpop.f32.mrf.mxu0
  %v1314 = vadd.f32 0.0, %v1313
  %1315 = vmatmul.f32.gmra.mxu0 %v1252
  %v1316 = vpop.f32.mrf.mxu0
  %v1317 = vadd.f32 0.0, %v1316
  %1318 = vmatmul.f32.gmra.mxu0 %v1255
  %v1319 = vpop.f32.mrf.mxu0
  %v1320 = vadd.f32 0.0, %v1319
  %1321 = vmatmul.f32.gmra.mxu0 %v1258
  %v1322 = vpop.f32.mrf.mxu0
  %v1323 = vadd.f32 0.0, %v1322
  %1324 = vmatmul.f32.gmra.mxu0 %v1261
  %v1325 = vpop.f32.mrf.mxu0
  %v1326 = vadd.f32 0.0, %v1325
  %1327 = vmatmul.f32.gmra.mxu0 %v1264
  %v1328 = vpop.f32.mrf.mxu0
  %v1329 = vadd.f32 0.0, %v1328
  %1330 = vdwg.mxu0
  %1331 = vmatpush.msra.mxu0 0.0
  %1332 = vmatpush.msra.mxu0 0.0
  %1333 = vmatpush.msra.mxu0 0.0
  %1334 = vmatpush.msra.mxu0 0.0
  %1335 = vmatpush.msra.mxu0 0.0
  %1336 = vmatpush.msra.mxu0 0.0
  %1337 = vmatpush.msra.mxu0 0.0
  %1338 = vmatpush.msra.mxu0 0.0
  %1339 = vmatpush.msra.mxu0 0.0
  %1340 = vmatpush.msra.mxu0 0.0
  %1341 = vmatpush.msra.mxu0 0.0
  %1342 = vmatpush.msra.mxu0 0.0
  %1343 = vmatpush.msra.mxu0 0.0
  %1344 = vmatpush.msra.mxu0 0.0
  %1345 = vmatpush.msra.mxu0 %v189
  %1346 = vmatpush.msra.mxu0 %v186
  %1347 = vmatmul.f32.gmra.mxu0 %v1219
  %v1348 = vpop.f32.mrf.mxu0
  %v1349 = vadd.f32 0.0, %v1348
  %1350 = vmatmul.f32.gmra.mxu0 %v1222
  %v1351 = vpop.f32.mrf.mxu0
  %v1352 = vadd.f32 0.0, %v1351
  %1353 = vmatmul.f32.gmra.mxu0 %v1225
  %v1354 = vpop.f32.mrf.mxu0
  %v1355 = vadd.f32 0.0, %v1354
  %1356 = vmatmul.f32.gmra.mxu0 %v1228
  %v1357 = vpop.f32.mrf.mxu0
  %v1358 = vadd.f32 0.0, %v1357
  %1359 = vmatmul.f32.gmra.mxu0 %v1231
  %v1360 = vpop.f32.mrf.mxu0
  %v1361 = vadd.f32 0.0, %v1360
  %1362 = vmatmul.f32.gmra.mxu0 %v1234
  %v1363 = vpop.f32.mrf.mxu0
  %v1364 = vadd.f32 0.0, %v1363
  %1365 = vmatmul.f32.gmra.mxu0 %v1237
  %v1366 = vpop.f32.mrf.mxu0
  %v1367 = vadd.f32 0.0, %v1366
  %1368 = vmatmul.f32.gmra.mxu0 %v1240
  %v1369 = vpop.f32.mrf.mxu0
  %v1370 = vadd.f32 0.0, %v1369
  %1371 = vmatmul.f32.gmra.mxu0 %v1243
  %v1372 = vpop.f32.mrf.mxu0
  %v1373 = vadd.f32 0.0, %v1372
  %1374 = vmatmul.f32.gmra.mxu0 %v1246
  %v1375 = vpop.f32.mrf.mxu0
  %v1376 = vadd.f32 0.0, %v1375
  %1377 = vmatmul.f32.gmra.mxu0 %v1249
  %v1378 = vpop.f32.mrf.mxu0
  %v1379 = vadd.f32 0.0, %v1378
  %1380 = vmatmul.f32.gmra.mxu0 %v1252
  %v1381 = vpop.f32.mrf.mxu0
  %v1382 = vadd.f32 0.0, %v1381
  %1383 = vmatmul.f32.gmra.mxu0 %v1255
  %v1384 = vpop.f32.mrf.mxu0
  %v1385 = vadd.f32 0.0, %v1384
  %1386 = vmatmul.f32.gmra.mxu0 %v1258
  %v1387 = vpop.f32.mrf.mxu0
  %v1388 = vadd.f32 0.0, %v1387
  %1389 = vmatmul.f32.gmra.mxu0 %v1261
  %v1390 = vpop.f32.mrf.mxu0
  %v1391 = vadd.f32 0.0, %v1390
  %1392 = vmatmul.f32.gmra.mxu0 %v1264
  %v1393 = vpop.f32.mrf.mxu0
  %v1394 = vadd.f32 0.0, %v1393
  %1395 = vdwg.mxu0
  %v1396 = vmax.f32 %v1284, %v1349
  %1397 = vmax.xlane.f32.xlu0 %v1396
  %v1398 = vpop.xlane.xlu0 %1397
  %v1399 = vmax.f32 %v1287, %v1352
  %1400 = vmax.xlane.f32.xlu0 %v1399
  %v1401 = vpop.xlane.xlu0 %1400
  %v1402 = vmax.f32 %v1290, %v1355
  %1403 = vmax.xlane.f32.xlu0 %v1402
  %v1404 = vpop.xlane.xlu0 %1403
  %v1405 = vmax.f32 %v1293, %v1358
  %1406 = vmax.xlane.f32.xlu0 %v1405
  %v1407 = vpop.xlane.xlu0 %1406
  %v1408 = vmax.f32 %v1296, %v1361
  %1409 = vmax.xlane.f32.xlu0 %v1408
  %v1410 = vpop.xlane.xlu0 %1409
  %v1411 = vmax.f32 %v1299, %v1364
  %1412 = vmax.xlane.f32.xlu0 %v1411
  %v1413 = vpop.xlane.xlu0 %1412
  %v1414 = vmax.f32 %v1302, %v1367
  %1415 = vmax.xlane.f32.xlu0 %v1414
  %v1416 = vpop.xlane.xlu0 %1415
  %v1417 = vmax.f32 %v1305, %v1370
  %1418 = vmax.xlane.f32.xlu0 %v1417
  %v1419 = vpop.xlane.xlu0 %1418
  %v1420 = vmax.f32 %v1308, %v1373
  %1421 = vmax.xlane.f32.xlu0 %v1420
  %v1422 = vpop.xlane.xlu0 %1421
  %v1423 = vmax.f32 %v1311, %v1376
  %1424 = vmax.xlane.f32.xlu0 %v1423
  %v1425 = vpop.xlane.xlu0 %1424
  %v1426 = vmax.f32 %v1314, %v1379
  %1427 = vmax.xlane.f32.xlu0 %v1426
  %v1428 = vpop.xlane.xlu0 %1427
  %v1429 = vmax.f32 %v1317, %v1382
  %1430 = vmax.xlane.f32.xlu0 %v1429
  %v1431 = vpop.xlane.xlu0 %1430
  %v1432 = vmax.f32 %v1320, %v1385
  %1433 = vmax.xlane.f32.xlu0 %v1432
  %v1434 = vpop.xlane.xlu0 %1433
  %v1435 = vmax.f32 %v1323, %v1388
  %1436 = vmax.xlane.f32.xlu0 %v1435
  %v1437 = vpop.xlane.xlu0 %1436
  %v1438 = vmax.f32 %v1326, %v1391
  %1439 = vmax.xlane.f32.xlu0 %v1438
  %v1440 = vpop.xlane.xlu0 %1439
  %v1441 = vmax.f32 %v1329, %v1394
  %1442 = vmax.xlane.f32.xlu0 %v1441
  %v1443 = vpop.xlane.xlu0 %1442
  %v1444 = vsub.f32 %v1284, %v1398
  %v1445 = vsub.f32 %v1349, %v1398
  %v1446 = vsub.f32 %v1287, %v1401
  %v1447 = vsub.f32 %v1352, %v1401
  %v1448 = vsub.f32 %v1290, %v1404
  %v1449 = vsub.f32 %v1355, %v1404
  %v1450 = vsub.f32 %v1293, %v1407
  %v1451 = vsub.f32 %v1358, %v1407
  %v1452 = vsub.f32 %v1296, %v1410
  %v1453 = vsub.f32 %v1361, %v1410
  %v1454 = vsub.f32 %v1299, %v1413
  %v1455 = vsub.f32 %v1364, %v1413
  %v1456 = vsub.f32 %v1302, %v1416
  %v1457 = vsub.f32 %v1367, %v1416
  %v1458 = vsub.f32 %v1305, %v1419
  %v1459 = vsub.f32 %v1370, %v1419
  %v1460 = vsub.f32 %v1308, %v1422
  %v1461 = vsub.f32 %v1373, %v1422
  %v1462 = vsub.f32 %v1311, %v1425
  %v1463 = vsub.f32 %v1376, %v1425
  %v1464 = vsub.f32 %v1314, %v1428
  %v1465 = vsub.f32 %v1379, %v1428
  %v1466 = vsub.f32 %v1317, %v1431
  %v1467 = vsub.f32 %v1382, %v1431
  %v1468 = vsub.f32 %v1320, %v1434
  %v1469 = vsub.f32 %v1385, %v1434
  %v1470 = vsub.f32 %v1323, %v1437
  %v1471 = vsub.f32 %v1388, %v1437
  %v1472 = vsub.f32 %v1326, %v1440
  %v1473 = vsub.f32 %v1391, %v1440
  %v1474 = vsub.f32 %v1329, %v1443
  %v1475 = vsub.f32 %v1394, %v1443
  %v1476 = vmul.f32 %v1444, 1.442695
  %v1477 = vpow.pop %v1476
  %v1478 = vmul.f32 %v1445, 1.442695
  %v1479 = vpow.pop %v1478
  %v1480 = vmul.f32 %v1446, 1.442695
  %v1481 = vpow.pop %v1480
  %v1482 = vmul.f32 %v1447, 1.442695
  %v1483 = vpow.pop %v1482
  %v1484 = vmul.f32 %v1448, 1.442695
  %v1485 = vpow.pop %v1484
  %v1486 = vmul.f32 %v1449, 1.442695
  %v1487 = vpow.pop %v1486
  %v1488 = vmul.f32 %v1450, 1.442695
  %v1489 = vpow.pop %v1488
  %v1490 = vmul.f32 %v1451, 1.442695
  %v1491 = vpow.pop %v1490
  %v1492 = vmul.f32 %v1452, 1.442695
  %v1493 = vpow.pop %v1492
  %v1494 = vmul.f32 %v1453, 1.442695
  %v1495 = vpow.pop %v1494
  %v1496 = vmul.f32 %v1454, 1.442695
  %v1497 = vpow.pop %v1496
  %v1498 = vmul.f32 %v1455, 1.442695
  %v1499 = vpow.pop %v1498
  %v1500 = vmul.f32 %v1456, 1.442695
  %v1501 = vpow.pop %v1500
  %v1502 = vmul.f32 %v1457, 1.442695
  %v1503 = vpow.pop %v1502
  %v1504 = vmul.f32 %v1458, 1.442695
  %v1505 = vpow.pop %v1504
  %v1506 = vmul.f32 %v1459, 1.442695
  %v1507 = vpow.pop %v1506
  %v1508 = vmul.f32 %v1460, 1.442695
  %v1509 = vpow.pop %v1508
  %v1510 = vmul.f32 %v1461, 1.442695
  %v1511 = vpow.pop %v1510
  %v1512 = vmul.f32 %v1462, 1.442695
  %v1513 = vpow.pop %v1512
  %v1514 = vmul.f32 %v1463, 1.442695
  %v1515 = vpow.pop %v1514
  %v1516 = vmul.f32 %v1464, 1.442695
  %v1517 = vpow.pop %v1516
  %v1518 = vmul.f32 %v1465, 1.442695
  %v1519 = vpow.pop %v1518
  %v1520 = vmul.f32 %v1466, 1.442695
  %v1521 = vpow.pop %v1520
  %v1522 = vmul.f32 %v1467, 1.442695
  %v1523 = vpow.pop %v1522
  %v1524 = vmul.f32 %v1468, 1.442695
  %v1525 = vpow.pop %v1524
  %v1526 = vmul.f32 %v1469, 1.442695
  %v1527 = vpow.pop %v1526
  %v1528 = vmul.f32 %v1470, 1.442695
  %v1529 = vpow.pop %v1528
  %v1530 = vmul.f32 %v1471, 1.442695
  %v1531 = vpow.pop %v1530
  %v1532 = vmul.f32 %v1472, 1.442695
  %v1533 = vpow.pop %v1532
  %v1534 = vmul.f32 %v1473, 1.442695
  %v1535 = vpow.pop %v1534
  %v1536 = vmul.f32 %v1474, 1.442695
  %v1537 = vpow.pop %v1536
  %v1538 = vmul.f32 %v1475, 1.442695
  %v1539 = vpow.pop %v1538
  %1540 = vmatpush.xpose.msra.mxu0 %v1537
  %1541 = vmatpush.xpose.msra.mxu0 %v1533
  %1542 = vmatpush.xpose.msra.mxu0 %v1529
  %1543 = vmatpush.xpose.msra.mxu0 %v1525
  %1544 = vmatpush.xpose.msra.mxu0 %v1521
  %1545 = vmatpush.xpose.msra.mxu0 %v1517
  %1546 = vmatpush.xpose.msra.mxu0 %v1513
  %1547 = vmatpush.xpose.msra.mxu0 %v1509
  %1548 = vmatpush.xpose.msra.mxu0 %v1505
  %1549 = vmatpush.xpose.msra.mxu0 %v1501
  %1550 = vmatpush.xpose.msra.mxu0 %v1497
  %1551 = vmatpush.xpose.msra.mxu0 %v1493
  %1552 = vmatpush.xpose.msra.mxu0 %v1489
  %1553 = vmatpush.xpose.msra.mxu0 %v1485
  %1554 = vmatpush.xpose.msra.mxu0 %v1481
  %1555 = vmatpush.xpose.msra.mxu0 %v1477
  %1556 = vmatmul.f32.gmra.mxu0 %v233
  %v1557 = vpop.f32.mrf.mxu0
  %v1558 = vadd.f32 0.0, %v1557
  %1559 = vmatmul.f32.gmra.mxu0 %v236
  %v1560 = vpop.f32.mrf.mxu0
  %v1561 = vadd.f32 0.0, %v1560
  %1562 = vdwg.mxu0
  %1563 = vmatpush.xpose.msra.mxu0 %v1539
  %1564 = vmatpush.xpose.msra.mxu0 %v1535
  %1565 = vmatpush.xpose.msra.mxu0 %v1531
  %1566 = vmatpush.xpose.msra.mxu0 %v1527
  %1567 = vmatpush.xpose.msra.mxu0 %v1523
  %1568 = vmatpush.xpose.msra.mxu0 %v1519
  %1569 = vmatpush.xpose.msra.mxu0 %v1515
  %1570 = vmatpush.xpose.msra.mxu0 %v1511
  %1571 = vmatpush.xpose.msra.mxu0 %v1507
  %1572 = vmatpush.xpose.msra.mxu0 %v1503
  %1573 = vmatpush.xpose.msra.mxu0 %v1499
  %1574 = vmatpush.xpose.msra.mxu0 %v1495
  %1575 = vmatpush.xpose.msra.mxu0 %v1491
  %1576 = vmatpush.xpose.msra.mxu0 %v1487
  %1577 = vmatpush.xpose.msra.mxu0 %v1483
  %1578 = vmatpush.xpose.msra.mxu0 %v1479
  %1579 = vmatmul.f32.gmra.mxu0 %v262
  %v1580 = vpop.f32.mrf.mxu0
  %v1581 = vadd.f32 %v1558, %v1580
  %1582 = vmatmul.f32.gmra.mxu0 %v265
  %v1583 = vpop.f32.mrf.mxu0
  %v1584 = vadd.f32 %v1561, %v1583
  %1585 = vdwg.mxu0
  %1586 = vmatpush.xpose.msra.mxu0 %v1537
  %1587 = vmatpush.xpose.msra.mxu0 %v1533
  %1588 = vmatpush.xpose.msra.mxu0 %v1529
  %1589 = vmatpush.xpose.msra.mxu0 %v1525
  %1590 = vmatpush.xpose.msra.mxu0 %v1521
  %1591 = vmatpush.xpose.msra.mxu0 %v1517
  %1592 = vmatpush.xpose.msra.mxu0 %v1513
  %1593 = vmatpush.xpose.msra.mxu0 %v1509
  %1594 = vmatpush.xpose.msra.mxu0 %v1505
  %1595 = vmatpush.xpose.msra.mxu0 %v1501
  %1596 = vmatpush.xpose.msra.mxu0 %v1497
  %1597 = vmatpush.xpose.msra.mxu0 %v1493
  %1598 = vmatpush.xpose.msra.mxu0 %v1489
  %1599 = vmatpush.xpose.msra.mxu0 %v1485
  %1600 = vmatpush.xpose.msra.mxu0 %v1481
  %1601 = vmatpush.xpose.msra.mxu0 %v1477
  %1602 = vmatmul.f32.gmra.mxu0 1.0
  %v1603 = vpop.f32.mrf.mxu0
  %v1604 = vadd.f32 0.0, %v1603
  %1605 = vdwg.mxu0
  %1606 = vmatpush.xpose.msra.mxu0 %v1539
  %1607 = vmatpush.xpose.msra.mxu0 %v1535
  %1608 = vmatpush.xpose.msra.mxu0 %v1531
  %1609 = vmatpush.xpose.msra.mxu0 %v1527
  %1610 = vmatpush.xpose.msra.mxu0 %v1523
  %1611 = vmatpush.xpose.msra.mxu0 %v1519
  %1612 = vmatpush.xpose.msra.mxu0 %v1515
  %1613 = vmatpush.xpose.msra.mxu0 %v1511
  %1614 = vmatpush.xpose.msra.mxu0 %v1507
  %1615 = vmatpush.xpose.msra.mxu0 %v1503
  %1616 = vmatpush.xpose.msra.mxu0 %v1499
  %1617 = vmatpush.xpose.msra.mxu0 %v1495
  %1618 = vmatpush.xpose.msra.mxu0 %v1491
  %1619 = vmatpush.xpose.msra.mxu0 %v1487
  %1620 = vmatpush.xpose.msra.mxu0 %v1483
  %1621 = vmatpush.xpose.msra.mxu0 %v1479
  %1622 = vmatmul.f32.gmra.mxu0 1.0
  %v1623 = vpop.f32.mrf.mxu0
  %v1624 = vadd.f32 %v1604, %v1623
  %1625 = vdwg.mxu0
  %v1626 = vrcp.pop %v1624
  %v1627 = vmul.f32 %v1624, %v1626
  %v1628 = vsub.f32 1.0, %v1627
  %v1629 = vmul.f32 %v1626, %v1628
  %v1630 = vadd.f32 %v1626, %v1629
  %vm1631 = vweird.f32 %v1624
  %vm1632 = vweird.f32 %v1626
  %vm1633 = vmor %vm1631, %vm1632
  %v1634 = vsel %vm1633, %v1626, %v1630
  %v1635 = vand.u32 2147483647, %v1624
  %vm1636 = vcmp.eq.f32.partialorder %v1635, 8.507059e+37
  %v1637 = vand.u32 %v1624, 2147483648
  %v1638 = vor.u32 1.1754944e-38, %v1637
  %v1639 = vsel %vm1636, %v1638, %v1634
  %v1640 = vperm.slane %v1639, 0
  %v1641 = vmul.f32 %v1581, %v1640
  %v1642 = vmul.f32 %v1584, %v1640
  %1643 = vst [vmem:[#allocation2 + $0x40] sm:$0xff] %v1641
  %1644 = vst [vmem:[#allocation2 + $0x60] sm:$0xff] %v1642
  %1645 = vxpose.xlu0.b32.start [1/16] %v174, 128
  %1646 = vxpose.xlu0.b32.cont [2/16] %v177, 128
  %1647 = vxpose.xlu0.b32.cont [3/16] 0.0, 128
  %1648 = vxpose.xlu0.b32.cont [4/16] 0.0, 128
  %1649 = vxpose.xlu0.b32.cont [5/16] 0.0, 128
  %1650 = vxpose.xlu0.b32.cont [6/16] 0.0, 128
  %1651 = vxpose.xlu0.b32.cont [7/16] 0.0, 128
  %1652 = vxpose.xlu0.b32.cont [8/16] 0.0, 128
  %1653 = vxpose.xlu0.b32.cont [9/16] 0.0, 128
  %1654 = vxpose.xlu0.b32.cont [10/16] 0.0, 128
  %1655 = vxpose.xlu0.b32.cont [11/16] 0.0, 128
  %1656 = vxpose.xlu0.b32.cont [12/16] 0.0, 128
  %1657 = vxpose.xlu0.b32.cont [13/16] 0.0, 128
  %1658 = vxpose.xlu0.b32.cont [14/16] 0.0, 128
  %1659 = vxpose.xlu0.b32.cont [15/16] 0.0, 128
  %1660 = vxpose.xlu0.b32.end [16/16] 0.0, 128
  %v1661 = vpop.trf.xlu0
  %v1662 = vpop.trf.xlu0
  %v1663 = vpop.trf.xlu0
  %v1664 = vpop.trf.xlu0
  %v1665 = vpop.trf.xlu0
  %v1666 = vpop.trf.xlu0
  %v1667 = vpop.trf.xlu0
  %v1668 = vpop.trf.xlu0
  %v1669 = vpop.trf.xlu0
  %v1670 = vpop.trf.xlu0
  %v1671 = vpop.trf.xlu0
  %v1672 = vpop.trf.xlu0
  %v1673 = vpop.trf.xlu0
  %v1674 = vpop.trf.xlu0
  %v1675 = vpop.trf.xlu0
  %v1676 = vpop.trf.xlu0
  %v1678 = vsel %vm299, %v1661, 0
  %v1681 = vsel %vm299, %v1662, 0
  %v1684 = vsel %vm299, %v1663, 0
  %v1687 = vsel %vm299, %v1664, 0
  %v1690 = vsel %vm299, %v1665, 0
  %v1693 = vsel %vm299, %v1666, 0
  %v1696 = vsel %vm299, %v1667, 0
  %v1699 = vsel %vm299, %v1668, 0
  %v1702 = vsel %vm299, %v1669, 0
  %v1705 = vsel %vm299, %v1670, 0
  %v1708 = vsel %vm299, %v1671, 0
  %v1711 = vsel %vm299, %v1672, 0
  %v1714 = vsel %vm299, %v1673, 0
  %v1717 = vsel %vm299, %v1674, 0
  %v1720 = vsel %vm299, %v1675, 0
  %v1723 = vsel %vm299, %v1676, 0
  %1725 = vmatpush.msra.mxu0 0.0
  %1726 = vmatpush.msra.mxu0 0.0
  %1727 = vmatpush.msra.mxu0 0.0
  %1728 = vmatpush.msra.mxu0 0.0
  %1729 = vmatpush.msra.mxu0 0.0
  %1730 = vmatpush.msra.mxu0 0.0
  %1731 = vmatpush.msra.mxu0 0.0
  %1732 = vmatpush.msra.mxu0 0.0
  %1733 = vmatpush.msra.mxu0 0.0
  %1734 = vmatpush.msra.mxu0 0.0
  %1735 = vmatpush.msra.mxu0 0.0
  %1736 = vmatpush.msra.mxu0 0.0
  %1737 = vmatpush.msra.mxu0 0.0
  %1738 = vmatpush.msra.mxu0 0.0
  %1739 = vmatpush.msra.mxu0 %v148
  %1740 = vmatpush.msra.mxu0 %v145
  %1741 = vmatmul.f32.gmra.mxu0 %v1678
  %v1742 = vpop.f32.mrf.mxu0
  %v1743 = vadd.f32 0.0, %v1742
  %1744 = vmatmul.f32.gmra.mxu0 %v1681
  %v1745 = vpop.f32.mrf.mxu0
  %v1746 = vadd.f32 0.0, %v1745
  %1747 = vmatmul.f32.gmra.mxu0 %v1684
  %v1748 = vpop.f32.mrf.mxu0
  %v1749 = vadd.f32 0.0, %v1748
  %1750 = vmatmul.f32.gmra.mxu0 %v1687
  %v1751 = vpop.f32.mrf.mxu0
  %v1752 = vadd.f32 0.0, %v1751
  %1753 = vmatmul.f32.gmra.mxu0 %v1690
  %v1754 = vpop.f32.mrf.mxu0
  %v1755 = vadd.f32 0.0, %v1754
  %1756 = vmatmul.f32.gmra.mxu0 %v1693
  %v1757 = vpop.f32.mrf.mxu0
  %v1758 = vadd.f32 0.0, %v1757
  %1759 = vmatmul.f32.gmra.mxu0 %v1696
  %v1760 = vpop.f32.mrf.mxu0
  %v1761 = vadd.f32 0.0, %v1760
  %1762 = vmatmul.f32.gmra.mxu0 %v1699
  %v1763 = vpop.f32.mrf.mxu0
  %v1764 = vadd.f32 0.0, %v1763
  %1765 = vmatmul.f32.gmra.mxu0 %v1702
  %v1766 = vpop.f32.mrf.mxu0
  %v1767 = vadd.f32 0.0, %v1766
  %1768 = vmatmul.f32.gmra.mxu0 %v1705
  %v1769 = vpop.f32.mrf.mxu0
  %v1770 = vadd.f32 0.0, %v1769
  %1771 = vmatmul.f32.gmra.mxu0 %v1708
  %v1772 = vpop.f32.mrf.mxu0
  %v1773 = vadd.f32 0.0, %v1772
  %1774 = vmatmul.f32.gmra.mxu0 %v1711
  %v1775 = vpop.f32.mrf.mxu0
  %v1776 = vadd.f32 0.0, %v1775
  %1777 = vmatmul.f32.gmra.mxu0 %v1714
  %v1778 = vpop.f32.mrf.mxu0
  %v1779 = vadd.f32 0.0, %v1778
  %1780 = vmatmul.f32.gmra.mxu0 %v1717
  %v1781 = vpop.f32.mrf.mxu0
  %v1782 = vadd.f32 0.0, %v1781
  %1783 = vmatmul.f32.gmra.mxu0 %v1720
  %v1784 = vpop.f32.mrf.mxu0
  %v1785 = vadd.f32 0.0, %v1784
  %1786 = vmatmul.f32.gmra.mxu0 %v1723
  %v1787 = vpop.f32.mrf.mxu0
  %v1788 = vadd.f32 0.0, %v1787
  %1789 = vdwg.mxu0
  %1790 = vmatpush.msra.mxu0 0.0
  %1791 = vmatpush.msra.mxu0 0.0
  %1792 = vmatpush.msra.mxu0 0.0
  %1793 = vmatpush.msra.mxu0 0.0
  %1794 = vmatpush.msra.mxu0 0.0
  %1795 = vmatpush.msra.mxu0 0.0
  %1796 = vmatpush.msra.mxu0 0.0
  %1797 = vmatpush.msra.mxu0 0.0
  %1798 = vmatpush.msra.mxu0 0.0
  %1799 = vmatpush.msra.mxu0 0.0
  %1800 = vmatpush.msra.mxu0 0.0
  %1801 = vmatpush.msra.mxu0 0.0
  %1802 = vmatpush.msra.mxu0 0.0
  %1803 = vmatpush.msra.mxu0 0.0
  %1804 = vmatpush.msra.mxu0 %v189
  %1805 = vmatpush.msra.mxu0 %v186
  %1806 = vmatmul.f32.gmra.mxu0 %v1678
  %v1807 = vpop.f32.mrf.mxu0
  %v1808 = vadd.f32 0.0, %v1807
  %1809 = vmatmul.f32.gmra.mxu0 %v1681
  %v1810 = vpop.f32.mrf.mxu0
  %v1811 = vadd.f32 0.0, %v1810
  %1812 = vmatmul.f32.gmra.mxu0 %v1684
  %v1813 = vpop.f32.mrf.mxu0
  %v1814 = vadd.f32 0.0, %v1813
  %1815 = vmatmul.f32.gmra.mxu0 %v1687
  %v1816 = vpop.f32.mrf.mxu0
  %v1817 = vadd.f32 0.0, %v1816
  %1818 = vmatmul.f32.gmra.mxu0 %v1690
  %v1819 = vpop.f32.mrf.mxu0
  %v1820 = vadd.f32 0.0, %v1819
  %1821 = vmatmul.f32.gmra.mxu0 %v1693
  %v1822 = vpop.f32.mrf.mxu0
  %v1823 = vadd.f32 0.0, %v1822
  %1824 = vmatmul.f32.gmra.mxu0 %v1696
  %v1825 = vpop.f32.mrf.mxu0
  %v1826 = vadd.f32 0.0, %v1825
  %1827 = vmatmul.f32.gmra.mxu0 %v1699
  %v1828 = vpop.f32.mrf.mxu0
  %v1829 = vadd.f32 0.0, %v1828
  %1830 = vmatmul.f32.gmra.mxu0 %v1702
  %v1831 = vpop.f32.mrf.mxu0
  %v1832 = vadd.f32 0.0, %v1831
  %1833 = vmatmul.f32.gmra.mxu0 %v1705
  %v1834 = vpop.f32.mrf.mxu0
  %v1835 = vadd.f32 0.0, %v1834
  %1836 = vmatmul.f32.gmra.mxu0 %v1708
  %v1837 = vpop.f32.mrf.mxu0
  %v1838 = vadd.f32 0.0, %v1837
  %1839 = vmatmul.f32.gmra.mxu0 %v1711
  %v1840 = vpop.f32.mrf.mxu0
  %v1841 = vadd.f32 0.0, %v1840
  %1842 = vmatmul.f32.gmra.mxu0 %v1714
  %v1843 = vpop.f32.mrf.mxu0
  %v1844 = vadd.f32 0.0, %v1843
  %1845 = vmatmul.f32.gmra.mxu0 %v1717
  %v1846 = vpop.f32.mrf.mxu0
  %v1847 = vadd.f32 0.0, %v1846
  %1848 = vmatmul.f32.gmra.mxu0 %v1720
  %v1849 = vpop.f32.mrf.mxu0
  %v1850 = vadd.f32 0.0, %v1849
  %1851 = vmatmul.f32.gmra.mxu0 %v1723
  %v1852 = vpop.f32.mrf.mxu0
  %v1853 = vadd.f32 0.0, %v1852
  %1854 = vdwg.mxu0
  %v1855 = vmax.f32 %v1743, %v1808
  %1856 = vmax.xlane.f32.xlu0 %v1855
  %v1857 = vpop.xlane.xlu0 %1856
  %v1858 = vmax.f32 %v1746, %v1811
  %1859 = vmax.xlane.f32.xlu0 %v1858
  %v1860 = vpop.xlane.xlu0 %1859
  %v1861 = vmax.f32 %v1749, %v1814
  %1862 = vmax.xlane.f32.xlu0 %v1861
  %v1863 = vpop.xlane.xlu0 %1862
  %v1864 = vmax.f32 %v1752, %v1817
  %1865 = vmax.xlane.f32.xlu0 %v1864
  %v1866 = vpop.xlane.xlu0 %1865
  %v1867 = vmax.f32 %v1755, %v1820
  %1868 = vmax.xlane.f32.xlu0 %v1867
  %v1869 = vpop.xlane.xlu0 %1868
  %v1870 = vmax.f32 %v1758, %v1823
  %1871 = vmax.xlane.f32.xlu0 %v1870
  %v1872 = vpop.xlane.xlu0 %1871
  %v1873 = vmax.f32 %v1761, %v1826
  %1874 = vmax.xlane.f32.xlu0 %v1873
  %v1875 = vpop.xlane.xlu0 %1874
  %v1876 = vmax.f32 %v1764, %v1829
  %1877 = vmax.xlane.f32.xlu0 %v1876
  %v1878 = vpop.xlane.xlu0 %1877
  %v1879 = vmax.f32 %v1767, %v1832
  %1880 = vmax.xlane.f32.xlu0 %v1879
  %v1881 = vpop.xlane.xlu0 %1880
  %v1882 = vmax.f32 %v1770, %v1835
  %1883 = vmax.xlane.f32.xlu0 %v1882
  %v1884 = vpop.xlane.xlu0 %1883
  %v1885 = vmax.f32 %v1773, %v1838
  %1886 = vmax.xlane.f32.xlu0 %v1885
  %v1887 = vpop.xlane.xlu0 %1886
  %v1888 = vmax.f32 %v1776, %v1841
  %1889 = vmax.xlane.f32.xlu0 %v1888
  %v1890 = vpop.xlane.xlu0 %1889
  %v1891 = vmax.f32 %v1779, %v1844
  %1892 = vmax.xlane.f32.xlu0 %v1891
  %v1893 = vpop.xlane.xlu0 %1892
  %v1894 = vmax.f32 %v1782, %v1847
  %1895 = vmax.xlane.f32.xlu0 %v1894
  %v1896 = vpop.xlane.xlu0 %1895
  %v1897 = vmax.f32 %v1785, %v1850
  %1898 = vmax.xlane.f32.xlu0 %v1897
  %v1899 = vpop.xlane.xlu0 %1898
  %v1900 = vmax.f32 %v1788, %v1853
  %1901 = vmax.xlane.f32.xlu0 %v1900
  %v1902 = vpop.xlane.xlu0 %1901
  %v1903 = vsub.f32 %v1743, %v1857
  %v1904 = vsub.f32 %v1808, %v1857
  %v1905 = vsub.f32 %v1746, %v1860
  %v1906 = vsub.f32 %v1811, %v1860
  %v1907 = vsub.f32 %v1749, %v1863
  %v1908 = vsub.f32 %v1814, %v1863
  %v1909 = vsub.f32 %v1752, %v1866
  %v1910 = vsub.f32 %v1817, %v1866
  %v1911 = vsub.f32 %v1755, %v1869
  %v1912 = vsub.f32 %v1820, %v1869
  %v1913 = vsub.f32 %v1758, %v1872
  %v1914 = vsub.f32 %v1823, %v1872
  %v1915 = vsub.f32 %v1761, %v1875
  %v1916 = vsub.f32 %v1826, %v1875
  %v1917 = vsub.f32 %v1764, %v1878
  %v1918 = vsub.f32 %v1829, %v1878
  %v1919 = vsub.f32 %v1767, %v1881
  %v1920 = vsub.f32 %v1832, %v1881
  %v1921 = vsub.f32 %v1770, %v1884
  %v1922 = vsub.f32 %v1835, %v1884
  %v1923 = vsub.f32 %v1773, %v1887
  %v1924 = vsub.f32 %v1838, %v1887
  %v1925 = vsub.f32 %v1776, %v1890
  %v1926 = vsub.f32 %v1841, %v1890
  %v1927 = vsub.f32 %v1779, %v1893
  %v1928 = vsub.f32 %v1844, %v1893
  %v1929 = vsub.f32 %v1782, %v1896
  %v1930 = vsub.f32 %v1847, %v1896
  %v1931 = vsub.f32 %v1785, %v1899
  %v1932 = vsub.f32 %v1850, %v1899
  %v1933 = vsub.f32 %v1788, %v1902
  %v1934 = vsub.f32 %v1853, %v1902
  %v1935 = vmul.f32 %v1903, 1.442695
  %v1936 = vpow.pop %v1935
  %v1937 = vmul.f32 %v1904, 1.442695
  %v1938 = vpow.pop %v1937
  %v1939 = vmul.f32 %v1905, 1.442695
  %v1940 = vpow.pop %v1939
  %v1941 = vmul.f32 %v1906, 1.442695
  %v1942 = vpow.pop %v1941
  %v1943 = vmul.f32 %v1907, 1.442695
  %v1944 = vpow.pop %v1943
  %v1945 = vmul.f32 %v1908, 1.442695
  %v1946 = vpow.pop %v1945
  %v1947 = vmul.f32 %v1909, 1.442695
  %v1948 = vpow.pop %v1947
  %v1949 = vmul.f32 %v1910, 1.442695
  %v1950 = vpow.pop %v1949
  %v1951 = vmul.f32 %v1911, 1.442695
  %v1952 = vpow.pop %v1951
  %v1953 = vmul.f32 %v1912, 1.442695
  %v1954 = vpow.pop %v1953
  %v1955 = vmul.f32 %v1913, 1.442695
  %v1956 = vpow.pop %v1955
  %v1957 = vmul.f32 %v1914, 1.442695
  %v1958 = vpow.pop %v1957
  %v1959 = vmul.f32 %v1915, 1.442695
  %v1960 = vpow.pop %v1959
  %v1961 = vmul.f32 %v1916, 1.442695
  %v1962 = vpow.pop %v1961
  %v1963 = vmul.f32 %v1917, 1.442695
  %v1964 = vpow.pop %v1963
  %v1965 = vmul.f32 %v1918, 1.442695
  %v1966 = vpow.pop %v1965
  %v1967 = vmul.f32 %v1919, 1.442695
  %v1968 = vpow.pop %v1967
  %v1969 = vmul.f32 %v1920, 1.442695
  %v1970 = vpow.pop %v1969
  %v1971 = vmul.f32 %v1921, 1.442695
  %v1972 = vpow.pop %v1971
  %v1973 = vmul.f32 %v1922, 1.442695
  %v1974 = vpow.pop %v1973
  %v1975 = vmul.f32 %v1923, 1.442695
  %v1976 = vpow.pop %v1975
  %v1977 = vmul.f32 %v1924, 1.442695
  %v1978 = vpow.pop %v1977
  %v1979 = vmul.f32 %v1925, 1.442695
  %v1980 = vpow.pop %v1979
  %v1981 = vmul.f32 %v1926, 1.442695
  %v1982 = vpow.pop %v1981
  %v1983 = vmul.f32 %v1927, 1.442695
  %v1984 = vpow.pop %v1983
  %v1985 = vmul.f32 %v1928, 1.442695
  %v1986 = vpow.pop %v1985
  %v1987 = vmul.f32 %v1929, 1.442695
  %v1988 = vpow.pop %v1987
  %v1989 = vmul.f32 %v1930, 1.442695
  %v1990 = vpow.pop %v1989
  %v1991 = vmul.f32 %v1931, 1.442695
  %v1992 = vpow.pop %v1991
  %v1993 = vmul.f32 %v1932, 1.442695
  %v1994 = vpow.pop %v1993
  %v1995 = vmul.f32 %v1933, 1.442695
  %v1996 = vpow.pop %v1995
  %v1997 = vmul.f32 %v1934, 1.442695
  %v1998 = vpow.pop %v1997
  %1999 = vmatpush.xpose.msra.mxu0 %v1996
  %2000 = vmatpush.xpose.msra.mxu0 %v1992
  %2001 = vmatpush.xpose.msra.mxu0 %v1988
  %2002 = vmatpush.xpose.msra.mxu0 %v1984
  %2003 = vmatpush.xpose.msra.mxu0 %v1980
  %2004 = vmatpush.xpose.msra.mxu0 %v1976
  %2005 = vmatpush.xpose.msra.mxu0 %v1972
  %2006 = vmatpush.xpose.msra.mxu0 %v1968
  %2007 = vmatpush.xpose.msra.mxu0 %v1964
  %2008 = vmatpush.xpose.msra.mxu0 %v1960
  %2009 = vmatpush.xpose.msra.mxu0 %v1956
  %2010 = vmatpush.xpose.msra.mxu0 %v1952
  %2011 = vmatpush.xpose.msra.mxu0 %v1948
  %2012 = vmatpush.xpose.msra.mxu0 %v1944
  %2013 = vmatpush.xpose.msra.mxu0 %v1940
  %2014 = vmatpush.xpose.msra.mxu0 %v1936
  %2015 = vmatmul.f32.gmra.mxu0 %v233
  %v2016 = vpop.f32.mrf.mxu0
  %v2017 = vadd.f32 0.0, %v2016
  %2018 = vmatmul.f32.gmra.mxu0 %v236
  %v2019 = vpop.f32.mrf.mxu0
  %v2020 = vadd.f32 0.0, %v2019
  %2021 = vdwg.mxu0
  %2022 = vmatpush.xpose.msra.mxu0 %v1998
  %2023 = vmatpush.xpose.msra.mxu0 %v1994
  %2024 = vmatpush.xpose.msra.mxu0 %v1990
  %2025 = vmatpush.xpose.msra.mxu0 %v1986
  %2026 = vmatpush.xpose.msra.mxu0 %v1982
  %2027 = vmatpush.xpose.msra.mxu0 %v1978
  %2028 = vmatpush.xpose.msra.mxu0 %v1974
  %2029 = vmatpush.xpose.msra.mxu0 %v1970
  %2030 = vmatpush.xpose.msra.mxu0 %v1966
  %2031 = vmatpush.xpose.msra.mxu0 %v1962
  %2032 = vmatpush.xpose.msra.mxu0 %v1958
  %2033 = vmatpush.xpose.msra.mxu0 %v1954
  %2034 = vmatpush.xpose.msra.mxu0 %v1950
  %2035 = vmatpush.xpose.msra.mxu0 %v1946
  %2036 = vmatpush.xpose.msra.mxu0 %v1942
  %2037 = vmatpush.xpose.msra.mxu0 %v1938
  %2038 = vmatmul.f32.gmra.mxu0 %v262
  %v2039 = vpop.f32.mrf.mxu0
  %v2040 = vadd.f32 %v2017, %v2039
  %2041 = vmatmul.f32.gmra.mxu0 %v265
  %v2042 = vpop.f32.mrf.mxu0
  %v2043 = vadd.f32 %v2020, %v2042
  %2044 = vdwg.mxu0
  %2045 = vmatpush.xpose.msra.mxu0 %v1996
  %2046 = vmatpush.xpose.msra.mxu0 %v1992
  %2047 = vmatpush.xpose.msra.mxu0 %v1988
  %2048 = vmatpush.xpose.msra.mxu0 %v1984
  %2049 = vmatpush.xpose.msra.mxu0 %v1980
  %2050 = vmatpush.xpose.msra.mxu0 %v1976
  %2051 = vmatpush.xpose.msra.mxu0 %v1972
  %2052 = vmatpush.xpose.msra.mxu0 %v1968
  %2053 = vmatpush.xpose.msra.mxu0 %v1964
  %2054 = vmatpush.xpose.msra.mxu0 %v1960
  %2055 = vmatpush.xpose.msra.mxu0 %v1956
  %2056 = vmatpush.xpose.msra.mxu0 %v1952
  %2057 = vmatpush.xpose.msra.mxu0 %v1948
  %2058 = vmatpush.xpose.msra.mxu0 %v1944
  %2059 = vmatpush.xpose.msra.mxu0 %v1940
  %2060 = vmatpush.xpose.msra.mxu0 %v1936
  %2061 = vmatmul.f32.gmra.mxu0 1.0
  %v2062 = vpop.f32.mrf.mxu0
  %v2063 = vadd.f32 0.0, %v2062
  %2064 = vdwg.mxu0
  %2065 = vmatpush.xpose.msra.mxu0 %v1998
  %2066 = vmatpush.xpose.msra.mxu0 %v1994
  %2067 = vmatpush.xpose.msra.mxu0 %v1990
  %2068 = vmatpush.xpose.msra.mxu0 %v1986
  %2069 = vmatpush.xpose.msra.mxu0 %v1982
  %2070 = vmatpush.xpose.msra.mxu0 %v1978
  %2071 = vmatpush.xpose.msra.mxu0 %v1974
  %2072 = vmatpush.xpose.msra.mxu0 %v1970
  %2073 = vmatpush.xpose.msra.mxu0 %v1966
  %2074 = vmatpush.xpose.msra.mxu0 %v1962
  %2075 = vmatpush.xpose.msra.mxu0 %v1958
  %2076 = vmatpush.xpose.msra.mxu0 %v1954
  %2077 = vmatpush.xpose.msra.mxu0 %v1950
  %2078 = vmatpush.xpose.msra.mxu0 %v1946
  %2079 = vmatpush.xpose.msra.mxu0 %v1942
  %2080 = vmatpush.xpose.msra.mxu0 %v1938
  %2081 = vmatmul.f32.gmra.mxu0 1.0
  %v2082 = vpop.f32.mrf.mxu0
  %v2083 = vadd.f32 %v2063, %v2082
  %2084 = vdwg.mxu0
  %v2085 = vrcp.pop %v2083
  %v2086 = vmul.f32 %v2083, %v2085
  %v2087 = vsub.f32 1.0, %v2086
  %v2088 = vmul.f32 %v2085, %v2087
  %v2089 = vadd.f32 %v2085, %v2088
  %vm2090 = vweird.f32 %v2083
  %vm2091 = vweird.f32 %v2085
  %vm2092 = vmor %vm2090, %vm2091
  %v2093 = vsel %vm2092, %v2085, %v2089
  %v2094 = vand.u32 2147483647, %v2083
  %vm2095 = vcmp.eq.f32.partialorder %v2094, 8.507059e+37
  %v2096 = vand.u32 %v2083, 2147483648
  %v2097 = vor.u32 1.1754944e-38, %v2096
  %v2098 = vsel %vm2095, %v2097, %v2093
  %v2099 = vperm.slane %v2098, 0
  %v2100 = vmul.f32 %v2040, %v2099
  %v2101 = vmul.f32 %v2043, %v2099
  %2102 = vst [vmem:[#allocation2 + $0x48] sm:$0xff] %v2100
  %2103 = vst [vmem:[#allocation2 + $0x68] sm:$0xff] %v2101
  %v2104 = vld [vmem:[%s3] sm:$0xff]
  %v2105 = vld [vmem:[%s3 + $0x8] sm:$0xff]
  %v2106 = vld [vmem:[%s3 + $0x10] sm:$0xff]
  %v2107 = vld [vmem:[%s3 + $0x18] sm:$0xff]
  %v2108 = vld [vmem:[%s3 + $0x20] sm:$0xff]
  %v2109 = vld [vmem:[%s3 + $0x28] sm:$0xff]
  %v2110 = vld [vmem:[%s3 + $0x30] sm:$0xff]
  %v2111 = vld [vmem:[%s3 + $0x38] sm:$0xff]
  %s2112 = scalar_lea.vmem %s0, 16
  %v2113 = vld [vmem:[%s2112] sm:$0xff]
  %v2114 = vld [vmem:[%s2112 + $0x8] sm:$0xff]
  %s2115 = scalar_lea.vmem %s2, 64
  %v2116 = vld [vmem:[%s2115] sm:$0xff]
  %v2117 = vld [vmem:[%s2115 + $0x8] sm:$0xff]
  %v2118 = vld [vmem:[%s2115 + $0x10] sm:$0xff]
  %v2119 = vld [vmem:[%s2115 + $0x18] sm:$0xff]
  %v2120 = vld [vmem:[%s2115 + $0x20] sm:$0xff]
  %v2121 = vld [vmem:[%s2115 + $0x28] sm:$0xff]
  %v2122 = vld [vmem:[%s2115 + $0x30] sm:$0xff]
  %v2123 = vld [vmem:[%s2115 + $0x38] sm:$0xff]
  %2125 = vset.pattern.permute.xlu0 0
  %2126 = vperm.xlu0 %2125, %v2116
  %v2127 = vpop.permute.xlu0 %2126
  %2130 = vset.pattern.permute.xlu0 0
  %2131 = vperm.xlu0 %2130, %v2117
  %v2132 = vpop.permute.xlu0 %2131
  %2135 = vset.pattern.permute.xlu0 0
  %2136 = vperm.xlu0 %2135, %v2118
  %v2137 = vpop.permute.xlu0 %2136
  %2140 = vset.pattern.permute.xlu0 0
  %2141 = vperm.xlu0 %2140, %v2119
  %v2142 = vpop.permute.xlu0 %2141
  %2145 = vset.pattern.permute.xlu0 0
  %2146 = vperm.xlu0 %2145, %v2120
  %v2147 = vpop.permute.xlu0 %2146
  %2150 = vset.pattern.permute.xlu0 0
  %2151 = vperm.xlu0 %2150, %v2121
  %v2152 = vpop.permute.xlu0 %2151
  %2155 = vset.pattern.permute.xlu0 0
  %2156 = vperm.xlu0 %2155, %v2122
  %v2157 = vpop.permute.xlu0 %2156
  %2160 = vset.pattern.permute.xlu0 0
  %2161 = vperm.xlu0 %2160, %v2123
  %v2162 = vpop.permute.xlu0 %2161
  %v2165 = vsel %vm84, %v2104, 0
  %v2168 = vsel %vm84, %v2105, 0
  %v2171 = vsel %vm84, %v2106, 0
  %v2174 = vsel %vm84, %v2107, 0
  %v2177 = vsel %vm84, %v2108, 0
  %v2180 = vsel %vm84, %v2109, 0
  %v2183 = vsel %vm84, %v2110, 0
  %v2186 = vsel %vm84, %v2111, 0
  %2188 = vmatpush.msra.mxu0 0.0
  %2189 = vmatpush.msra.mxu0 0.0
  %2190 = vmatpush.msra.mxu0 0.0
  %2191 = vmatpush.msra.mxu0 0.0
  %2192 = vmatpush.msra.mxu0 0.0
  %2193 = vmatpush.msra.mxu0 0.0
  %2194 = vmatpush.msra.mxu0 0.0
  %2195 = vmatpush.msra.mxu0 0.0
  %2196 = vmatpush.msra.mxu0 0.0
  %2197 = vmatpush.msra.mxu0 0.0
  %2198 = vmatpush.msra.mxu0 0.0
  %2199 = vmatpush.msra.mxu0 0.0
  %2200 = vmatpush.msra.mxu0 0.0
  %2201 = vmatpush.msra.mxu0 0.0
  %2202 = vmatpush.msra.mxu0 0.0
  %2203 = vmatpush.msra.mxu0 %v2113
  %2204 = vmatmul.f32.gmra.mxu0 %v2165
  %v2205 = vpop.f32.mrf.mxu0
  %v2206 = vadd.f32 %v2127, %v2205
  %2207 = vmatmul.f32.gmra.mxu0 %v2168
  %v2208 = vpop.f32.mrf.mxu0
  %v2209 = vadd.f32 %v2132, %v2208
  %2210 = vmatmul.f32.gmra.mxu0 %v2171
  %v2211 = vpop.f32.mrf.mxu0
  %v2212 = vadd.f32 %v2137, %v2211
  %2213 = vmatmul.f32.gmra.mxu0 %v2174
  %v2214 = vpop.f32.mrf.mxu0
  %v2215 = vadd.f32 %v2142, %v2214
  %2216 = vmatmul.f32.gmra.mxu0 %v2177
  %v2217 = vpop.f32.mrf.mxu0
  %v2218 = vadd.f32 %v2147, %v2217
  %2219 = vmatmul.f32.gmra.mxu0 %v2180
  %v2220 = vpop.f32.mrf.mxu0
  %v2221 = vadd.f32 %v2152, %v2220
  %2222 = vmatmul.f32.gmra.mxu0 %v2183
  %v2223 = vpop.f32.mrf.mxu0
  %v2224 = vadd.f32 %v2157, %v2223
  %2225 = vmatmul.f32.gmra.mxu0 %v2186
  %v2226 = vpop.f32.mrf.mxu0
  %v2227 = vadd.f32 %v2162, %v2226
  %2228 = vdwg.mxu0
  %2229 = vmatpush.msra.mxu0 0.0
  %2230 = vmatpush.msra.mxu0 0.0
  %2231 = vmatpush.msra.mxu0 0.0
  %2232 = vmatpush.msra.mxu0 0.0
  %2233 = vmatpush.msra.mxu0 0.0
  %2234 = vmatpush.msra.mxu0 0.0
  %2235 = vmatpush.msra.mxu0 0.0
  %2236 = vmatpush.msra.mxu0 0.0
  %2237 = vmatpush.msra.mxu0 0.0
  %2238 = vmatpush.msra.mxu0 0.0
  %2239 = vmatpush.msra.mxu0 0.0
  %2240 = vmatpush.msra.mxu0 0.0
  %2241 = vmatpush.msra.mxu0 0.0
  %2242 = vmatpush.msra.mxu0 0.0
  %2243 = vmatpush.msra.mxu0 0.0
  %2244 = vmatpush.msra.mxu0 %v2114
  %2245 = vmatmul.f32.gmra.mxu0 %v2165
  %v2246 = vpop.f32.mrf.mxu0
  %v2247 = vadd.f32 %v2127, %v2246
  %2248 = vmatmul.f32.gmra.mxu0 %v2168
  %v2249 = vpop.f32.mrf.mxu0
  %v2250 = vadd.f32 %v2132, %v2249
  %2251 = vmatmul.f32.gmra.mxu0 %v2171
  %v2252 = vpop.f32.mrf.mxu0
  %v2253 = vadd.f32 %v2137, %v2252
  %2254 = vmatmul.f32.gmra.mxu0 %v2174
  %v2255 = vpop.f32.mrf.mxu0
  %v2256 = vadd.f32 %v2142, %v2255
  %2257 = vmatmul.f32.gmra.mxu0 %v2177
  %v2258 = vpop.f32.mrf.mxu0
  %v2259 = vadd.f32 %v2147, %v2258
  %2260 = vmatmul.f32.gmra.mxu0 %v2180
  %v2261 = vpop.f32.mrf.mxu0
  %v2262 = vadd.f32 %v2152, %v2261
  %2263 = vmatmul.f32.gmra.mxu0 %v2183
  %v2264 = vpop.f32.mrf.mxu0
  %v2265 = vadd.f32 %v2157, %v2264
  %2266 = vmatmul.f32.gmra.mxu0 %v2186
  %v2267 = vpop.f32.mrf.mxu0
  %v2268 = vadd.f32 %v2162, %v2267
  %2269 = vdwg.mxu0
  %v2270 = vld [vmem:[%s4] sm:$0xff]
  %v2271 = vld [vmem:[%s4 + $0x8] sm:$0xff]
  %v2272 = vld [vmem:[%s4 + $0x10] sm:$0xff]
  %v2273 = vld [vmem:[%s4 + $0x18] sm:$0xff]
  %s2274 = scalar_lea.vmem %s1, 16
  %v2275 = vld [vmem:[%s2274] sm:$0xff]
  %v2276 = vld [vmem:[%s2274 + $0x8] sm:$0xff]
  %v2278 = vsel %vm84, %v2270, 0
  %v2281 = vsel %vm84, %v2271, 0
  %v2284 = vsel %vm84, %v2272, 0
  %v2287 = vsel %vm84, %v2273, 0
  %2289 = vmatpush.msra.mxu0 0.0
  %2290 = vmatpush.msra.mxu0 0.0
  %2291 = vmatpush.msra.mxu0 0.0
  %2292 = vmatpush.msra.mxu0 0.0
  %2293 = vmatpush.msra.mxu0 0.0
  %2294 = vmatpush.msra.mxu0 0.0
  %2295 = vmatpush.msra.mxu0 0.0
  %2296 = vmatpush.msra.mxu0 0.0
  %2297 = vmatpush.msra.mxu0 0.0
  %2298 = vmatpush.msra.mxu0 0.0
  %2299 = vmatpush.msra.mxu0 0.0
  %2300 = vmatpush.msra.mxu0 0.0
  %2301 = vmatpush.msra.mxu0 0.0
  %2302 = vmatpush.msra.mxu0 0.0
  %2303 = vmatpush.msra.mxu0 0.0
  %2304 = vmatpush.msra.mxu0 %v2275
  %2305 = vmatmul.f32.gmra.mxu0 %v2278
  %v2306 = vpop.f32.mrf.mxu0
  %v2307 = vadd.f32 0.0, %v2306
  %2308 = vmatmul.f32.gmra.mxu0 %v2281
  %v2309 = vpop.f32.mrf.mxu0
  %v2310 = vadd.f32 0.0, %v2309
  %2311 = vmatmul.f32.gmra.mxu0 %v2284
  %v2312 = vpop.f32.mrf.mxu0
  %v2313 = vadd.f32 0.0, %v2312
  %2314 = vmatmul.f32.gmra.mxu0 %v2287
  %v2315 = vpop.f32.mrf.mxu0
  %v2316 = vadd.f32 0.0, %v2315
  %2317 = vdwg.mxu0
  %2318 = vmatpush.msra.mxu0 0.0
  %2319 = vmatpush.msra.mxu0 0.0
  %2320 = vmatpush.msra.mxu0 0.0
  %2321 = vmatpush.msra.mxu0 0.0
  %2322 = vmatpush.msra.mxu0 0.0
  %2323 = vmatpush.msra.mxu0 0.0
  %2324 = vmatpush.msra.mxu0 0.0
  %2325 = vmatpush.msra.mxu0 0.0
  %2326 = vmatpush.msra.mxu0 0.0
  %2327 = vmatpush.msra.mxu0 0.0
  %2328 = vmatpush.msra.mxu0 0.0
  %2329 = vmatpush.msra.mxu0 0.0
  %2330 = vmatpush.msra.mxu0 0.0
  %2331 = vmatpush.msra.mxu0 0.0
  %2332 = vmatpush.msra.mxu0 0.0
  %2333 = vmatpush.msra.mxu0 %v2276
  %2334 = vmatmul.f32.gmra.mxu0 %v2278
  %v2335 = vpop.f32.mrf.mxu0
  %v2336 = vadd.f32 0.0, %v2335
  %2337 = vmatmul.f32.gmra.mxu0 %v2281
  %v2338 = vpop.f32.mrf.mxu0
  %v2339 = vadd.f32 0.0, %v2338
  %2340 = vmatmul.f32.gmra.mxu0 %v2284
  %v2341 = vpop.f32.mrf.mxu0
  %v2342 = vadd.f32 0.0, %v2341
  %2343 = vmatmul.f32.gmra.mxu0 %v2287
  %v2344 = vpop.f32.mrf.mxu0
  %v2345 = vadd.f32 0.0, %v2344
  %2346 = vdwg.mxu0
  %2347 = vxpose.xlu0.b32.start [1/16] %v2206, 128
  %2348 = vxpose.xlu0.b32.cont [2/16] %v2209, 128
  %2349 = vxpose.xlu0.b32.cont [3/16] 0.0, 128
  %2350 = vxpose.xlu0.b32.cont [4/16] 0.0, 128
  %2351 = vxpose.xlu0.b32.cont [5/16] 0.0, 128
  %2352 = vxpose.xlu0.b32.cont [6/16] 0.0, 128
  %2353 = vxpose.xlu0.b32.cont [7/16] 0.0, 128
  %2354 = vxpose.xlu0.b32.cont [8/16] 0.0, 128
  %2355 = vxpose.xlu0.b32.cont [9/16] 0.0, 128
  %2356 = vxpose.xlu0.b32.cont [10/16] 0.0, 128
  %2357 = vxpose.xlu0.b32.cont [11/16] 0.0, 128
  %2358 = vxpose.xlu0.b32.cont [12/16] 0.0, 128
  %2359 = vxpose.xlu0.b32.cont [13/16] 0.0, 128
  %2360 = vxpose.xlu0.b32.cont [14/16] 0.0, 128
  %2361 = vxpose.xlu0.b32.cont [15/16] 0.0, 128
  %2362 = vxpose.xlu0.b32.end [16/16] 0.0, 128
  %v2363 = vpop.trf.xlu0
  %v2364 = vpop.trf.xlu0
  %v2365 = vpop.trf.xlu0
  %v2366 = vpop.trf.xlu0
  %v2367 = vpop.trf.xlu0
  %v2368 = vpop.trf.xlu0
  %v2369 = vpop.trf.xlu0
  %v2370 = vpop.trf.xlu0
  %v2371 = vpop.trf.xlu0
  %v2372 = vpop.trf.xlu0
  %v2373 = vpop.trf.xlu0
  %v2374 = vpop.trf.xlu0
  %v2375 = vpop.trf.xlu0
  %v2376 = vpop.trf.xlu0
  %v2377 = vpop.trf.xlu0
  %v2378 = vpop.trf.xlu0
  %v2380 = vsel %vm299, %v2363, 0
  %v2383 = vsel %vm299, %v2364, 0
  %v2386 = vsel %vm299, %v2365, 0
  %v2389 = vsel %vm299, %v2366, 0
  %v2392 = vsel %vm299, %v2367, 0
  %v2395 = vsel %vm299, %v2368, 0
  %v2398 = vsel %vm299, %v2369, 0
  %v2401 = vsel %vm299, %v2370, 0
  %v2404 = vsel %vm299, %v2371, 0
  %v2407 = vsel %vm299, %v2372, 0
  %v2410 = vsel %vm299, %v2373, 0
  %v2413 = vsel %vm299, %v2374, 0
  %v2416 = vsel %vm299, %v2375, 0
  %v2419 = vsel %vm299, %v2376, 0
  %v2422 = vsel %vm299, %v2377, 0
  %v2425 = vsel %vm299, %v2378, 0
  %2427 = vmatpush.msra.mxu0 0.0
  %2428 = vmatpush.msra.mxu0 0.0
  %2429 = vmatpush.msra.mxu0 0.0
  %2430 = vmatpush.msra.mxu0 0.0
  %2431 = vmatpush.msra.mxu0 0.0
  %2432 = vmatpush.msra.mxu0 0.0
  %2433 = vmatpush.msra.mxu0 0.0
  %2434 = vmatpush.msra.mxu0 0.0
  %2435 = vmatpush.msra.mxu0 0.0
  %2436 = vmatpush.msra.mxu0 0.0
  %2437 = vmatpush.msra.mxu0 0.0
  %2438 = vmatpush.msra.mxu0 0.0
  %2439 = vmatpush.msra.mxu0 0.0
  %2440 = vmatpush.msra.mxu0 0.0
  %2441 = vmatpush.msra.mxu0 %v2221
  %2442 = vmatpush.msra.mxu0 %v2218
  %2443 = vmatmul.f32.gmra.mxu0 %v2380
  %v2444 = vpop.f32.mrf.mxu0
  %v2445 = vadd.f32 0.0, %v2444
  %2446 = vmatmul.f32.gmra.mxu0 %v2383
  %v2447 = vpop.f32.mrf.mxu0
  %v2448 = vadd.f32 0.0, %v2447
  %2449 = vmatmul.f32.gmra.mxu0 %v2386
  %v2450 = vpop.f32.mrf.mxu0
  %v2451 = vadd.f32 0.0, %v2450
  %2452 = vmatmul.f32.gmra.mxu0 %v2389
  %v2453 = vpop.f32.mrf.mxu0
  %v2454 = vadd.f32 0.0, %v2453
  %2455 = vmatmul.f32.gmra.mxu0 %v2392
  %v2456 = vpop.f32.mrf.mxu0
  %v2457 = vadd.f32 0.0, %v2456
  %2458 = vmatmul.f32.gmra.mxu0 %v2395
  %v2459 = vpop.f32.mrf.mxu0
  %v2460 = vadd.f32 0.0, %v2459
  %2461 = vmatmul.f32.gmra.mxu0 %v2398
  %v2462 = vpop.f32.mrf.mxu0
  %v2463 = vadd.f32 0.0, %v2462
  %2464 = vmatmul.f32.gmra.mxu0 %v2401
  %v2465 = vpop.f32.mrf.mxu0
  %v2466 = vadd.f32 0.0, %v2465
  %2467 = vmatmul.f32.gmra.mxu0 %v2404
  %v2468 = vpop.f32.mrf.mxu0
  %v2469 = vadd.f32 0.0, %v2468
  %2470 = vmatmul.f32.gmra.mxu0 %v2407
  %v2471 = vpop.f32.mrf.mxu0
  %v2472 = vadd.f32 0.0, %v2471
  %2473 = vmatmul.f32.gmra.mxu0 %v2410
  %v2474 = vpop.f32.mrf.mxu0
  %v2475 = vadd.f32 0.0, %v2474
  %2476 = vmatmul.f32.gmra.mxu0 %v2413
  %v2477 = vpop.f32.mrf.mxu0
  %v2478 = vadd.f32 0.0, %v2477
  %2479 = vmatmul.f32.gmra.mxu0 %v2416
  %v2480 = vpop.f32.mrf.mxu0
  %v2481 = vadd.f32 0.0, %v2480
  %2482 = vmatmul.f32.gmra.mxu0 %v2419
  %v2483 = vpop.f32.mrf.mxu0
  %v2484 = vadd.f32 0.0, %v2483
  %2485 = vmatmul.f32.gmra.mxu0 %v2422
  %v2486 = vpop.f32.mrf.mxu0
  %v2487 = vadd.f32 0.0, %v2486
  %2488 = vmatmul.f32.gmra.mxu0 %v2425
  %v2489 = vpop.f32.mrf.mxu0
  %v2490 = vadd.f32 0.0, %v2489
  %2491 = vdwg.mxu0
  %2492 = vmatpush.msra.mxu0 0.0
  %2493 = vmatpush.msra.mxu0 0.0
  %2494 = vmatpush.msra.mxu0 0.0
  %2495 = vmatpush.msra.mxu0 0.0
  %2496 = vmatpush.msra.mxu0 0.0
  %2497 = vmatpush.msra.mxu0 0.0
  %2498 = vmatpush.msra.mxu0 0.0
  %2499 = vmatpush.msra.mxu0 0.0
  %2500 = vmatpush.msra.mxu0 0.0
  %2501 = vmatpush.msra.mxu0 0.0
  %2502 = vmatpush.msra.mxu0 0.0
  %2503 = vmatpush.msra.mxu0 0.0
  %2504 = vmatpush.msra.mxu0 0.0
  %2505 = vmatpush.msra.mxu0 0.0
  %2506 = vmatpush.msra.mxu0 %v2262
  %2507 = vmatpush.msra.mxu0 %v2259
  %2508 = vmatmul.f32.gmra.mxu0 %v2380
  %v2509 = vpop.f32.mrf.mxu0
  %v2510 = vadd.f32 0.0, %v2509
  %2511 = vmatmul.f32.gmra.mxu0 %v2383
  %v2512 = vpop.f32.mrf.mxu0
  %v2513 = vadd.f32 0.0, %v2512
  %2514 = vmatmul.f32.gmra.mxu0 %v2386
  %v2515 = vpop.f32.mrf.mxu0
  %v2516 = vadd.f32 0.0, %v2515
  %2517 = vmatmul.f32.gmra.mxu0 %v2389
  %v2518 = vpop.f32.mrf.mxu0
  %v2519 = vadd.f32 0.0, %v2518
  %2520 = vmatmul.f32.gmra.mxu0 %v2392
  %v2521 = vpop.f32.mrf.mxu0
  %v2522 = vadd.f32 0.0, %v2521
  %2523 = vmatmul.f32.gmra.mxu0 %v2395
  %v2524 = vpop.f32.mrf.mxu0
  %v2525 = vadd.f32 0.0, %v2524
  %2526 = vmatmul.f32.gmra.mxu0 %v2398
  %v2527 = vpop.f32.mrf.mxu0
  %v2528 = vadd.f32 0.0, %v2527
  %2529 = vmatmul.f32.gmra.mxu0 %v2401
  %v2530 = vpop.f32.mrf.mxu0
  %v2531 = vadd.f32 0.0, %v2530
  %2532 = vmatmul.f32.gmra.mxu0 %v2404
  %v2533 = vpop.f32.mrf.mxu0
  %v2534 = vadd.f32 0.0, %v2533
  %2535 = vmatmul.f32.gmra.mxu0 %v2407
  %v2536 = vpop.f32.mrf.mxu0
  %v2537 = vadd.f32 0.0, %v2536
  %2538 = vmatmul.f32.gmra.mxu0 %v2410
  %v2539 = vpop.f32.mrf.mxu0
  %v2540 = vadd.f32 0.0, %v2539
  %2541 = vmatmul.f32.gmra.mxu0 %v2413
  %v2542 = vpop.f32.mrf.mxu0
  %v2543 = vadd.f32 0.0, %v2542
  %2544 = vmatmul.f32.gmra.mxu0 %v2416
  %v2545 = vpop.f32.mrf.mxu0
  %v2546 = vadd.f32 0.0, %v2545
  %2547 = vmatmul.f32.gmra.mxu0 %v2419
  %v2548 = vpop.f32.mrf.mxu0
  %v2549 = vadd.f32 0.0, %v2548
  %2550 = vmatmul.f32.gmra.mxu0 %v2422
  %v2551 = vpop.f32.mrf.mxu0
  %v2552 = vadd.f32 0.0, %v2551
  %2553 = vmatmul.f32.gmra.mxu0 %v2425
  %v2554 = vpop.f32.mrf.mxu0
  %v2555 = vadd.f32 0.0, %v2554
  %2556 = vdwg.mxu0
  %v2557 = vmax.f32 %v2445, %v2510
  %2558 = vmax.xlane.f32.xlu0 %v2557
  %v2559 = vpop.xlane.xlu0 %2558
  %v2560 = vmax.f32 %v2448, %v2513
  %2561 = vmax.xlane.f32.xlu0 %v2560
  %v2562 = vpop.xlane.xlu0 %2561
  %v2563 = vmax.f32 %v2451, %v2516
  %2564 = vmax.xlane.f32.xlu0 %v2563
  %v2565 = vpop.xlane.xlu0 %2564
  %v2566 = vmax.f32 %v2454, %v2519
  %2567 = vmax.xlane.f32.xlu0 %v2566
  %v2568 = vpop.xlane.xlu0 %2567
  %v2569 = vmax.f32 %v2457, %v2522
  %2570 = vmax.xlane.f32.xlu0 %v2569
  %v2571 = vpop.xlane.xlu0 %2570
  %v2572 = vmax.f32 %v2460, %v2525
  %2573 = vmax.xlane.f32.xlu0 %v2572
  %v2574 = vpop.xlane.xlu0 %2573
  %v2575 = vmax.f32 %v2463, %v2528
  %2576 = vmax.xlane.f32.xlu0 %v2575
  %v2577 = vpop.xlane.xlu0 %2576
  %v2578 = vmax.f32 %v2466, %v2531
  %2579 = vmax.xlane.f32.xlu0 %v2578
  %v2580 = vpop.xlane.xlu0 %2579
  %v2581 = vmax.f32 %v2469, %v2534
  %2582 = vmax.xlane.f32.xlu0 %v2581
  %v2583 = vpop.xlane.xlu0 %2582
  %v2584 = vmax.f32 %v2472, %v2537
  %2585 = vmax.xlane.f32.xlu0 %v2584
  %v2586 = vpop.xlane.xlu0 %2585
  %v2587 = vmax.f32 %v2475, %v2540
  %2588 = vmax.xlane.f32.xlu0 %v2587
  %v2589 = vpop.xlane.xlu0 %2588
  %v2590 = vmax.f32 %v2478, %v2543
  %2591 = vmax.xlane.f32.xlu0 %v2590
  %v2592 = vpop.xlane.xlu0 %2591
  %v2593 = vmax.f32 %v2481, %v2546
  %2594 = vmax.xlane.f32.xlu0 %v2593
  %v2595 = vpop.xlane.xlu0 %2594
  %v2596 = vmax.f32 %v2484, %v2549
  %2597 = vmax.xlane.f32.xlu0 %v2596
  %v2598 = vpop.xlane.xlu0 %2597
  %v2599 = vmax.f32 %v2487, %v2552
  %2600 = vmax.xlane.f32.xlu0 %v2599
  %v2601 = vpop.xlane.xlu0 %2600
  %v2602 = vmax.f32 %v2490, %v2555
  %2603 = vmax.xlane.f32.xlu0 %v2602
  %v2604 = vpop.xlane.xlu0 %2603
  %v2605 = vsub.f32 %v2445, %v2559
  %v2606 = vsub.f32 %v2510, %v2559
  %v2607 = vsub.f32 %v2448, %v2562
  %v2608 = vsub.f32 %v2513, %v2562
  %v2609 = vsub.f32 %v2451, %v2565
  %v2610 = vsub.f32 %v2516, %v2565
  %v2611 = vsub.f32 %v2454, %v2568
  %v2612 = vsub.f32 %v2519, %v2568
  %v2613 = vsub.f32 %v2457, %v2571
  %v2614 = vsub.f32 %v2522, %v2571
  %v2615 = vsub.f32 %v2460, %v2574
  %v2616 = vsub.f32 %v2525, %v2574
  %v2617 = vsub.f32 %v2463, %v2577
  %v2618 = vsub.f32 %v2528, %v2577
  %v2619 = vsub.f32 %v2466, %v2580
  %v2620 = vsub.f32 %v2531, %v2580
  %v2621 = vsub.f32 %v2469, %v2583
  %v2622 = vsub.f32 %v2534, %v2583
  %v2623 = vsub.f32 %v2472, %v2586
  %v2624 = vsub.f32 %v2537, %v2586
  %v2625 = vsub.f32 %v2475, %v2589
  %v2626 = vsub.f32 %v2540, %v2589
  %v2627 = vsub.f32 %v2478, %v2592
  %v2628 = vsub.f32 %v2543, %v2592
  %v2629 = vsub.f32 %v2481, %v2595
  %v2630 = vsub.f32 %v2546, %v2595
  %v2631 = vsub.f32 %v2484, %v2598
  %v2632 = vsub.f32 %v2549, %v2598
  %v2633 = vsub.f32 %v2487, %v2601
  %v2634 = vsub.f32 %v2552, %v2601
  %v2635 = vsub.f32 %v2490, %v2604
  %v2636 = vsub.f32 %v2555, %v2604
  %v2637 = vmul.f32 %v2605, 1.442695
  %v2638 = vpow.pop %v2637
  %v2639 = vmul.f32 %v2606, 1.442695
  %v2640 = vpow.pop %v2639
  %v2641 = vmul.f32 %v2607, 1.442695
  %v2642 = vpow.pop %v2641
  %v2643 = vmul.f32 %v2608, 1.442695
  %v2644 = vpow.pop %v2643
  %v2645 = vmul.f32 %v2609, 1.442695
  %v2646 = vpow.pop %v2645
  %v2647 = vmul.f32 %v2610, 1.442695
  %v2648 = vpow.pop %v2647
  %v2649 = vmul.f32 %v2611, 1.442695
  %v2650 = vpow.pop %v2649
  %v2651 = vmul.f32 %v2612, 1.442695
  %v2652 = vpow.pop %v2651
  %v2653 = vmul.f32 %v2613, 1.442695
  %v2654 = vpow.pop %v2653
  %v2655 = vmul.f32 %v2614, 1.442695
  %v2656 = vpow.pop %v2655
  %v2657 = vmul.f32 %v2615, 1.442695
  %v2658 = vpow.pop %v2657
  %v2659 = vmul.f32 %v2616, 1.442695
  %v2660 = vpow.pop %v2659
  %v2661 = vmul.f32 %v2617, 1.442695
  %v2662 = vpow.pop %v2661
  %v2663 = vmul.f32 %v2618, 1.442695
  %v2664 = vpow.pop %v2663
  %v2665 = vmul.f32 %v2619, 1.442695
  %v2666 = vpow.pop %v2665
  %v2667 = vmul.f32 %v2620, 1.442695
  %v2668 = vpow.pop %v2667
  %v2669 = vmul.f32 %v2621, 1.442695
  %v2670 = vpow.pop %v2669
  %v2671 = vmul.f32 %v2622, 1.442695
  %v2672 = vpow.pop %v2671
  %v2673 = vmul.f32 %v2623, 1.442695
  %v2674 = vpow.pop %v2673
  %v2675 = vmul.f32 %v2624, 1.442695
  %v2676 = vpow.pop %v2675
  %v2677 = vmul.f32 %v2625, 1.442695
  %v2678 = vpow.pop %v2677
  %v2679 = vmul.f32 %v2626, 1.442695
  %v2680 = vpow.pop %v2679
  %v2681 = vmul.f32 %v2627, 1.442695
  %v2682 = vpow.pop %v2681
  %v2683 = vmul.f32 %v2628, 1.442695
  %v2684 = vpow.pop %v2683
  %v2685 = vmul.f32 %v2629, 1.442695
  %v2686 = vpow.pop %v2685
  %v2687 = vmul.f32 %v2630, 1.442695
  %v2688 = vpow.pop %v2687
  %v2689 = vmul.f32 %v2631, 1.442695
  %v2690 = vpow.pop %v2689
  %v2691 = vmul.f32 %v2632, 1.442695
  %v2692 = vpow.pop %v2691
  %v2693 = vmul.f32 %v2633, 1.442695
  %v2694 = vpow.pop %v2693
  %v2695 = vmul.f32 %v2634, 1.442695
  %v2696 = vpow.pop %v2695
  %v2697 = vmul.f32 %v2635, 1.442695
  %v2698 = vpow.pop %v2697
  %v2699 = vmul.f32 %v2636, 1.442695
  %v2700 = vpow.pop %v2699
  %2701 = vmatpush.xpose.msra.mxu0 %v2698
  %2702 = vmatpush.xpose.msra.mxu0 %v2694
  %2703 = vmatpush.xpose.msra.mxu0 %v2690
  %2704 = vmatpush.xpose.msra.mxu0 %v2686
  %2705 = vmatpush.xpose.msra.mxu0 %v2682
  %2706 = vmatpush.xpose.msra.mxu0 %v2678
  %2707 = vmatpush.xpose.msra.mxu0 %v2674
  %2708 = vmatpush.xpose.msra.mxu0 %v2670
  %2709 = vmatpush.xpose.msra.mxu0 %v2666
  %2710 = vmatpush.xpose.msra.mxu0 %v2662
  %2711 = vmatpush.xpose.msra.mxu0 %v2658
  %2712 = vmatpush.xpose.msra.mxu0 %v2654
  %2713 = vmatpush.xpose.msra.mxu0 %v2650
  %2714 = vmatpush.xpose.msra.mxu0 %v2646
  %2715 = vmatpush.xpose.msra.mxu0 %v2642
  %2716 = vmatpush.xpose.msra.mxu0 %v2638
  %2717 = vmatmul.f32.gmra.mxu0 %v2307
  %v2718 = vpop.f32.mrf.mxu0
  %v2719 = vadd.f32 0.0, %v2718
  %2720 = vmatmul.f32.gmra.mxu0 %v2310
  %v2721 = vpop.f32.mrf.mxu0
  %v2722 = vadd.f32 0.0, %v2721
  %2723 = vdwg.mxu0
  %2724 = vmatpush.xpose.msra.mxu0 %v2700
  %2725 = vmatpush.xpose.msra.mxu0 %v2696
  %2726 = vmatpush.xpose.msra.mxu0 %v2692
  %2727 = vmatpush.xpose.msra.mxu0 %v2688
  %2728 = vmatpush.xpose.msra.mxu0 %v2684
  %2729 = vmatpush.xpose.msra.mxu0 %v2680
  %2730 = vmatpush.xpose.msra.mxu0 %v2676
  %2731 = vmatpush.xpose.msra.mxu0 %v2672
  %2732 = vmatpush.xpose.msra.mxu0 %v2668
  %2733 = vmatpush.xpose.msra.mxu0 %v2664
  %2734 = vmatpush.xpose.msra.mxu0 %v2660
  %2735 = vmatpush.xpose.msra.mxu0 %v2656
  %2736 = vmatpush.xpose.msra.mxu0 %v2652
  %2737 = vmatpush.xpose.msra.mxu0 %v2648
  %2738 = vmatpush.xpose.msra.mxu0 %v2644
  %2739 = vmatpush.xpose.msra.mxu0 %v2640
  %2740 = vmatmul.f32.gmra.mxu0 %v2336
  %v2741 = vpop.f32.mrf.mxu0
  %v2742 = vadd.f32 %v2719, %v2741
  %2743 = vmatmul.f32.gmra.mxu0 %v2339
  %v2744 = vpop.f32.mrf.mxu0
  %v2745 = vadd.f32 %v2722, %v2744
  %2746 = vdwg.mxu0
  %2747 = vmatpush.xpose.msra.mxu0 %v2698
  %2748 = vmatpush.xpose.msra.mxu0 %v2694
  %2749 = vmatpush.xpose.msra.mxu0 %v2690
  %2750 = vmatpush.xpose.msra.mxu0 %v2686
  %2751 = vmatpush.xpose.msra.mxu0 %v2682
  %2752 = vmatpush.xpose.msra.mxu0 %v2678
  %2753 = vmatpush.xpose.msra.mxu0 %v2674
  %2754 = vmatpush.xpose.msra.mxu0 %v2670
  %2755 = vmatpush.xpose.msra.mxu0 %v2666
  %2756 = vmatpush.xpose.msra.mxu0 %v2662
  %2757 = vmatpush.xpose.msra.mxu0 %v2658
  %2758 = vmatpush.xpose.msra.mxu0 %v2654
  %2759 = vmatpush.xpose.msra.mxu0 %v2650
  %2760 = vmatpush.xpose.msra.mxu0 %v2646
  %2761 = vmatpush.xpose.msra.mxu0 %v2642
  %2762 = vmatpush.xpose.msra.mxu0 %v2638
  %2763 = vmatmul.f32.gmra.mxu0 1.0
  %v2764 = vpop.f32.mrf.mxu0
  %v2765 = vadd.f32 0.0, %v2764
  %2766 = vdwg.mxu0
  %2767 = vmatpush.xpose.msra.mxu0 %v2700
  %2768 = vmatpush.xpose.msra.mxu0 %v2696
  %2769 = vmatpush.xpose.msra.mxu0 %v2692
  %2770 = vmatpush.xpose.msra.mxu0 %v2688
  %2771 = vmatpush.xpose.msra.mxu0 %v2684
  %2772 = vmatpush.xpose.msra.mxu0 %v2680
  %2773 = vmatpush.xpose.msra.mxu0 %v2676
  %2774 = vmatpush.xpose.msra.mxu0 %v2672
  %2775 = vmatpush.xpose.msra.mxu0 %v2668
  %2776 = vmatpush.xpose.msra.mxu0 %v2664
  %2777 = vmatpush.xpose.msra.mxu0 %v2660
  %2778 = vmatpush.xpose.msra.mxu0 %v2656
  %2779 = vmatpush.xpose.msra.mxu0 %v2652
  %2780 = vmatpush.xpose.msra.mxu0 %v2648
  %2781 = vmatpush.xpose.msra.mxu0 %v2644
  %2782 = vmatpush.xpose.msra.mxu0 %v2640
  %2783 = vmatmul.f32.gmra.mxu0 1.0
  %v2784 = vpop.f32.mrf.mxu0
  %v2785 = vadd.f32 %v2765, %v2784
  %2786 = vdwg.mxu0
  %v2787 = vrcp.pop %v2785
  %v2788 = vmul.f32 %v2785, %v2787
  %v2789 = vsub.f32 1.0, %v2788
  %v2790 = vmul.f32 %v2787, %v2789
  %v2791 = vadd.f32 %v2787, %v2790
  %vm2792 = vweird.f32 %v2785
  %vm2793 = vweird.f32 %v2787
  %vm2794 = vmor %vm2792, %vm2793
  %v2795 = vsel %vm2794, %v2787, %v2791
  %v2796 = vand.u32 2147483647, %v2785
  %vm2797 = vcmp.eq.f32.partialorder %v2796, 8.507059e+37
  %v2798 = vand.u32 %v2785, 2147483648
  %v2799 = vor.u32 1.1754944e-38, %v2798
  %v2800 = vsel %vm2797, %v2799, %v2795
  %v2801 = vperm.slane %v2800, 0
  %v2802 = vmul.f32 %v2742, %v2801
  %v2803 = vmul.f32 %v2745, %v2801
  %2804 = vst [vmem:[#allocation2 + $0x10] sm:$0xff] %v2802
  %2805 = vst [vmem:[#allocation2 + $0x30] sm:$0xff] %v2803
  %2806 = vxpose.xlu0.b32.start [1/16] %v2247, 128
  %2807 = vxpose.xlu0.b32.cont [2/16] %v2250, 128
  %2808 = vxpose.xlu0.b32.cont [3/16] 0.0, 128
  %2809 = vxpose.xlu0.b32.cont [4/16] 0.0, 128
  %2810 = vxpose.xlu0.b32.cont [5/16] 0.0, 128
  %2811 = vxpose.xlu0.b32.cont [6/16] 0.0, 128
  %2812 = vxpose.xlu0.b32.cont [7/16] 0.0, 128
  %2813 = vxpose.xlu0.b32.cont [8/16] 0.0, 128
  %2814 = vxpose.xlu0.b32.cont [9/16] 0.0, 128
  %2815 = vxpose.xlu0.b32.cont [10/16] 0.0, 128
  %2816 = vxpose.xlu0.b32.cont [11/16] 0.0, 128
  %2817 = vxpose.xlu0.b32.cont [12/16] 0.0, 128
  %2818 = vxpose.xlu0.b32.cont [13/16] 0.0, 128
  %2819 = vxpose.xlu0.b32.cont [14/16] 0.0, 128
  %2820 = vxpose.xlu0.b32.cont [15/16] 0.0, 128
  %2821 = vxpose.xlu0.b32.end [16/16] 0.0, 128
  %v2822 = vpop.trf.xlu0
  %v2823 = vpop.trf.xlu0
  %v2824 = vpop.trf.xlu0
  %v2825 = vpop.trf.xlu0
  %v2826 = vpop.trf.xlu0
  %v2827 = vpop.trf.xlu0
  %v2828 = vpop.trf.xlu0
  %v2829 = vpop.trf.xlu0
  %v2830 = vpop.trf.xlu0
  %v2831 = vpop.trf.xlu0
  %v2832 = vpop.trf.xlu0
  %v2833 = vpop.trf.xlu0
  %v2834 = vpop.trf.xlu0
  %v2835 = vpop.trf.xlu0
  %v2836 = vpop.trf.xlu0
  %v2837 = vpop.trf.xlu0
  %v2839 = vsel %vm299, %v2822, 0
  %v2842 = vsel %vm299, %v2823, 0
  %v2845 = vsel %vm299, %v2824, 0
  %v2848 = vsel %vm299, %v2825, 0
  %v2851 = vsel %vm299, %v2826, 0
  %v2854 = vsel %vm299, %v2827, 0
  %v2857 = vsel %vm299, %v2828, 0
  %v2860 = vsel %vm299, %v2829, 0
  %v2863 = vsel %vm299, %v2830, 0
  %v2866 = vsel %vm299, %v2831, 0
  %v2869 = vsel %vm299, %v2832, 0
  %v2872 = vsel %vm299, %v2833, 0
  %v2875 = vsel %vm299, %v2834, 0
  %v2878 = vsel %vm299, %v2835, 0
  %v2881 = vsel %vm299, %v2836, 0
  %v2884 = vsel %vm299, %v2837, 0
  %2886 = vmatpush.msra.mxu0 0.0
  %2887 = vmatpush.msra.mxu0 0.0
  %2888 = vmatpush.msra.mxu0 0.0
  %2889 = vmatpush.msra.mxu0 0.0
  %2890 = vmatpush.msra.mxu0 0.0
  %2891 = vmatpush.msra.mxu0 0.0
  %2892 = vmatpush.msra.mxu0 0.0
  %2893 = vmatpush.msra.mxu0 0.0
  %2894 = vmatpush.msra.mxu0 0.0
  %2895 = vmatpush.msra.mxu0 0.0
  %2896 = vmatpush.msra.mxu0 0.0
  %2897 = vmatpush.msra.mxu0 0.0
  %2898 = vmatpush.msra.mxu0 0.0
  %2899 = vmatpush.msra.mxu0 0.0
  %2900 = vmatpush.msra.mxu0 %v2221
  %2901 = vmatpush.msra.mxu0 %v2218
  %2902 = vmatmul.f32.gmra.mxu0 %v2839
  %v2903 = vpop.f32.mrf.mxu0
  %v2904 = vadd.f32 0.0, %v2903
  %2905 = vmatmul.f32.gmra.mxu0 %v2842
  %v2906 = vpop.f32.mrf.mxu0
  %v2907 = vadd.f32 0.0, %v2906
  %2908 = vmatmul.f32.gmra.mxu0 %v2845
  %v2909 = vpop.f32.mrf.mxu0
  %v2910 = vadd.f32 0.0, %v2909
  %2911 = vmatmul.f32.gmra.mxu0 %v2848
  %v2912 = vpop.f32.mrf.mxu0
  %v2913 = vadd.f32 0.0, %v2912
  %2914 = vmatmul.f32.gmra.mxu0 %v2851
  %v2915 = vpop.f32.mrf.mxu0
  %v2916 = vadd.f32 0.0, %v2915
  %2917 = vmatmul.f32.gmra.mxu0 %v2854
  %v2918 = vpop.f32.mrf.mxu0
  %v2919 = vadd.f32 0.0, %v2918
  %2920 = vmatmul.f32.gmra.mxu0 %v2857
  %v2921 = vpop.f32.mrf.mxu0
  %v2922 = vadd.f32 0.0, %v2921
  %2923 = vmatmul.f32.gmra.mxu0 %v2860
  %v2924 = vpop.f32.mrf.mxu0
  %v2925 = vadd.f32 0.0, %v2924
  %2926 = vmatmul.f32.gmra.mxu0 %v2863
  %v2927 = vpop.f32.mrf.mxu0
  %v2928 = vadd.f32 0.0, %v2927
  %2929 = vmatmul.f32.gmra.mxu0 %v2866
  %v2930 = vpop.f32.mrf.mxu0
  %v2931 = vadd.f32 0.0, %v2930
  %2932 = vmatmul.f32.gmra.mxu0 %v2869
  %v2933 = vpop.f32.mrf.mxu0
  %v2934 = vadd.f32 0.0, %v2933
  %2935 = vmatmul.f32.gmra.mxu0 %v2872
  %v2936 = vpop.f32.mrf.mxu0
  %v2937 = vadd.f32 0.0, %v2936
  %2938 = vmatmul.f32.gmra.mxu0 %v2875
  %v2939 = vpop.f32.mrf.mxu0
  %v2940 = vadd.f32 0.0, %v2939
  %2941 = vmatmul.f32.gmra.mxu0 %v2878
  %v2942 = vpop.f32.mrf.mxu0
  %v2943 = vadd.f32 0.0, %v2942
  %2944 = vmatmul.f32.gmra.mxu0 %v2881
  %v2945 = vpop.f32.mrf.mxu0
  %v2946 = vadd.f32 0.0, %v2945
  %2947 = vmatmul.f32.gmra.mxu0 %v2884
  %v2948 = vpop.f32.mrf.mxu0
  %v2949 = vadd.f32 0.0, %v2948
  %2950 = vdwg.mxu0
  %2951 = vmatpush.msra.mxu0 0.0
  %2952 = vmatpush.msra.mxu0 0.0
  %2953 = vmatpush.msra.mxu0 0.0
  %2954 = vmatpush.msra.mxu0 0.0
  %2955 = vmatpush.msra.mxu0 0.0
  %2956 = vmatpush.msra.mxu0 0.0
  %2957 = vmatpush.msra.mxu0 0.0
  %2958 = vmatpush.msra.mxu0 0.0
  %2959 = vmatpush.msra.mxu0 0.0
  %2960 = vmatpush.msra.mxu0 0.0
  %2961 = vmatpush.msra.mxu0 0.0
  %2962 = vmatpush.msra.mxu0 0.0
  %2963 = vmatpush.msra.mxu0 0.0
  %2964 = vmatpush.msra.mxu0 0.0
  %2965 = vmatpush.msra.mxu0 %v2262
  %2966 = vmatpush.msra.mxu0 %v2259
  %2967 = vmatmul.f32.gmra.mxu0 %v2839
  %v2968 = vpop.f32.mrf.mxu0
  %v2969 = vadd.f32 0.0, %v2968
  %2970 = vmatmul.f32.gmra.mxu0 %v2842
  %v2971 = vpop.f32.mrf.mxu0
  %v2972 = vadd.f32 0.0, %v2971
  %2973 = vmatmul.f32.gmra.mxu0 %v2845
  %v2974 = vpop.f32.mrf.mxu0
  %v2975 = vadd.f32 0.0, %v2974
  %2976 = vmatmul.f32.gmra.mxu0 %v2848
  %v2977 = vpop.f32.mrf.mxu0
  %v2978 = vadd.f32 0.0, %v2977
  %2979 = vmatmul.f32.gmra.mxu0 %v2851
  %v2980 = vpop.f32.mrf.mxu0
  %v2981 = vadd.f32 0.0, %v2980
  %2982 = vmatmul.f32.gmra.mxu0 %v2854
  %v2983 = vpop.f32.mrf.mxu0
  %v2984 = vadd.f32 0.0, %v2983
  %2985 = vmatmul.f32.gmra.mxu0 %v2857
  %v2986 = vpop.f32.mrf.mxu0
  %v2987 = vadd.f32 0.0, %v2986
  %2988 = vmatmul.f32.gmra.mxu0 %v2860
  %v2989 = vpop.f32.mrf.mxu0
  %v2990 = vadd.f32 0.0, %v2989
  %2991 = vmatmul.f32.gmra.mxu0 %v2863
  %v2992 = vpop.f32.mrf.mxu0
  %v2993 = vadd.f32 0.0, %v2992
  %2994 = vmatmul.f32.gmra.mxu0 %v2866
  %v2995 = vpop.f32.mrf.mxu0
  %v2996 = vadd.f32 0.0, %v2995
  %2997 = vmatmul.f32.gmra.mxu0 %v2869
  %v2998 = vpop.f32.mrf.mxu0
  %v2999 = vadd.f32 0.0, %v2998
  %3000 = vmatmul.f32.gmra.mxu0 %v2872
  %v3001 = vpop.f32.mrf.mxu0
  %v3002 = vadd.f32 0.0, %v3001
  %3003 = vmatmul.f32.gmra.mxu0 %v2875
  %v3004 = vpop.f32.mrf.mxu0
  %v3005 = vadd.f32 0.0, %v3004
  %3006 = vmatmul.f32.gmra.mxu0 %v2878
  %v3007 = vpop.f32.mrf.mxu0
  %v3008 = vadd.f32 0.0, %v3007
  %3009 = vmatmul.f32.gmra.mxu0 %v2881
  %v3010 = vpop.f32.mrf.mxu0
  %v3011 = vadd.f32 0.0, %v3010
  %3012 = vmatmul.f32.gmra.mxu0 %v2884
  %v3013 = vpop.f32.mrf.mxu0
  %v3014 = vadd.f32 0.0, %v3013
  %3015 = vdwg.mxu0
  %v3016 = vmax.f32 %v2904, %v2969
  %3017 = vmax.xlane.f32.xlu0 %v3016
  %v3018 = vpop.xlane.xlu0 %3017
  %v3019 = vmax.f32 %v2907, %v2972
  %3020 = vmax.xlane.f32.xlu0 %v3019
  %v3021 = vpop.xlane.xlu0 %3020
  %v3022 = vmax.f32 %v2910, %v2975
  %3023 = vmax.xlane.f32.xlu0 %v3022
  %v3024 = vpop.xlane.xlu0 %3023
  %v3025 = vmax.f32 %v2913, %v2978
  %3026 = vmax.xlane.f32.xlu0 %v3025
  %v3027 = vpop.xlane.xlu0 %3026
  %v3028 = vmax.f32 %v2916, %v2981
  %3029 = vmax.xlane.f32.xlu0 %v3028
  %v3030 = vpop.xlane.xlu0 %3029
  %v3031 = vmax.f32 %v2919, %v2984
  %3032 = vmax.xlane.f32.xlu0 %v3031
  %v3033 = vpop.xlane.xlu0 %3032
  %v3034 = vmax.f32 %v2922, %v2987
  %3035 = vmax.xlane.f32.xlu0 %v3034
  %v3036 = vpop.xlane.xlu0 %3035
  %v3037 = vmax.f32 %v2925, %v2990
  %3038 = vmax.xlane.f32.xlu0 %v3037
  %v3039 = vpop.xlane.xlu0 %3038
  %v3040 = vmax.f32 %v2928, %v2993
  %3041 = vmax.xlane.f32.xlu0 %v3040
  %v3042 = vpop.xlane.xlu0 %3041
  %v3043 = vmax.f32 %v2931, %v2996
  %3044 = vmax.xlane.f32.xlu0 %v3043
  %v3045 = vpop.xlane.xlu0 %3044
  %v3046 = vmax.f32 %v2934, %v2999
  %3047 = vmax.xlane.f32.xlu0 %v3046
  %v3048 = vpop.xlane.xlu0 %3047
  %v3049 = vmax.f32 %v2937, %v3002
  %3050 = vmax.xlane.f32.xlu0 %v3049
  %v3051 = vpop.xlane.xlu0 %3050
  %v3052 = vmax.f32 %v2940, %v3005
  %3053 = vmax.xlane.f32.xlu0 %v3052
  %v3054 = vpop.xlane.xlu0 %3053
  %v3055 = vmax.f32 %v2943, %v3008
  %3056 = vmax.xlane.f32.xlu0 %v3055
  %v3057 = vpop.xlane.xlu0 %3056
  %v3058 = vmax.f32 %v2946, %v3011
  %3059 = vmax.xlane.f32.xlu0 %v3058
  %v3060 = vpop.xlane.xlu0 %3059
  %v3061 = vmax.f32 %v2949, %v3014
  %3062 = vmax.xlane.f32.xlu0 %v3061
  %v3063 = vpop.xlane.xlu0 %3062
  %v3064 = vsub.f32 %v2904, %v3018
  %v3065 = vsub.f32 %v2969, %v3018
  %v3066 = vsub.f32 %v2907, %v3021
  %v3067 = vsub.f32 %v2972, %v3021
  %v3068 = vsub.f32 %v2910, %v3024
  %v3069 = vsub.f32 %v2975, %v3024
  %v3070 = vsub.f32 %v2913, %v3027
  %v3071 = vsub.f32 %v2978, %v3027
  %v3072 = vsub.f32 %v2916, %v3030
  %v3073 = vsub.f32 %v2981, %v3030
  %v3074 = vsub.f32 %v2919, %v3033
  %v3075 = vsub.f32 %v2984, %v3033
  %v3076 = vsub.f32 %v2922, %v3036
  %v3077 = vsub.f32 %v2987, %v3036
  %v3078 = vsub.f32 %v2925, %v3039
  %v3079 = vsub.f32 %v2990, %v3039
  %v3080 = vsub.f32 %v2928, %v3042
  %v3081 = vsub.f32 %v2993, %v3042
  %v3082 = vsub.f32 %v2931, %v3045
  %v3083 = vsub.f32 %v2996, %v3045
  %v3084 = vsub.f32 %v2934, %v3048
  %v3085 = vsub.f32 %v2999, %v3048
  %v3086 = vsub.f32 %v2937, %v3051
  %v3087 = vsub.f32 %v3002, %v3051
  %v3088 = vsub.f32 %v2940, %v3054
  %v3089 = vsub.f32 %v3005, %v3054
  %v3090 = vsub.f32 %v2943, %v3057
  %v3091 = vsub.f32 %v3008, %v3057
  %v3092 = vsub.f32 %v2946, %v3060
  %v3093 = vsub.f32 %v3011, %v3060
  %v3094 = vsub.f32 %v2949, %v3063
  %v3095 = vsub.f32 %v3014, %v3063
  %v3096 = vmul.f32 %v3064, 1.442695
  %v3097 = vpow.pop %v3096
  %v3098 = vmul.f32 %v3065, 1.442695
  %v3099 = vpow.pop %v3098
  %v3100 = vmul.f32 %v3066, 1.442695
  %v3101 = vpow.pop %v3100
  %v3102 = vmul.f32 %v3067, 1.442695
  %v3103 = vpow.pop %v3102
  %v3104 = vmul.f32 %v3068, 1.442695
  %v3105 = vpow.pop %v3104
  %v3106 = vmul.f32 %v3069, 1.442695
  %v3107 = vpow.pop %v3106
  %v3108 = vmul.f32 %v3070, 1.442695
  %v3109 = vpow.pop %v3108
  %v3110 = vmul.f32 %v3071, 1.442695
  %v3111 = vpow.pop %v3110
  %v3112 = vmul.f32 %v3072, 1.442695
  %v3113 = vpow.pop %v3112
  %v3114 = vmul.f32 %v3073, 1.442695
  %v3115 = vpow.pop %v3114
  %v3116 = vmul.f32 %v3074, 1.442695
  %v3117 = vpow.pop %v3116
  %v3118 = vmul.f32 %v3075, 1.442695
  %v3119 = vpow.pop %v3118
  %v3120 = vmul.f32 %v3076, 1.442695
  %v3121 = vpow.pop %v3120
  %v3122 = vmul.f32 %v3077, 1.442695
  %v3123 = vpow.pop %v3122
  %v3124 = vmul.f32 %v3078, 1.442695
  %v3125 = vpow.pop %v3124
  %v3126 = vmul.f32 %v3079, 1.442695
  %v3127 = vpow.pop %v3126
  %v3128 = vmul.f32 %v3080, 1.442695
  %v3129 = vpow.pop %v3128
  %v3130 = vmul.f32 %v3081, 1.442695
  %v3131 = vpow.pop %v3130
  %v3132 = vmul.f32 %v3082, 1.442695
  %v3133 = vpow.pop %v3132
  %v3134 = vmul.f32 %v3083, 1.442695
  %v3135 = vpow.pop %v3134
  %v3136 = vmul.f32 %v3084, 1.442695
  %v3137 = vpow.pop %v3136
  %v3138 = vmul.f32 %v3085, 1.442695
  %v3139 = vpow.pop %v3138
  %v3140 = vmul.f32 %v3086, 1.442695
  %v3141 = vpow.pop %v3140
  %v3142 = vmul.f32 %v3087, 1.442695
  %v3143 = vpow.pop %v3142
  %v3144 = vmul.f32 %v3088, 1.442695
  %v3145 = vpow.pop %v3144
  %v3146 = vmul.f32 %v3089, 1.442695
  %v3147 = vpow.pop %v3146
  %v3148 = vmul.f32 %v3090, 1.442695
  %v3149 = vpow.pop %v3148
  %v3150 = vmul.f32 %v3091, 1.442695
  %v3151 = vpow.pop %v3150
  %v3152 = vmul.f32 %v3092, 1.442695
  %v3153 = vpow.pop %v3152
  %v3154 = vmul.f32 %v3093, 1.442695
  %v3155 = vpow.pop %v3154
  %v3156 = vmul.f32 %v3094, 1.442695
  %v3157 = vpow.pop %v3156
  %v3158 = vmul.f32 %v3095, 1.442695
  %v3159 = vpow.pop %v3158
  %3160 = vmatpush.xpose.msra.mxu0 %v3157
  %3161 = vmatpush.xpose.msra.mxu0 %v3153
  %3162 = vmatpush.xpose.msra.mxu0 %v3149
  %3163 = vmatpush.xpose.msra.mxu0 %v3145
  %3164 = vmatpush.xpose.msra.mxu0 %v3141
  %3165 = vmatpush.xpose.msra.mxu0 %v3137
  %3166 = vmatpush.xpose.msra.mxu0 %v3133
  %3167 = vmatpush.xpose.msra.mxu0 %v3129
  %3168 = vmatpush.xpose.msra.mxu0 %v3125
  %3169 = vmatpush.xpose.msra.mxu0 %v3121
  %3170 = vmatpush.xpose.msra.mxu0 %v3117
  %3171 = vmatpush.xpose.msra.mxu0 %v3113
  %3172 = vmatpush.xpose.msra.mxu0 %v3109
  %3173 = vmatpush.xpose.msra.mxu0 %v3105
  %3174 = vmatpush.xpose.msra.mxu0 %v3101
  %3175 = vmatpush.xpose.msra.mxu0 %v3097
  %3176 = vmatmul.f32.gmra.mxu0 %v2307
  %v3177 = vpop.f32.mrf.mxu0
  %v3178 = vadd.f32 0.0, %v3177
  %3179 = vmatmul.f32.gmra.mxu0 %v2310
  %v3180 = vpop.f32.mrf.mxu0
  %v3181 = vadd.f32 0.0, %v3180
  %3182 = vdwg.mxu0
  %3183 = vmatpush.xpose.msra.mxu0 %v3159
  %3184 = vmatpush.xpose.msra.mxu0 %v3155
  %3185 = vmatpush.xpose.msra.mxu0 %v3151
  %3186 = vmatpush.xpose.msra.mxu0 %v3147
  %3187 = vmatpush.xpose.msra.mxu0 %v3143
  %3188 = vmatpush.xpose.msra.mxu0 %v3139
  %3189 = vmatpush.xpose.msra.mxu0 %v3135
  %3190 = vmatpush.xpose.msra.mxu0 %v3131
  %3191 = vmatpush.xpose.msra.mxu0 %v3127
  %3192 = vmatpush.xpose.msra.mxu0 %v3123
  %3193 = vmatpush.xpose.msra.mxu0 %v3119
  %3194 = vmatpush.xpose.msra.mxu0 %v3115
  %3195 = vmatpush.xpose.msra.mxu0 %v3111
  %3196 = vmatpush.xpose.msra.mxu0 %v3107
  %3197 = vmatpush.xpose.msra.mxu0 %v3103
  %3198 = vmatpush.xpose.msra.mxu0 %v3099
  %3199 = vmatmul.f32.gmra.mxu0 %v2336
  %v3200 = vpop.f32.mrf.mxu0
  %v3201 = vadd.f32 %v3178, %v3200
  %3202 = vmatmul.f32.gmra.mxu0 %v2339
  %v3203 = vpop.f32.mrf.mxu0
  %v3204 = vadd.f32 %v3181, %v3203
  %3205 = vdwg.mxu0
  %3206 = vmatpush.xpose.msra.mxu0 %v3157
  %3207 = vmatpush.xpose.msra.mxu0 %v3153
  %3208 = vmatpush.xpose.msra.mxu0 %v3149
  %3209 = vmatpush.xpose.msra.mxu0 %v3145
  %3210 = vmatpush.xpose.msra.mxu0 %v3141
  %3211 = vmatpush.xpose.msra.mxu0 %v3137
  %3212 = vmatpush.xpose.msra.mxu0 %v3133
  %3213 = vmatpush.xpose.msra.mxu0 %v3129
  %3214 = vmatpush.xpose.msra.mxu0 %v3125
  %3215 = vmatpush.xpose.msra.mxu0 %v3121
  %3216 = vmatpush.xpose.msra.mxu0 %v3117
  %3217 = vmatpush.xpose.msra.mxu0 %v3113
  %3218 = vmatpush.xpose.msra.mxu0 %v3109
  %3219 = vmatpush.xpose.msra.mxu0 %v3105
  %3220 = vmatpush.xpose.msra.mxu0 %v3101
  %3221 = vmatpush.xpose.msra.mxu0 %v3097
  %3222 = vmatmul.f32.gmra.mxu0 1.0
  %v3223 = vpop.f32.mrf.mxu0
  %v3224 = vadd.f32 0.0, %v3223
  %3225 = vdwg.mxu0
  %3226 = vmatpush.xpose.msra.mxu0 %v3159
  %3227 = vmatpush.xpose.msra.mxu0 %v3155
  %3228 = vmatpush.xpose.msra.mxu0 %v3151
  %3229 = vmatpush.xpose.msra.mxu0 %v3147
  %3230 = vmatpush.xpose.msra.mxu0 %v3143
  %3231 = vmatpush.xpose.msra.mxu0 %v3139
  %3232 = vmatpush.xpose.msra.mxu0 %v3135
  %3233 = vmatpush.xpose.msra.mxu0 %v3131
  %3234 = vmatpush.xpose.msra.mxu0 %v3127
  %3235 = vmatpush.xpose.msra.mxu0 %v3123
  %3236 = vmatpush.xpose.msra.mxu0 %v3119
  %3237 = vmatpush.xpose.msra.mxu0 %v3115
  %3238 = vmatpush.xpose.msra.mxu0 %v3111
  %3239 = vmatpush.xpose.msra.mxu0 %v3107
  %3240 = vmatpush.xpose.msra.mxu0 %v3103
  %3241 = vmatpush.xpose.msra.mxu0 %v3099
  %3242 = vmatmul.f32.gmra.mxu0 1.0
  %v3243 = vpop.f32.mrf.mxu0
  %v3244 = vadd.f32 %v3224, %v3243
  %3245 = vdwg.mxu0
  %v3246 = vrcp.pop %v3244
  %v3247 = vmul.f32 %v3244, %v3246
  %v3248 = vsub.f32 1.0, %v3247
  %v3249 = vmul.f32 %v3246, %v3248
  %v3250 = vadd.f32 %v3246, %v3249
  %vm3251 = vweird.f32 %v3244
  %vm3252 = vweird.f32 %v3246
  %vm3253 = vmor %vm3251, %vm3252
  %v3254 = vsel %vm3253, %v3246, %v3250
  %v3255 = vand.u32 2147483647, %v3244
  %vm3256 = vcmp.eq.f32.partialorder %v3255, 8.507059e+37
  %v3257 = vand.u32 %v3244, 2147483648
  %v3258 = vor.u32 1.1754944e-38, %v3257
  %v3259 = vsel %vm3256, %v3258, %v3254
  %v3260 = vperm.slane %v3259, 0
  %v3261 = vmul.f32 %v3201, %v3260
  %v3262 = vmul.f32 %v3204, %v3260
  %3263 = vst [vmem:[#allocation2 + $0x18] sm:$0xff] %v3261
  %3264 = vst [vmem:[#allocation2 + $0x38] sm:$0xff] %v3262
  %3265 = vxpose.xlu0.b32.start [1/16] %v2212, 128
  %3266 = vxpose.xlu0.b32.cont [2/16] %v2215, 128
  %3267 = vxpose.xlu0.b32.cont [3/16] 0.0, 128
  %3268 = vxpose.xlu0.b32.cont [4/16] 0.0, 128
  %3269 = vxpose.xlu0.b32.cont [5/16] 0.0, 128
  %3270 = vxpose.xlu0.b32.cont [6/16] 0.0, 128
  %3271 = vxpose.xlu0.b32.cont [7/16] 0.0, 128
  %3272 = vxpose.xlu0.b32.cont [8/16] 0.0, 128
  %3273 = vxpose.xlu0.b32.cont [9/16] 0.0, 128
  %3274 = vxpose.xlu0.b32.cont [10/16] 0.0, 128
  %3275 = vxpose.xlu0.b32.cont [11/16] 0.0, 128
  %3276 = vxpose.xlu0.b32.cont [12/16] 0.0, 128
  %3277 = vxpose.xlu0.b32.cont [13/16] 0.0, 128
  %3278 = vxpose.xlu0.b32.cont [14/16] 0.0, 128
  %3279 = vxpose.xlu0.b32.cont [15/16] 0.0, 128
  %3280 = vxpose.xlu0.b32.end [16/16] 0.0, 128
  %v3281 = vpop.trf.xlu0
  %v3282 = vpop.trf.xlu0
  %v3283 = vpop.trf.xlu0
  %v3284 = vpop.trf.xlu0
  %v3285 = vpop.trf.xlu0
  %v3286 = vpop.trf.xlu0
  %v3287 = vpop.trf.xlu0
  %v3288 = vpop.trf.xlu0
  %v3289 = vpop.trf.xlu0
  %v3290 = vpop.trf.xlu0
  %v3291 = vpop.trf.xlu0
  %v3292 = vpop.trf.xlu0
  %v3293 = vpop.trf.xlu0
  %v3294 = vpop.trf.xlu0
  %v3295 = vpop.trf.xlu0
  %v3296 = vpop.trf.xlu0
  %v3298 = vsel %vm299, %v3281, 0
  %v3301 = vsel %vm299, %v3282, 0
  %v3304 = vsel %vm299, %v3283, 0
  %v3307 = vsel %vm299, %v3284, 0
  %v3310 = vsel %vm299, %v3285, 0
  %v3313 = vsel %vm299, %v3286, 0
  %v3316 = vsel %vm299, %v3287, 0
  %v3319 = vsel %vm299, %v3288, 0
  %v3322 = vsel %vm299, %v3289, 0
  %v3325 = vsel %vm299, %v3290, 0
  %v3328 = vsel %vm299, %v3291, 0
  %v3331 = vsel %vm299, %v3292, 0
  %v3334 = vsel %vm299, %v3293, 0
  %v3337 = vsel %vm299, %v3294, 0
  %v3340 = vsel %vm299, %v3295, 0
  %v3343 = vsel %vm299, %v3296, 0
  %3345 = vmatpush.msra.mxu0 0.0
  %3346 = vmatpush.msra.mxu0 0.0
  %3347 = vmatpush.msra.mxu0 0.0
  %3348 = vmatpush.msra.mxu0 0.0
  %3349 = vmatpush.msra.mxu0 0.0
  %3350 = vmatpush.msra.mxu0 0.0
  %3351 = vmatpush.msra.mxu0 0.0
  %3352 = vmatpush.msra.mxu0 0.0
  %3353 = vmatpush.msra.mxu0 0.0
  %3354 = vmatpush.msra.mxu0 0.0
  %3355 = vmatpush.msra.mxu0 0.0
  %3356 = vmatpush.msra.mxu0 0.0
  %3357 = vmatpush.msra.mxu0 0.0
  %3358 = vmatpush.msra.mxu0 0.0
  %3359 = vmatpush.msra.mxu0 %v2227
  %3360 = vmatpush.msra.mxu0 %v2224
  %3361 = vmatmul.f32.gmra.mxu0 %v3298
  %v3362 = vpop.f32.mrf.mxu0
  %v3363 = vadd.f32 0.0, %v3362
  %3364 = vmatmul.f32.gmra.mxu0 %v3301
  %v3365 = vpop.f32.mrf.mxu0
  %v3366 = vadd.f32 0.0, %v3365
  %3367 = vmatmul.f32.gmra.mxu0 %v3304
  %v3368 = vpop.f32.mrf.mxu0
  %v3369 = vadd.f32 0.0, %v3368
  %3370 = vmatmul.f32.gmra.mxu0 %v3307
  %v3371 = vpop.f32.mrf.mxu0
  %v3372 = vadd.f32 0.0, %v3371
  %3373 = vmatmul.f32.gmra.mxu0 %v3310
  %v3374 = vpop.f32.mrf.mxu0
  %v3375 = vadd.f32 0.0, %v3374
  %3376 = vmatmul.f32.gmra.mxu0 %v3313
  %v3377 = vpop.f32.mrf.mxu0
  %v3378 = vadd.f32 0.0, %v3377
  %3379 = vmatmul.f32.gmra.mxu0 %v3316
  %v3380 = vpop.f32.mrf.mxu0
  %v3381 = vadd.f32 0.0, %v3380
  %3382 = vmatmul.f32.gmra.mxu0 %v3319
  %v3383 = vpop.f32.mrf.mxu0
  %v3384 = vadd.f32 0.0, %v3383
  %3385 = vmatmul.f32.gmra.mxu0 %v3322
  %v3386 = vpop.f32.mrf.mxu0
  %v3387 = vadd.f32 0.0, %v3386
  %3388 = vmatmul.f32.gmra.mxu0 %v3325
  %v3389 = vpop.f32.mrf.mxu0
  %v3390 = vadd.f32 0.0, %v3389
  %3391 = vmatmul.f32.gmra.mxu0 %v3328
  %v3392 = vpop.f32.mrf.mxu0
  %v3393 = vadd.f32 0.0, %v3392
  %3394 = vmatmul.f32.gmra.mxu0 %v3331
  %v3395 = vpop.f32.mrf.mxu0
  %v3396 = vadd.f32 0.0, %v3395
  %3397 = vmatmul.f32.gmra.mxu0 %v3334
  %v3398 = vpop.f32.mrf.mxu0
  %v3399 = vadd.f32 0.0, %v3398
  %3400 = vmatmul.f32.gmra.mxu0 %v3337
  %v3401 = vpop.f32.mrf.mxu0
  %v3402 = vadd.f32 0.0, %v3401
  %3403 = vmatmul.f32.gmra.mxu0 %v3340
  %v3404 = vpop.f32.mrf.mxu0
  %v3405 = vadd.f32 0.0, %v3404
  %3406 = vmatmul.f32.gmra.mxu0 %v3343
  %v3407 = vpop.f32.mrf.mxu0
  %v3408 = vadd.f32 0.0, %v3407
  %3409 = vdwg.mxu0
  %3410 = vmatpush.msra.mxu0 0.0
  %3411 = vmatpush.msra.mxu0 0.0
  %3412 = vmatpush.msra.mxu0 0.0
  %3413 = vmatpush.msra.mxu0 0.0
  %3414 = vmatpush.msra.mxu0 0.0
  %3415 = vmatpush.msra.mxu0 0.0
  %3416 = vmatpush.msra.mxu0 0.0
  %3417 = vmatpush.msra.mxu0 0.0
  %3418 = vmatpush.msra.mxu0 0.0
  %3419 = vmatpush.msra.mxu0 0.0
  %3420 = vmatpush.msra.mxu0 0.0
  %3421 = vmatpush.msra.mxu0 0.0
  %3422 = vmatpush.msra.mxu0 0.0
  %3423 = vmatpush.msra.mxu0 0.0
  %3424 = vmatpush.msra.mxu0 %v2268
  %3425 = vmatpush.msra.mxu0 %v2265
  %3426 = vmatmul.f32.gmra.mxu0 %v3298
  %v3427 = vpop.f32.mrf.mxu0
  %v3428 = vadd.f32 0.0, %v3427
  %3429 = vmatmul.f32.gmra.mxu0 %v3301
  %v3430 = vpop.f32.mrf.mxu0
  %v3431 = vadd.f32 0.0, %v3430
  %3432 = vmatmul.f32.gmra.mxu0 %v3304
  %v3433 = vpop.f32.mrf.mxu0
  %v3434 = vadd.f32 0.0, %v3433
  %3435 = vmatmul.f32.gmra.mxu0 %v3307
  %v3436 = vpop.f32.mrf.mxu0
  %v3437 = vadd.f32 0.0, %v3436
  %3438 = vmatmul.f32.gmra.mxu0 %v3310
  %v3439 = vpop.f32.mrf.mxu0
  %v3440 = vadd.f32 0.0, %v3439
  %3441 = vmatmul.f32.gmra.mxu0 %v3313
  %v3442 = vpop.f32.mrf.mxu0
  %v3443 = vadd.f32 0.0, %v3442
  %3444 = vmatmul.f32.gmra.mxu0 %v3316
  %v3445 = vpop.f32.mrf.mxu0
  %v3446 = vadd.f32 0.0, %v3445
  %3447 = vmatmul.f32.gmra.mxu0 %v3319
  %v3448 = vpop.f32.mrf.mxu0
  %v3449 = vadd.f32 0.0, %v3448
  %3450 = vmatmul.f32.gmra.mxu0 %v3322
  %v3451 = vpop.f32.mrf.mxu0
  %v3452 = vadd.f32 0.0, %v3451
  %3453 = vmatmul.f32.gmra.mxu0 %v3325
  %v3454 = vpop.f32.mrf.mxu0
  %v3455 = vadd.f32 0.0, %v3454
  %3456 = vmatmul.f32.gmra.mxu0 %v3328
  %v3457 = vpop.f32.mrf.mxu0
  %v3458 = vadd.f32 0.0, %v3457
  %3459 = vmatmul.f32.gmra.mxu0 %v3331
  %v3460 = vpop.f32.mrf.mxu0
  %v3461 = vadd.f32 0.0, %v3460
  %3462 = vmatmul.f32.gmra.mxu0 %v3334
  %v3463 = vpop.f32.mrf.mxu0
  %v3464 = vadd.f32 0.0, %v3463
  %3465 = vmatmul.f32.gmra.mxu0 %v3337
  %v3466 = vpop.f32.mrf.mxu0
  %v3467 = vadd.f32 0.0, %v3466
  %3468 = vmatmul.f32.gmra.mxu0 %v3340
  %v3469 = vpop.f32.mrf.mxu0
  %v3470 = vadd.f32 0.0, %v3469
  %3471 = vmatmul.f32.gmra.mxu0 %v3343
  %v3472 = vpop.f32.mrf.mxu0
  %v3473 = vadd.f32 0.0, %v3472
  %3474 = vdwg.mxu0
  %v3475 = vmax.f32 %v3363, %v3428
  %3476 = vmax.xlane.f32.xlu0 %v3475
  %v3477 = vpop.xlane.xlu0 %3476
  %v3478 = vmax.f32 %v3366, %v3431
  %3479 = vmax.xlane.f32.xlu0 %v3478
  %v3480 = vpop.xlane.xlu0 %3479
  %v3481 = vmax.f32 %v3369, %v3434
  %3482 = vmax.xlane.f32.xlu0 %v3481
  %v3483 = vpop.xlane.xlu0 %3482
  %v3484 = vmax.f32 %v3372, %v3437
  %3485 = vmax.xlane.f32.xlu0 %v3484
  %v3486 = vpop.xlane.xlu0 %3485
  %v3487 = vmax.f32 %v3375, %v3440
  %3488 = vmax.xlane.f32.xlu0 %v3487
  %v3489 = vpop.xlane.xlu0 %3488
  %v3490 = vmax.f32 %v3378, %v3443
  %3491 = vmax.xlane.f32.xlu0 %v3490
  %v3492 = vpop.xlane.xlu0 %3491
  %v3493 = vmax.f32 %v3381, %v3446
  %3494 = vmax.xlane.f32.xlu0 %v3493
  %v3495 = vpop.xlane.xlu0 %3494
  %v3496 = vmax.f32 %v3384, %v3449
  %3497 = vmax.xlane.f32.xlu0 %v3496
  %v3498 = vpop.xlane.xlu0 %3497
  %v3499 = vmax.f32 %v3387, %v3452
  %3500 = vmax.xlane.f32.xlu0 %v3499
  %v3501 = vpop.xlane.xlu0 %3500
  %v3502 = vmax.f32 %v3390, %v3455
  %3503 = vmax.xlane.f32.xlu0 %v3502
  %v3504 = vpop.xlane.xlu0 %3503
  %v3505 = vmax.f32 %v3393, %v3458
  %3506 = vmax.xlane.f32.xlu0 %v3505
  %v3507 = vpop.xlane.xlu0 %3506
  %v3508 = vmax.f32 %v3396, %v3461
  %3509 = vmax.xlane.f32.xlu0 %v3508
  %v3510 = vpop.xlane.xlu0 %3509
  %v3511 = vmax.f32 %v3399, %v3464
  %3512 = vmax.xlane.f32.xlu0 %v3511
  %v3513 = vpop.xlane.xlu0 %3512
  %v3514 = vmax.f32 %v3402, %v3467
  %3515 = vmax.xlane.f32.xlu0 %v3514
  %v3516 = vpop.xlane.xlu0 %3515
  %v3517 = vmax.f32 %v3405, %v3470
  %3518 = vmax.xlane.f32.xlu0 %v3517
  %v3519 = vpop.xlane.xlu0 %3518
  %v3520 = vmax.f32 %v3408, %v3473
  %3521 = vmax.xlane.f32.xlu0 %v3520
  %v3522 = vpop.xlane.xlu0 %3521
  %v3523 = vsub.f32 %v3363, %v3477
  %v3524 = vsub.f32 %v3428, %v3477
  %v3525 = vsub.f32 %v3366, %v3480
  %v3526 = vsub.f32 %v3431, %v3480
  %v3527 = vsub.f32 %v3369, %v3483
  %v3528 = vsub.f32 %v3434, %v3483
  %v3529 = vsub.f32 %v3372, %v3486
  %v3530 = vsub.f32 %v3437, %v3486
  %v3531 = vsub.f32 %v3375, %v3489
  %v3532 = vsub.f32 %v3440, %v3489
  %v3533 = vsub.f32 %v3378, %v3492
  %v3534 = vsub.f32 %v3443, %v3492
  %v3535 = vsub.f32 %v3381, %v3495
  %v3536 = vsub.f32 %v3446, %v3495
  %v3537 = vsub.f32 %v3384, %v3498
  %v3538 = vsub.f32 %v3449, %v3498
  %v3539 = vsub.f32 %v3387, %v3501
  %v3540 = vsub.f32 %v3452, %v3501
  %v3541 = vsub.f32 %v3390, %v3504
  %v3542 = vsub.f32 %v3455, %v3504
  %v3543 = vsub.f32 %v3393, %v3507
  %v3544 = vsub.f32 %v3458, %v3507
  %v3545 = vsub.f32 %v3396, %v3510
  %v3546 = vsub.f32 %v3461, %v3510
  %v3547 = vsub.f32 %v3399, %v3513
  %v3548 = vsub.f32 %v3464, %v3513
  %v3549 = vsub.f32 %v3402, %v3516
  %v3550 = vsub.f32 %v3467, %v3516
  %v3551 = vsub.f32 %v3405, %v3519
  %v3552 = vsub.f32 %v3470, %v3519
  %v3553 = vsub.f32 %v3408, %v3522
  %v3554 = vsub.f32 %v3473, %v3522
  %v3555 = vmul.f32 %v3523, 1.442695
  %v3556 = vpow.pop %v3555
  %v3557 = vmul.f32 %v3524, 1.442695
  %v3558 = vpow.pop %v3557
  %v3559 = vmul.f32 %v3525, 1.442695
  %v3560 = vpow.pop %v3559
  %v3561 = vmul.f32 %v3526, 1.442695
  %v3562 = vpow.pop %v3561
  %v3563 = vmul.f32 %v3527, 1.442695
  %v3564 = vpow.pop %v3563
  %v3565 = vmul.f32 %v3528, 1.442695
  %v3566 = vpow.pop %v3565
  %v3567 = vmul.f32 %v3529, 1.442695
  %v3568 = vpow.pop %v3567
  %v3569 = vmul.f32 %v3530, 1.442695
  %v3570 = vpow.pop %v3569
  %v3571 = vmul.f32 %v3531, 1.442695
  %v3572 = vpow.pop %v3571
  %v3573 = vmul.f32 %v3532, 1.442695
  %v3574 = vpow.pop %v3573
  %v3575 = vmul.f32 %v3533, 1.442695
  %v3576 = vpow.pop %v3575
  %v3577 = vmul.f32 %v3534, 1.442695
  %v3578 = vpow.pop %v3577
  %v3579 = vmul.f32 %v3535, 1.442695
  %v3580 = vpow.pop %v3579
  %v3581 = vmul.f32 %v3536, 1.442695
  %v3582 = vpow.pop %v3581
  %v3583 = vmul.f32 %v3537, 1.442695
  %v3584 = vpow.pop %v3583
  %v3585 = vmul.f32 %v3538, 1.442695
  %v3586 = vpow.pop %v3585
  %v3587 = vmul.f32 %v3539, 1.442695
  %v3588 = vpow.pop %v3587
  %v3589 = vmul.f32 %v3540, 1.442695
  %v3590 = vpow.pop %v3589
  %v3591 = vmul.f32 %v3541, 1.442695
  %v3592 = vpow.pop %v3591
  %v3593 = vmul.f32 %v3542, 1.442695
  %v3594 = vpow.pop %v3593
  %v3595 = vmul.f32 %v3543, 1.442695
  %v3596 = vpow.pop %v3595
  %v3597 = vmul.f32 %v3544, 1.442695
  %v3598 = vpow.pop %v3597
  %v3599 = vmul.f32 %v3545, 1.442695
  %v3600 = vpow.pop %v3599
  %v3601 = vmul.f32 %v3546, 1.442695
  %v3602 = vpow.pop %v3601
  %v3603 = vmul.f32 %v3547, 1.442695
  %v3604 = vpow.pop %v3603
  %v3605 = vmul.f32 %v3548, 1.442695
  %v3606 = vpow.pop %v3605
  %v3607 = vmul.f32 %v3549, 1.442695
  %v3608 = vpow.pop %v3607
  %v3609 = vmul.f32 %v3550, 1.442695
  %v3610 = vpow.pop %v3609
  %v3611 = vmul.f32 %v3551, 1.442695
  %v3612 = vpow.pop %v3611
  %v3613 = vmul.f32 %v3552, 1.442695
  %v3614 = vpow.pop %v3613
  %v3615 = vmul.f32 %v3553, 1.442695
  %v3616 = vpow.pop %v3615
  %v3617 = vmul.f32 %v3554, 1.442695
  %v3618 = vpow.pop %v3617
  %3619 = vmatpush.xpose.msra.mxu0 %v3616
  %3620 = vmatpush.xpose.msra.mxu0 %v3612
  %3621 = vmatpush.xpose.msra.mxu0 %v3608
  %3622 = vmatpush.xpose.msra.mxu0 %v3604
  %3623 = vmatpush.xpose.msra.mxu0 %v3600
  %3624 = vmatpush.xpose.msra.mxu0 %v3596
  %3625 = vmatpush.xpose.msra.mxu0 %v3592
  %3626 = vmatpush.xpose.msra.mxu0 %v3588
  %3627 = vmatpush.xpose.msra.mxu0 %v3584
  %3628 = vmatpush.xpose.msra.mxu0 %v3580
  %3629 = vmatpush.xpose.msra.mxu0 %v3576
  %3630 = vmatpush.xpose.msra.mxu0 %v3572
  %3631 = vmatpush.xpose.msra.mxu0 %v3568
  %3632 = vmatpush.xpose.msra.mxu0 %v3564
  %3633 = vmatpush.xpose.msra.mxu0 %v3560
  %3634 = vmatpush.xpose.msra.mxu0 %v3556
  %3635 = vmatmul.f32.gmra.mxu0 %v2313
  %v3636 = vpop.f32.mrf.mxu0
  %v3637 = vadd.f32 0.0, %v3636
  %3638 = vmatmul.f32.gmra.mxu0 %v2316
  %v3639 = vpop.f32.mrf.mxu0
  %v3640 = vadd.f32 0.0, %v3639
  %3641 = vdwg.mxu0
  %3642 = vmatpush.xpose.msra.mxu0 %v3618
  %3643 = vmatpush.xpose.msra.mxu0 %v3614
  %3644 = vmatpush.xpose.msra.mxu0 %v3610
  %3645 = vmatpush.xpose.msra.mxu0 %v3606
  %3646 = vmatpush.xpose.msra.mxu0 %v3602
  %3647 = vmatpush.xpose.msra.mxu0 %v3598
  %3648 = vmatpush.xpose.msra.mxu0 %v3594
  %3649 = vmatpush.xpose.msra.mxu0 %v3590
  %3650 = vmatpush.xpose.msra.mxu0 %v3586
  %3651 = vmatpush.xpose.msra.mxu0 %v3582
  %3652 = vmatpush.xpose.msra.mxu0 %v3578
  %3653 = vmatpush.xpose.msra.mxu0 %v3574
  %3654 = vmatpush.xpose.msra.mxu0 %v3570
  %3655 = vmatpush.xpose.msra.mxu0 %v3566
  %3656 = vmatpush.xpose.msra.mxu0 %v3562
  %3657 = vmatpush.xpose.msra.mxu0 %v3558
  %3658 = vmatmul.f32.gmra.mxu0 %v2342
  %v3659 = vpop.f32.mrf.mxu0
  %v3660 = vadd.f32 %v3637, %v3659
  %3661 = vmatmul.f32.gmra.mxu0 %v2345
  %v3662 = vpop.f32.mrf.mxu0
  %v3663 = vadd.f32 %v3640, %v3662
  %3664 = vdwg.mxu0
  %3665 = vmatpush.xpose.msra.mxu0 %v3616
  %3666 = vmatpush.xpose.msra.mxu0 %v3612
  %3667 = vmatpush.xpose.msra.mxu0 %v3608
  %3668 = vmatpush.xpose.msra.mxu0 %v3604
  %3669 = vmatpush.xpose.msra.mxu0 %v3600
  %3670 = vmatpush.xpose.msra.mxu0 %v3596
  %3671 = vmatpush.xpose.msra.mxu0 %v3592
  %3672 = vmatpush.xpose.msra.mxu0 %v3588
  %3673 = vmatpush.xpose.msra.mxu0 %v3584
  %3674 = vmatpush.xpose.msra.mxu0 %v3580
  %3675 = vmatpush.xpose.msra.mxu0 %v3576
  %3676 = vmatpush.xpose.msra.mxu0 %v3572
  %3677 = vmatpush.xpose.msra.mxu0 %v3568
  %3678 = vmatpush.xpose.msra.mxu0 %v3564
  %3679 = vmatpush.xpose.msra.mxu0 %v3560
  %3680 = vmatpush.xpose.msra.mxu0 %v3556
  %3681 = vmatmul.f32.gmra.mxu0 1.0
  %v3682 = vpop.f32.mrf.mxu0
  %v3683 = vadd.f32 0.0, %v3682
  %3684 = vdwg.mxu0
  %3685 = vmatpush.xpose.msra.mxu0 %v3618
  %3686 = vmatpush.xpose.msra.mxu0 %v3614
  %3687 = vmatpush.xpose.msra.mxu0 %v3610
  %3688 = vmatpush.xpose.msra.mxu0 %v3606
  %3689 = vmatpush.xpose.msra.mxu0 %v3602
  %3690 = vmatpush.xpose.msra.mxu0 %v3598
  %3691 = vmatpush.xpose.msra.mxu0 %v3594
  %3692 = vmatpush.xpose.msra.mxu0 %v3590
  %3693 = vmatpush.xpose.msra.mxu0 %v3586
  %3694 = vmatpush.xpose.msra.mxu0 %v3582
  %3695 = vmatpush.xpose.msra.mxu0 %v3578
  %3696 = vmatpush.xpose.msra.mxu0 %v3574
  %3697 = vmatpush.xpose.msra.mxu0 %v3570
  %3698 = vmatpush.xpose.msra.mxu0 %v3566
  %3699 = vmatpush.xpose.msra.mxu0 %v3562
  %3700 = vmatpush.xpose.msra.mxu0 %v3558
  %3701 = vmatmul.f32.gmra.mxu0 1.0
  %v3702 = vpop.f32.mrf.mxu0
  %v3703 = vadd.f32 %v3683, %v3702
  %3704 = vdwg.mxu0
  %v3705 = vrcp.pop %v3703
  %v3706 = vmul.f32 %v3703, %v3705
  %v3707 = vsub.f32 1.0, %v3706
  %v3708 = vmul.f32 %v3705, %v3707
  %v3709 = vadd.f32 %v3705, %v3708
  %vm3710 = vweird.f32 %v3703
  %vm3711 = vweird.f32 %v3705
  %vm3712 = vmor %vm3710, %vm3711
  %v3713 = vsel %vm3712, %v3705, %v3709
  %v3714 = vand.u32 2147483647, %v3703
  %vm3715 = vcmp.eq.f32.partialorder %v3714, 8.507059e+37
  %v3716 = vand.u32 %v3703, 2147483648
  %v3717 = vor.u32 1.1754944e-38, %v3716
  %v3718 = vsel %vm3715, %v3717, %v3713
  %v3719 = vperm.slane %v3718, 0
  %v3720 = vmul.f32 %v3660, %v3719
  %v3721 = vmul.f32 %v3663, %v3719
  %3722 = vst [vmem:[#allocation2 + $0x50] sm:$0xff] %v3720
  %3723 = vst [vmem:[#allocation2 + $0x70] sm:$0xff] %v3721
  %3724 = vxpose.xlu0.b32.start [1/16] %v2253, 128
  %3725 = vxpose.xlu0.b32.cont [2/16] %v2256, 128
  %3726 = vxpose.xlu0.b32.cont [3/16] 0.0, 128
  %3727 = vxpose.xlu0.b32.cont [4/16] 0.0, 128
  %3728 = vxpose.xlu0.b32.cont [5/16] 0.0, 128
  %3729 = vxpose.xlu0.b32.cont [6/16] 0.0, 128
  %3730 = vxpose.xlu0.b32.cont [7/16] 0.0, 128
  %3731 = vxpose.xlu0.b32.cont [8/16] 0.0, 128
  %3732 = vxpose.xlu0.b32.cont [9/16] 0.0, 128
  %3733 = vxpose.xlu0.b32.cont [10/16] 0.0, 128
  %3734 = vxpose.xlu0.b32.cont [11/16] 0.0, 128
  %3735 = vxpose.xlu0.b32.cont [12/16] 0.0, 128
  %3736 = vxpose.xlu0.b32.cont [13/16] 0.0, 128
  %3737 = vxpose.xlu0.b32.cont [14/16] 0.0, 128
  %3738 = vxpose.xlu0.b32.cont [15/16] 0.0, 128
  %3739 = vxpose.xlu0.b32.end [16/16] 0.0, 128
  %v3740 = vpop.trf.xlu0
  %v3741 = vpop.trf.xlu0
  %v3742 = vpop.trf.xlu0
  %v3743 = vpop.trf.xlu0
  %v3744 = vpop.trf.xlu0
  %v3745 = vpop.trf.xlu0
  %v3746 = vpop.trf.xlu0
  %v3747 = vpop.trf.xlu0
  %v3748 = vpop.trf.xlu0
  %v3749 = vpop.trf.xlu0
  %v3750 = vpop.trf.xlu0
  %v3751 = vpop.trf.xlu0
  %v3752 = vpop.trf.xlu0
  %v3753 = vpop.trf.xlu0
  %v3754 = vpop.trf.xlu0
  %v3755 = vpop.trf.xlu0
  %v3757 = vsel %vm299, %v3740, 0
  %v3760 = vsel %vm299, %v3741, 0
  %v3763 = vsel %vm299, %v3742, 0
  %v3766 = vsel %vm299, %v3743, 0
  %v3769 = vsel %vm299, %v3744, 0
  %v3772 = vsel %vm299, %v3745, 0
  %v3775 = vsel %vm299, %v3746, 0
  %v3778 = vsel %vm299, %v3747, 0
  %v3781 = vsel %vm299, %v3748, 0
  %v3784 = vsel %vm299, %v3749, 0
  %v3787 = vsel %vm299, %v3750, 0
  %v3790 = vsel %vm299, %v3751, 0
  %v3793 = vsel %vm299, %v3752, 0
  %v3796 = vsel %vm299, %v3753, 0
  %v3799 = vsel %vm299, %v3754, 0
  %v3802 = vsel %vm299, %v3755, 0
  %3804 = vmatpush.msra.mxu0 0.0
  %3805 = vmatpush.msra.mxu0 0.0
  %3806 = vmatpush.msra.mxu0 0.0
  %3807 = vmatpush.msra.mxu0 0.0
  %3808 = vmatpush.msra.mxu0 0.0
  %3809 = vmatpush.msra.mxu0 0.0
  %3810 = vmatpush.msra.mxu0 0.0
  %3811 = vmatpush.msra.mxu0 0.0
  %3812 = vmatpush.msra.mxu0 0.0
  %3813 = vmatpush.msra.mxu0 0.0
  %3814 = vmatpush.msra.mxu0 0.0
  %3815 = vmatpush.msra.mxu0 0.0
  %3816 = vmatpush.msra.mxu0 0.0
  %3817 = vmatpush.msra.mxu0 0.0
  %3818 = vmatpush.msra.mxu0 %v2227
  %3819 = vmatpush.msra.mxu0 %v2224
  %3820 = vmatmul.f32.gmra.mxu0 %v3757
  %v3821 = vpop.f32.mrf.mxu0
  %v3822 = vadd.f32 0.0, %v3821
  %3823 = vmatmul.f32.gmra.mxu0 %v3760
  %v3824 = vpop.f32.mrf.mxu0
  %v3825 = vadd.f32 0.0, %v3824
  %3826 = vmatmul.f32.gmra.mxu0 %v3763
  %v3827 = vpop.f32.mrf.mxu0
  %v3828 = vadd.f32 0.0, %v3827
  %3829 = vmatmul.f32.gmra.mxu0 %v3766
  %v3830 = vpop.f32.mrf.mxu0
  %v3831 = vadd.f32 0.0, %v3830
  %3832 = vmatmul.f32.gmra.mxu0 %v3769
  %v3833 = vpop.f32.mrf.mxu0
  %v3834 = vadd.f32 0.0, %v3833
  %3835 = vmatmul.f32.gmra.mxu0 %v3772
  %v3836 = vpop.f32.mrf.mxu0
  %v3837 = vadd.f32 0.0, %v3836
  %3838 = vmatmul.f32.gmra.mxu0 %v3775
  %v3839 = vpop.f32.mrf.mxu0
  %v3840 = vadd.f32 0.0, %v3839
  %3841 = vmatmul.f32.gmra.mxu0 %v3778
  %v3842 = vpop.f32.mrf.mxu0
  %v3843 = vadd.f32 0.0, %v3842
  %3844 = vmatmul.f32.gmra.mxu0 %v3781
  %v3845 = vpop.f32.mrf.mxu0
  %v3846 = vadd.f32 0.0, %v3845
  %3847 = vmatmul.f32.gmra.mxu0 %v3784
  %v3848 = vpop.f32.mrf.mxu0
  %v3849 = vadd.f32 0.0, %v3848
  %3850 = vmatmul.f32.gmra.mxu0 %v3787
  %v3851 = vpop.f32.mrf.mxu0
  %v3852 = vadd.f32 0.0, %v3851
  %3853 = vmatmul.f32.gmra.mxu0 %v3790
  %v3854 = vpop.f32.mrf.mxu0
  %v3855 = vadd.f32 0.0, %v3854
  %3856 = vmatmul.f32.gmra.mxu0 %v3793
  %v3857 = vpop.f32.mrf.mxu0
  %v3858 = vadd.f32 0.0, %v3857
  %3859 = vmatmul.f32.gmra.mxu0 %v3796
  %v3860 = vpop.f32.mrf.mxu0
  %v3861 = vadd.f32 0.0, %v3860
  %3862 = vmatmul.f32.gmra.mxu0 %v3799
  %v3863 = vpop.f32.mrf.mxu0
  %v3864 = vadd.f32 0.0, %v3863
  %3865 = vmatmul.f32.gmra.mxu0 %v3802
  %v3866 = vpop.f32.mrf.mxu0
  %v3867 = vadd.f32 0.0, %v3866
  %3868 = vdwg.mxu0
  %3869 = vmatpush.msra.mxu0 0.0
  %3870 = vmatpush.msra.mxu0 0.0
  %3871 = vmatpush.msra.mxu0 0.0
  %3872 = vmatpush.msra.mxu0 0.0
  %3873 = vmatpush.msra.mxu0 0.0
  %3874 = vmatpush.msra.mxu0 0.0
  %3875 = vmatpush.msra.mxu0 0.0
  %3876 = vmatpush.msra.mxu0 0.0
  %3877 = vmatpush.msra.mxu0 0.0
  %3878 = vmatpush.msra.mxu0 0.0
  %3879 = vmatpush.msra.mxu0 0.0
  %3880 = vmatpush.msra.mxu0 0.0
  %3881 = vmatpush.msra.mxu0 0.0
  %3882 = vmatpush.msra.mxu0 0.0
  %3883 = vmatpush.msra.mxu0 %v2268
  %3884 = vmatpush.msra.mxu0 %v2265
  %3885 = vmatmul.f32.gmra.mxu0 %v3757
  %v3886 = vpop.f32.mrf.mxu0
  %v3887 = vadd.f32 0.0, %v3886
  %3888 = vmatmul.f32.gmra.mxu0 %v3760
  %v3889 = vpop.f32.mrf.mxu0
  %v3890 = vadd.f32 0.0, %v3889
  %3891 = vmatmul.f32.gmra.mxu0 %v3763
  %v3892 = vpop.f32.mrf.mxu0
  %v3893 = vadd.f32 0.0, %v3892
  %3894 = vmatmul.f32.gmra.mxu0 %v3766
  %v3895 = vpop.f32.mrf.mxu0
  %v3896 = vadd.f32 0.0, %v3895
  %3897 = vmatmul.f32.gmra.mxu0 %v3769
  %v3898 = vpop.f32.mrf.mxu0
  %v3899 = vadd.f32 0.0, %v3898
  %3900 = vmatmul.f32.gmra.mxu0 %v3772
  %v3901 = vpop.f32.mrf.mxu0
  %v3902 = vadd.f32 0.0, %v3901
  %3903 = vmatmul.f32.gmra.mxu0 %v3775
  %v3904 = vpop.f32.mrf.mxu0
  %v3905 = vadd.f32 0.0, %v3904
  %3906 = vmatmul.f32.gmra.mxu0 %v3778
  %v3907 = vpop.f32.mrf.mxu0
  %v3908 = vadd.f32 0.0, %v3907
  %3909 = vmatmul.f32.gmra.mxu0 %v3781
  %v3910 = vpop.f32.mrf.mxu0
  %v3911 = vadd.f32 0.0, %v3910
  %3912 = vmatmul.f32.gmra.mxu0 %v3784
  %v3913 = vpop.f32.mrf.mxu0
  %v3914 = vadd.f32 0.0, %v3913
  %3915 = vmatmul.f32.gmra.mxu0 %v3787
  %v3916 = vpop.f32.mrf.mxu0
  %v3917 = vadd.f32 0.0, %v3916
  %3918 = vmatmul.f32.gmra.mxu0 %v3790
  %v3919 = vpop.f32.mrf.mxu0
  %v3920 = vadd.f32 0.0, %v3919
  %3921 = vmatmul.f32.gmra.mxu0 %v3793
  %v3922 = vpop.f32.mrf.mxu0
  %v3923 = vadd.f32 0.0, %v3922
  %3924 = vmatmul.f32.gmra.mxu0 %v3796
  %v3925 = vpop.f32.mrf.mxu0
  %v3926 = vadd.f32 0.0, %v3925
  %3927 = vmatmul.f32.gmra.mxu0 %v3799
  %v3928 = vpop.f32.mrf.mxu0
  %v3929 = vadd.f32 0.0, %v3928
  %3930 = vmatmul.f32.gmra.mxu0 %v3802
  %v3931 = vpop.f32.mrf.mxu0
  %v3932 = vadd.f32 0.0, %v3931
  %3933 = vdwg.mxu0
  %v3934 = vmax.f32 %v3822, %v3887
  %3935 = vmax.xlane.f32.xlu0 %v3934
  %v3936 = vpop.xlane.xlu0 %3935
  %v3937 = vmax.f32 %v3825, %v3890
  %3938 = vmax.xlane.f32.xlu0 %v3937
  %v3939 = vpop.xlane.xlu0 %3938
  %v3940 = vmax.f32 %v3828, %v3893
  %3941 = vmax.xlane.f32.xlu0 %v3940
  %v3942 = vpop.xlane.xlu0 %3941
  %v3943 = vmax.f32 %v3831, %v3896
  %3944 = vmax.xlane.f32.xlu0 %v3943
  %v3945 = vpop.xlane.xlu0 %3944
  %v3946 = vmax.f32 %v3834, %v3899
  %3947 = vmax.xlane.f32.xlu0 %v3946
  %v3948 = vpop.xlane.xlu0 %3947
  %v3949 = vmax.f32 %v3837, %v3902
  %3950 = vmax.xlane.f32.xlu0 %v3949
  %v3951 = vpop.xlane.xlu0 %3950
  %v3952 = vmax.f32 %v3840, %v3905
  %3953 = vmax.xlane.f32.xlu0 %v3952
  %v3954 = vpop.xlane.xlu0 %3953
  %v3955 = vmax.f32 %v3843, %v3908
  %3956 = vmax.xlane.f32.xlu0 %v3955
  %v3957 = vpop.xlane.xlu0 %3956
  %v3958 = vmax.f32 %v3846, %v3911
  %3959 = vmax.xlane.f32.xlu0 %v3958
  %v3960 = vpop.xlane.xlu0 %3959
  %v3961 = vmax.f32 %v3849, %v3914
  %3962 = vmax.xlane.f32.xlu0 %v3961
  %v3963 = vpop.xlane.xlu0 %3962
  %v3964 = vmax.f32 %v3852, %v3917
  %3965 = vmax.xlane.f32.xlu0 %v3964
  %v3966 = vpop.xlane.xlu0 %3965
  %v3967 = vmax.f32 %v3855, %v3920
  %3968 = vmax.xlane.f32.xlu0 %v3967
  %v3969 = vpop.xlane.xlu0 %3968
  %v3970 = vmax.f32 %v3858, %v3923
  %3971 = vmax.xlane.f32.xlu0 %v3970
  %v3972 = vpop.xlane.xlu0 %3971
  %v3973 = vmax.f32 %v3861, %v3926
  %3974 = vmax.xlane.f32.xlu0 %v3973
  %v3975 = vpop.xlane.xlu0 %3974
  %v3976 = vmax.f32 %v3864, %v3929
  %3977 = vmax.xlane.f32.xlu0 %v3976
  %v3978 = vpop.xlane.xlu0 %3977
  %v3979 = vmax.f32 %v3867, %v3932
  %3980 = vmax.xlane.f32.xlu0 %v3979
  %v3981 = vpop.xlane.xlu0 %3980
  %v3982 = vsub.f32 %v3822, %v3936
  %v3983 = vsub.f32 %v3887, %v3936
  %v3984 = vsub.f32 %v3825, %v3939
  %v3985 = vsub.f32 %v3890, %v3939
  %v3986 = vsub.f32 %v3828, %v3942
  %v3987 = vsub.f32 %v3893, %v3942
  %v3988 = vsub.f32 %v3831, %v3945
  %v3989 = vsub.f32 %v3896, %v3945
  %v3990 = vsub.f32 %v3834, %v3948
  %v3991 = vsub.f32 %v3899, %v3948
  %v3992 = vsub.f32 %v3837, %v3951
  %v3993 = vsub.f32 %v3902, %v3951
  %v3994 = vsub.f32 %v3840, %v3954
  %v3995 = vsub.f32 %v3905, %v3954
  %v3996 = vsub.f32 %v3843, %v3957
  %v3997 = vsub.f32 %v3908, %v3957
  %v3998 = vsub.f32 %v3846, %v3960
  %v3999 = vsub.f32 %v3911, %v3960
  %v4000 = vsub.f32 %v3849, %v3963
  %v4001 = vsub.f32 %v3914, %v3963
  %v4002 = vsub.f32 %v3852, %v3966
  %v4003 = vsub.f32 %v3917, %v3966
  %v4004 = vsub.f32 %v3855, %v3969
  %v4005 = vsub.f32 %v3920, %v3969
  %v4006 = vsub.f32 %v3858, %v3972
  %v4007 = vsub.f32 %v3923, %v3972
  %v4008 = vsub.f32 %v3861, %v3975
  %v4009 = vsub.f32 %v3926, %v3975
  %v4010 = vsub.f32 %v3864, %v3978
  %v4011 = vsub.f32 %v3929, %v3978
  %v4012 = vsub.f32 %v3867, %v3981
  %v4013 = vsub.f32 %v3932, %v3981
  %v4014 = vmul.f32 %v3982, 1.442695
  %v4015 = vpow.pop %v4014
  %v4016 = vmul.f32 %v3983, 1.442695
  %v4017 = vpow.pop %v4016
  %v4018 = vmul.f32 %v3984, 1.442695
  %v4019 = vpow.pop %v4018
  %v4020 = vmul.f32 %v3985, 1.442695
  %v4021 = vpow.pop %v4020
  %v4022 = vmul.f32 %v3986, 1.442695
  %v4023 = vpow.pop %v4022
  %v4024 = vmul.f32 %v3987, 1.442695
  %v4025 = vpow.pop %v4024
  %v4026 = vmul.f32 %v3988, 1.442695
  %v4027 = vpow.pop %v4026
  %v4028 = vmul.f32 %v3989, 1.442695
  %v4029 = vpow.pop %v4028
  %v4030 = vmul.f32 %v3990, 1.442695
  %v4031 = vpow.pop %v4030
  %v4032 = vmul.f32 %v3991, 1.442695
  %v4033 = vpow.pop %v4032
  %v4034 = vmul.f32 %v3992, 1.442695
  %v4035 = vpow.pop %v4034
  %v4036 = vmul.f32 %v3993, 1.442695
  %v4037 = vpow.pop %v4036
  %v4038 = vmul.f32 %v3994, 1.442695
  %v4039 = vpow.pop %v4038
  %v4040 = vmul.f32 %v3995, 1.442695
  %v4041 = vpow.pop %v4040
  %v4042 = vmul.f32 %v3996, 1.442695
  %v4043 = vpow.pop %v4042
  %v4044 = vmul.f32 %v3997, 1.442695
  %v4045 = vpow.pop %v4044
  %v4046 = vmul.f32 %v3998, 1.442695
  %v4047 = vpow.pop %v4046
  %v4048 = vmul.f32 %v3999, 1.442695
  %v4049 = vpow.pop %v4048
  %v4050 = vmul.f32 %v4000, 1.442695
  %v4051 = vpow.pop %v4050
  %v4052 = vmul.f32 %v4001, 1.442695
  %v4053 = vpow.pop %v4052
  %v4054 = vmul.f32 %v4002, 1.442695
  %v4055 = vpow.pop %v4054
  %v4056 = vmul.f32 %v4003, 1.442695
  %v4057 = vpow.pop %v4056
  %v4058 = vmul.f32 %v4004, 1.442695
  %v4059 = vpow.pop %v4058
  %v4060 = vmul.f32 %v4005, 1.442695
  %v4061 = vpow.pop %v4060
  %v4062 = vmul.f32 %v4006, 1.442695
  %v4063 = vpow.pop %v4062
  %v4064 = vmul.f32 %v4007, 1.442695
  %v4065 = vpow.pop %v4064
  %v4066 = vmul.f32 %v4008, 1.442695
  %v4067 = vpow.pop %v4066
  %v4068 = vmul.f32 %v4009, 1.442695
  %v4069 = vpow.pop %v4068
  %v4070 = vmul.f32 %v4010, 1.442695
  %v4071 = vpow.pop %v4070
  %v4072 = vmul.f32 %v4011, 1.442695
  %v4073 = vpow.pop %v4072
  %v4074 = vmul.f32 %v4012, 1.442695
  %v4075 = vpow.pop %v4074
  %v4076 = vmul.f32 %v4013, 1.442695
  %v4077 = vpow.pop %v4076
  %4078 = vmatpush.xpose.msra.mxu0 %v4075
  %4079 = vmatpush.xpose.msra.mxu0 %v4071
  %4080 = vmatpush.xpose.msra.mxu0 %v4067
  %4081 = vmatpush.xpose.msra.mxu0 %v4063
  %4082 = vmatpush.xpose.msra.mxu0 %v4059
  %4083 = vmatpush.xpose.msra.mxu0 %v4055
  %4084 = vmatpush.xpose.msra.mxu0 %v4051
  %4085 = vmatpush.xpose.msra.mxu0 %v4047
  %4086 = vmatpush.xpose.msra.mxu0 %v4043
  %4087 = vmatpush.xpose.msra.mxu0 %v4039
  %4088 = vmatpush.xpose.msra.mxu0 %v4035
  %4089 = vmatpush.xpose.msra.mxu0 %v4031
  %4090 = vmatpush.xpose.msra.mxu0 %v4027
  %4091 = vmatpush.xpose.msra.mxu0 %v4023
  %4092 = vmatpush.xpose.msra.mxu0 %v4019
  %4093 = vmatpush.xpose.msra.mxu0 %v4015
  %4094 = vmatmul.f32.gmra.mxu0 %v2313
  %v4095 = vpop.f32.mrf.mxu0
  %v4096 = vadd.f32 0.0, %v4095
  %4097 = vmatmul.f32.gmra.mxu0 %v2316
  %v4098 = vpop.f32.mrf.mxu0
  %v4099 = vadd.f32 0.0, %v4098
  %4100 = vdwg.mxu0
  %4101 = vmatpush.xpose.msra.mxu0 %v4077
  %4102 = vmatpush.xpose.msra.mxu0 %v4073
  %4103 = vmatpush.xpose.msra.mxu0 %v4069
  %4104 = vmatpush.xpose.msra.mxu0 %v4065
  %4105 = vmatpush.xpose.msra.mxu0 %v4061
  %4106 = vmatpush.xpose.msra.mxu0 %v4057
  %4107 = vmatpush.xpose.msra.mxu0 %v4053
  %4108 = vmatpush.xpose.msra.mxu0 %v4049
  %4109 = vmatpush.xpose.msra.mxu0 %v4045
  %4110 = vmatpush.xpose.msra.mxu0 %v4041
  %4111 = vmatpush.xpose.msra.mxu0 %v4037
  %4112 = vmatpush.xpose.msra.mxu0 %v4033
  %4113 = vmatpush.xpose.msra.mxu0 %v4029
  %4114 = vmatpush.xpose.msra.mxu0 %v4025
  %4115 = vmatpush.xpose.msra.mxu0 %v4021
  %4116 = vmatpush.xpose.msra.mxu0 %v4017
  %4117 = vmatmul.f32.gmra.mxu0 %v2342
  %v4118 = vpop.f32.mrf.mxu0
  %v4119 = vadd.f32 %v4096, %v4118
  %4120 = vmatmul.f32.gmra.mxu0 %v2345
  %v4121 = vpop.f32.mrf.mxu0
  %v4122 = vadd.f32 %v4099, %v4121
  %4123 = vdwg.mxu0
  %4124 = vmatpush.xpose.msra.mxu0 %v4075
  %4125 = vmatpush.xpose.msra.mxu0 %v4071
  %4126 = vmatpush.xpose.msra.mxu0 %v4067
  %4127 = vmatpush.xpose.msra.mxu0 %v4063
  %4128 = vmatpush.xpose.msra.mxu0 %v4059
  %4129 = vmatpush.xpose.msra.mxu0 %v4055
  %4130 = vmatpush.xpose.msra.mxu0 %v4051
  %4131 = vmatpush.xpose.msra.mxu0 %v4047
  %4132 = vmatpush.xpose.msra.mxu0 %v4043
  %4133 = vmatpush.xpose.msra.mxu0 %v4039
  %4134 = vmatpush.xpose.msra.mxu0 %v4035
  %4135 = vmatpush.xpose.msra.mxu0 %v4031
  %4136 = vmatpush.xpose.msra.mxu0 %v4027
  %4137 = vmatpush.xpose.msra.mxu0 %v4023
  %4138 = vmatpush.xpose.msra.mxu0 %v4019
  %4139 = vmatpush.xpose.msra.mxu0 %v4015
  %4140 = vmatmul.f32.gmra.mxu0 1.0
  %v4141 = vpop.f32.mrf.mxu0
  %v4142 = vadd.f32 0.0, %v4141
  %4143 = vdwg.mxu0
  %4144 = vmatpush.xpose.msra.mxu0 %v4077
  %4145 = vmatpush.xpose.msra.mxu0 %v4073
  %4146 = vmatpush.xpose.msra.mxu0 %v4069
  %4147 = vmatpush.xpose.msra.mxu0 %v4065
  %4148 = vmatpush.xpose.msra.mxu0 %v4061
  %4149 = vmatpush.xpose.msra.mxu0 %v4057
  %4150 = vmatpush.xpose.msra.mxu0 %v4053
  %4151 = vmatpush.xpose.msra.mxu0 %v4049
  %4152 = vmatpush.xpose.msra.mxu0 %v4045
  %4153 = vmatpush.xpose.msra.mxu0 %v4041
  %4154 = vmatpush.xpose.msra.mxu0 %v4037
  %4155 = vmatpush.xpose.msra.mxu0 %v4033
  %4156 = vmatpush.xpose.msra.mxu0 %v4029
  %4157 = vmatpush.xpose.msra.mxu0 %v4025
  %4158 = vmatpush.xpose.msra.mxu0 %v4021
  %4159 = vmatpush.xpose.msra.mxu0 %v4017
  %4160 = vmatmul.f32.gmra.mxu0 1.0
  %v4161 = vpop.f32.mrf.mxu0
  %v4162 = vadd.f32 %v4142, %v4161
  %4163 = vdwg.mxu0
  %v4164 = vrcp.pop %v4162
  %v4165 = vmul.f32 %v4162, %v4164
  %v4166 = vsub.f32 1.0, %v4165
  %v4167 = vmul.f32 %v4164, %v4166
  %v4168 = vadd.f32 %v4164, %v4167
  %vm4169 = vweird.f32 %v4162
  %vm4170 = vweird.f32 %v4164
  %vm4171 = vmor %vm4169, %vm4170
  %v4172 = vsel %vm4171, %v4164, %v4168
  %v4173 = vand.u32 2147483647, %v4162
  %vm4174 = vcmp.eq.f32.partialorder %v4173, 8.507059e+37
  %v4175 = vand.u32 %v4162, 2147483648
  %v4176 = vor.u32 1.1754944e-38, %v4175
  %v4177 = vsel %vm4174, %v4176, %v4172
  %v4178 = vperm.slane %v4177, 0
  %v4179 = vmul.f32 %v4119, %v4178
  %v4180 = vmul.f32 %v4122, %v4178
  %4181 = vst [vmem:[#allocation2 + $0x58] sm:$0xff] %v4179
  %4182 = vst [vmem:[#allocation2 + $0x78] sm:$0xff] %v4180
  %v4183 = vld [vmem:[%s5] sm:$0xff]
  %v4184 = vld [vmem:[#allocation2] sm:$0xff]
  %v4185 = vld [vmem:[#allocation2 + $0x8] sm:$0xff]
  %v4186 = vld [vmem:[#allocation2 + $0x10] sm:$0xff]
  %v4187 = vld [vmem:[#allocation2 + $0x18] sm:$0xff]
  %v4188 = vld [vmem:[#allocation2 + $0x20] sm:$0xff]
  %v4189 = vld [vmem:[#allocation2 + $0x28] sm:$0xff]
  %v4190 = vld [vmem:[#allocation2 + $0x30] sm:$0xff]
  %v4191 = vld [vmem:[#allocation2 + $0x38] sm:$0xff]
  %v4192 = vld [vmem:[#allocation2 + $0x40] sm:$0xff]
  %v4193 = vld [vmem:[#allocation2 + $0x48] sm:$0xff]
  %v4194 = vld [vmem:[#allocation2 + $0x50] sm:$0xff]
  %v4195 = vld [vmem:[#allocation2 + $0x58] sm:$0xff]
  %v4196 = vld [vmem:[#allocation2 + $0x60] sm:$0xff]
  %v4197 = vld [vmem:[#allocation2 + $0x68] sm:$0xff]
  %v4198 = vld [vmem:[#allocation2 + $0x70] sm:$0xff]
  %v4199 = vld [vmem:[#allocation2 + $0x78] sm:$0xff]
  %v4200 = vld [vmem:[%s6] sm:$0xff]
  %4202 = vset.pattern.permute.xlu0 0
  %4203 = vperm.xlu0 %4202, %v4200
  %v4204 = vpop.permute.xlu0 %4203
  %vm4206 = vcmask 261120
  %v4208 = vsel %vm4206, %v4183, 0
  %4210 = vmatpush.msra.mxu0 0.0
  %4211 = vmatpush.msra.mxu0 0.0
  %4212 = vmatpush.msra.mxu0 0.0
  %4213 = vmatpush.msra.mxu0 0.0
  %4214 = vmatpush.msra.mxu0 0.0
  %4215 = vmatpush.msra.mxu0 0.0
  %4216 = vmatpush.msra.mxu0 0.0
  %4217 = vmatpush.msra.mxu0 0.0
  %4218 = vmatpush.msra.mxu0 0.0
  %4219 = vmatpush.msra.mxu0 0.0
  %4220 = vmatpush.msra.mxu0 0.0
  %4221 = vmatpush.msra.mxu0 0.0
  %4222 = vmatpush.msra.mxu0 %v4196
  %4223 = vmatpush.msra.mxu0 %v4192
  %4224 = vmatpush.msra.mxu0 %v4188
  %4225 = vmatpush.msra.mxu0 %v4184
  %4226 = vmatmul.f32.gmra.mxu0 %v4208
  %v4227 = vpop.f32.mrf.mxu0
  %v4228 = vadd.f32 %v4204, %v4227
  %4229 = vdwg.mxu0
  %4230 = vmatpush.msra.mxu0 0.0
  %4231 = vmatpush.msra.mxu0 0.0
  %4232 = vmatpush.msra.mxu0 0.0
  %4233 = vmatpush.msra.mxu0 0.0
  %4234 = vmatpush.msra.mxu0 0.0
  %4235 = vmatpush.msra.mxu0 0.0
  %4236 = vmatpush.msra.mxu0 0.0
  %4237 = vmatpush.msra.mxu0 0.0
  %4238 = vmatpush.msra.mxu0 0.0
  %4239 = vmatpush.msra.mxu0 0.0
  %4240 = vmatpush.msra.mxu0 0.0
  %4241 = vmatpush.msra.mxu0 0.0
  %4242 = vmatpush.msra.mxu0 %v4197
  %4243 = vmatpush.msra.mxu0 %v4193
  %4244 = vmatpush.msra.mxu0 %v4189
  %4245 = vmatpush.msra.mxu0 %v4185
  %4246 = vmatmul.f32.gmra.mxu0 %v4208
  %v4247 = vpop.f32.mrf.mxu0
  %v4248 = vadd.f32 %v4204, %v4247
  %4249 = vdwg.mxu0
  %4250 = vmatpush.msra.mxu0 0.0
  %4251 = vmatpush.msra.mxu0 0.0
  %4252 = vmatpush.msra.mxu0 0.0
  %4253 = vmatpush.msra.mxu0 0.0
  %4254 = vmatpush.msra.mxu0 0.0
  %4255 = vmatpush.msra.mxu0 0.0
  %4256 = vmatpush.msra.mxu0 0.0
  %4257 = vmatpush.msra.mxu0 0.0
  %4258 = vmatpush.msra.mxu0 0.0
  %4259 = vmatpush.msra.mxu0 0.0
  %4260 = vmatpush.msra.mxu0 0.0
  %4261 = vmatpush.msra.mxu0 0.0
  %4262 = vmatpush.msra.mxu0 %v4198
  %4263 = vmatpush.msra.mxu0 %v4194
  %4264 = vmatpush.msra.mxu0 %v4190
  %4265 = vmatpush.msra.mxu0 %v4186
  %4266 = vmatmul.f32.gmra.mxu0 %v4208
  %v4267 = vpop.f32.mrf.mxu0
  %v4268 = vadd.f32 %v4204, %v4267
  %4269 = vdwg.mxu0
  %4270 = vmatpush.msra.mxu0 0.0
  %4271 = vmatpush.msra.mxu0 0.0
  %4272 = vmatpush.msra.mxu0 0.0
  %4273 = vmatpush.msra.mxu0 0.0
  %4274 = vmatpush.msra.mxu0 0.0
  %4275 = vmatpush.msra.mxu0 0.0
  %4276 = vmatpush.msra.mxu0 0.0
  %4277 = vmatpush.msra.mxu0 0.0
  %4278 = vmatpush.msra.mxu0 0.0
  %4279 = vmatpush.msra.mxu0 0.0
  %4280 = vmatpush.msra.mxu0 0.0
  %4281 = vmatpush.msra.mxu0 0.0
  %4282 = vmatpush.msra.mxu0 %v4199
  %4283 = vmatpush.msra.mxu0 %v4195
  %4284 = vmatpush.msra.mxu0 %v4191
  %4285 = vmatpush.msra.mxu0 %v4187
  %4286 = vmatmul.f32.gmra.mxu0 %v4208
  %v4287 = vpop.f32.mrf.mxu0
  %v4288 = vadd.f32 %v4204, %v4287
  %4289 = vdwg.mxu0
  %4290 = vst [vmem:[%s7] sm:$0xff] %v4228
  %4291 = vst [vmem:[%s7 + $0x8] sm:$0xff] %v4248
  %s4292 = scalar_lea.vmem %s7, 16
  %4293 = vst [vmem:[%s4292] sm:$0xff] %v4268
  %4294 = vst [vmem:[%s4292 + $0x8] sm:$0xff] %v4288
  // Predicated region
  $region30: #{cross_attention_forward.1} parent=0 // pred_check
    _
  $region31: #{cross_attention_forward.1} parent=0 // pred_check_branch
    %4296 = sbr.rel (0) target = $region33
  $region32: #{cross_attention_forward.1} parent=0 // pred_region
    _
  $region33: #{cross_attention_forward.1} parent=0 // pred_fallthru
    _
  // Predicated region
  $region34: #{cross_attention_forward.1} parent=0 // pred_check
    _
  $region35: #{cross_attention_forward.1} parent=0 // pred_check_branch
    %4298 = sbr.rel (0) target = $region37
  $region36: #{cross_attention_forward.1} parent=0 // pred_region
    _
  $region37: #{cross_attention_forward.1} parent=0 // pred_fallthru
    _

</llo_original>
